<compile_context>
chip_gen: v5e
topology: v5e:2x2
jax: 0.10.0
libtpu: 0.0.40
codegen_flags: <defaults>
</compile_context>

<pallas_src>
import jax
import jax.numpy as jnp
from jax.experimental import pallas as pl
from jax.experimental.pallas import tpu as pltpu

HIDDEN = 32        # hidden_dim
OUTPUT = 8         # output_dim
MLP_LAYERS = 2     # mlp_layers
NUM_LAYERS = 8     # self.num_layers in the module
BN_EPS = 1e-5
NEG_BIG = -1e30    # finite mask value for segment max


# ------------------------------ fused kernel --------------------------------

def fused_acgnn_kernel(
    x0_ref,      # [N, H]              padded input features
    a_ref,       # [N, N]              dense weighted adjacency, A[dst, src] = w
    bmat_ref,    # [G, N]              one-hot graph membership
    bmatT_ref,   # [N, G]              its transpose (for per-segment max)
    wcomb_ref,   # [L, 2H, H]          stacked [Ws; Wn] combine weight per layer
    bcomb_ref,   # [L, 1, H]           combine bias per layer
    wmlp_ref,    # [L*MLP_LAYERS, H, H] conv-MLP weights
    bmlp_ref,    # [L*MLP_LAYERS, 1, H] conv-MLP biases
    gamma_ref,   # [L, 1, H]           BatchNorm gamma per layer
    beta_ref,    # [L, 1, H]           BatchNorm beta per layer
    wna_ref,     # [H, H+1]            shared readout [w_nn | w_gate]
    bna_ref,     # [1, H+1]            shared readout [b_nn | b_gate]
    w1_ref,      # [L*H, O]            head Linear(8H, O) weight
    b1_ref,      # [1, O]
    w2_ref,      # [O, O]              head Linear(O, O) weight
    b2_ref,      # [1, O]
    out_ref,     # [G, O]              final prediction
):
    h = x0_ref[...]                                                    # [N, H]
    A = a_ref[...]                                                     # [N, N]
    B = bmat_ref[...]                                                  # [G, N]
    BT = bmatT_ref[...]                                                # [N, G]
    w_na = wna_ref[...]                                                # [H, H+1]
    b_na = bna_ref[...]                                                # [1, H+1]

    readouts = []
    for l in range(NUM_LAYERS):
        # --- NetworkConv (aggregate + combine) -------------------------------
        # TODO(synk): NetworkConv is not defined in the provided source; this
        # implements self + weighted-neighbor-sum combine followed by an
        # mlp_layers-deep MLP with ReLU between layers.
        agg = jnp.dot(A, h, preferred_element_type=jnp.float32)        # [N, H]
        hh = jnp.concatenate([h, agg], axis=1)                         # [N, 2H]
        z = (jnp.dot(hh, wcomb_ref[l], preferred_element_type=jnp.float32)
             + bcomb_ref[l])                                           # [N, H]
        for i in range(MLP_LAYERS):
            k = l * MLP_LAYERS + i
            z = (jnp.dot(z, wmlp_ref[k], preferred_element_type=jnp.float32)
                 + bmlp_ref[k])
            if i + 1 < MLP_LAYERS:
                z = jnp.maximum(z, 0.0)

        # self.activation = ReLU
        z = jnp.maximum(z, 0.0)

        # --- BatchNorm1d (training-mode batch stats, biased variance) -------
        mean = jnp.mean(z, axis=0, keepdims=True)                      # [1, H]
        d = z - mean
        var = jnp.mean(d * d, axis=0, keepdims=True)                   # [1, H]
        h = d * jax.lax.rsqrt(var + BN_EPS) * gamma_ref[l] + beta_ref[l]

        # --- GlobalAttention readout (shared across layers) ------------------
        # one matmul gives both m (= nn(h)) and the gate score.
        mg = jnp.dot(h, w_na, preferred_element_type=jnp.float32) + b_na   # [N, H+1]
        m = mg[:, :HIDDEN]                                             # [N, H]
        gate = mg[:, HIDDEN:HIDDEN + 1]                                # [N, 1]

        # per-segment softmax stabilization (robust even if segment maxima
        # differ by >> 80 — a global max would underflow the whole segment).
        masked = jnp.where(BT > 0, gate, NEG_BIG)                      # [N, G]
        seg_max = jnp.max(masked, axis=0, keepdims=True)               # [1, G]
        node_max = jnp.sum(jnp.where(BT > 0, seg_max, 0.0),
                           axis=1, keepdims=True)                      # [N, 1]
        e = jnp.exp(gate - node_max)                                   # [N, 1]

        # one matmul gives both the weighted numerator and the denominator.
        em = jnp.concatenate([e * m, e], axis=1)                       # [N, H+1]
        dn = jnp.dot(B, em, preferred_element_type=jnp.float32)        # [G, H+1]
        numer = dn[:, :HIDDEN]                                         # [G, H]
        denom = dn[:, HIDDEN:HIDDEN + 1]                               # [G, 1]
        r = numer * pl.reciprocal(jnp.maximum(denom, 1e-30), approx=True)
        readouts.append(r)

    # --- head: Linear(8H, O) -> ReLU -> Linear(O, O), single K=256 matmul ---
    cat = jnp.concatenate(readouts, axis=1)                            # [G, 8H]
    zz = jnp.maximum(jnp.dot(cat, w1_ref[...],
                             preferred_element_type=jnp.float32) + b1_ref[...], 0.0)
    out_ref[...] = (jnp.dot(zz, w2_ref[...], preferred_element_type=jnp.float32)
                    + b2_ref[...])


# -------------------------------- forward -----------------------------------

def acgnn_forward(x, A, Bmat, params):
    N = x.shape[0]
    G = Bmat.shape[0]
    # nn.ConstantPad1d((0, hidden_dim - 1)) applied to x.view(-1, 1)
    h0 = jnp.zeros((N, HIDDEN), jnp.float32).at[:, 0].set(x)
    BmatT = jnp.transpose(Bmat)

    # host-side weight repacking (pure layout, no math changes)
    w_comb = jnp.concatenate([params["w_self"], params["w_neigh"]], axis=1)  # [L, 2H, H]
    w_mlp = params["w_mlp"].reshape(NUM_LAYERS * MLP_LAYERS, HIDDEN, HIDDEN)
    b_mlp = params["b_mlp"].reshape(NUM_LAYERS * MLP_LAYERS, 1, HIDDEN)
    w_na = jnp.concatenate([params["w_nn"], params["w_gate"]], axis=1)       # [H, H+1]
    b_na = jnp.concatenate([params["b_nn"], params["b_gate"]], axis=1)       # [1, H+1]

    inputs = (
        h0, A, Bmat, BmatT,
        w_comb, params["b_comb"], w_mlp, b_mlp, params["gamma"], params["beta"],
        w_na, b_na, params["w1"], params["b1"], params["w2"], params["b2"],
    )

    vmem = pl.BlockSpec(memory_space=pltpu.MemorySpace.VMEM)
    return pl.pallas_call(
        fused_acgnn_kernel,
        out_shape=jax.ShapeDtypeStruct((G, OUTPUT), jnp.float32),
        in_specs=[vmem] * len(inputs),
        out_specs=vmem,
    )(*inputs)


# ------------------------------- parameters ---------------------------------

def _linear(key, fan_in, fan_out):
    kw, kb = jax.random.split(key)
    bound = 1.0 / (fan_in ** 0.5)
    w = jax.random.uniform(kw, (fan_in, fan_out), jnp.float32, -bound, bound)
    b = jax.random.uniform(kb, (1, fan_out), jnp.float32, -bound, bound)
    return w, b


def init_params(key):
    keys = iter(jax.random.split(key, 128))
    w_self, w_neigh, b_comb, w_mlp, b_mlp = [], [], [], [], []
    for _ in range(NUM_LAYERS):
        ws, bc = _linear(next(keys), HIDDEN, HIDDEN)
        wn, _ = _linear(next(keys), HIDDEN, HIDDEN)
        wms, bms = [], []
        for _ in range(MLP_LAYERS):
            w, b = _linear(next(keys), HIDDEN, HIDDEN)
            wms.append(w)
            bms.append(b)
        w_self.append(ws)
        w_neigh.append(wn)
        b_comb.append(bc)
        w_mlp.append(jnp.stack(wms))
        b_mlp.append(jnp.stack(bms))
    w_gate, b_gate = _linear(next(keys), HIDDEN, 1)
    w_nn, b_nn = _linear(next(keys), HIDDEN, HIDDEN)
    w1, b1 = _linear(next(keys), HIDDEN * NUM_LAYERS, OUTPUT)
    w2, b2 = _linear(next(keys), OUTPUT, OUTPUT)
    return dict(
        w_self=jnp.stack(w_self),            # [L, H, H]
        w_neigh=jnp.stack(w_neigh),          # [L, H, H]
        b_comb=jnp.stack(b_comb),            # [L, 1, H]
        w_mlp=jnp.stack(w_mlp),              # [L, MLP_LAYERS, H, H]
        b_mlp=jnp.stack(b_mlp),              # [L, MLP_LAYERS, 1, H]
        gamma=jnp.ones((NUM_LAYERS, 1, HIDDEN), jnp.float32),
        beta=jnp.zeros((NUM_LAYERS, 1, HIDDEN), jnp.float32),
        w_gate=w_gate, b_gate=b_gate, w_nn=w_nn, b_nn=b_nn,
        w1=w1, b1=b1, w2=w2, b2=b2,
    )


# ----------------------- pure-JAX reference (checking) -----------------------

def _mm(a, b):
    return jnp.dot(a, b, precision=jax.lax.Precision.HIGHEST)


def acgnn_reference(x, A, Bmat, params):
    N = x.shape[0]
    h = jnp.zeros((N, HIDDEN), jnp.float32).at[:, 0].set(x)
    readouts = []
    for l in range(NUM_LAYERS):
        agg = _mm(A, h)
        z = _mm(h, params["w_self"][l]) + _mm(agg, params["w_neigh"][l]) + params["b_comb"][l]
        for i in range(MLP_LAYERS):
            z = _mm(z, params["w_mlp"][l, i]) + params["b_mlp"][l, i]
            if i + 1 < MLP_LAYERS:
                z = jnp.maximum(z, 0.0)
        z = jnp.maximum(z, 0.0)
        mean = jnp.mean(z, axis=0, keepdims=True)
        var = jnp.mean((z - mean) ** 2, axis=0, keepdims=True)
        h = (z - mean) / jnp.sqrt(var + BN_EPS) * params["gamma"][l] + params["beta"][l]
        gate = _mm(h, params["w_gate"]) + params["b_gate"]              # [N, 1]
        masked = jnp.where(Bmat > 0, gate[:, 0][None, :], -jnp.inf)     # [G, N]
        alpha = jax.nn.softmax(masked, axis=1)
        m = _mm(h, params["w_nn"]) + params["b_nn"]
        readouts.append(_mm(alpha, m))
    cat = jnp.concatenate(readouts, axis=1)
    z = jnp.maximum(_mm(cat, params["w1"]) + params["b1"], 0.0)
    return _mm(z, params["w2"]) + params["b2"]


# ---------------------------------- main -------------------------------------

if __name__ == "__main__":
    key = jax.random.PRNGKey(0)
    k_x, k_e, k_p = jax.random.split(key, 3)

    N, G = 16, 2                       # 16 nodes, 2 graphs of 8 nodes each
    x = jax.random.normal(k_x, (N,), jnp.float32)

    # small graph: per-graph bidirectional rings
    src = jnp.arange(N, dtype=jnp.int32)
    ring = N // G
    nxt = (src % ring + 1) % ring + (src // ring) * ring
    edge_index = jnp.stack([jnp.concatenate([src, nxt]),
                            jnp.concatenate([nxt, src])])               # [2, E]
    E = edge_index.shape[1]
    edge_weight = jax.random.uniform(k_e, (E,), jnp.float32)

    # densify graph structure (glue): A[dst, src] = edge_weight
    A = jnp.zeros((N, N), jnp.float32).at[edge_index[1], edge_index[0]].add(edge_weight)
    batch = jnp.concatenate([jnp.zeros(N // 2, jnp.int32),
                             jnp.ones(N // 2, jnp.int32)])
    Bmat = (batch[None, :] == jnp.arange(G, dtype=jnp.int32)[:, None]).astype(jnp.float32)

    params = init_params(k_p)

    out = acgnn_forward(x, A, Bmat, params)
    out = jax.block_until_ready(out)
    assert out.shape == (G, OUTPUT) and out.dtype == jnp.float32
    assert bool(jnp.all(jnp.isfinite(out)))

    ref = acgnn_reference(x, A, Bmat, params)
    assert jnp.allclose(out, ref, atol=2e-3, rtol=2e-3), (out, ref)

    print("KERNEL_OK")
</pallas_src>

<mosaic_0001>
module attributes {stable_mosaic.version = 11 : i64} {
  func.func @fused_acgnn_kernel(%arg0: memref<16x32xf32, #tpu.memory_space<vmem>>, %arg1: memref<16x16xf32, #tpu.memory_space<vmem>>, %arg2: memref<2x16xf32, #tpu.memory_space<vmem>>, %arg3: memref<16x2xf32, #tpu.memory_space<vmem>>, %arg4: memref<8x64x32xf32, #tpu.memory_space<vmem>>, %arg5: memref<8x1x32xf32, #tpu.memory_space<vmem>>, %arg6: memref<16x32x32xf32, #tpu.memory_space<vmem>>, %arg7: memref<16x1x32xf32, #tpu.memory_space<vmem>>, %arg8: memref<8x1x32xf32, #tpu.memory_space<vmem>>, %arg9: memref<8x1x32xf32, #tpu.memory_space<vmem>>, %arg10: memref<32x33xf32, #tpu.memory_space<vmem>>, %arg11: memref<1x33xf32, #tpu.memory_space<vmem>>, %arg12: memref<256x8xf32, #tpu.memory_space<vmem>>, %arg13: memref<1x8xf32, #tpu.memory_space<vmem>>, %arg14: memref<8x8xf32, #tpu.memory_space<vmem>>, %arg15: memref<1x8xf32, #tpu.memory_space<vmem>>, %arg16: memref<2x8xf32, #tpu.memory_space<vmem>>) attributes {dimension_semantics = [], scalar_prefetch = 0 : i64, scratch_operands = 0 : i64, tpu.core_type = #tpu.core_type<tc>} {
    %c0 = arith.constant 0 : index
    %c0_0 = arith.constant 0 : index
    %0 = vector.load %arg0[%c0, %c0_0] : memref<16x32xf32, #tpu.memory_space<vmem>>, vector<16x32xf32>
    %c0_1 = arith.constant 0 : index
    %c0_2 = arith.constant 0 : index
    %1 = vector.load %arg1[%c0_1, %c0_2] : memref<16x16xf32, #tpu.memory_space<vmem>>, vector<16x16xf32>
    %c0_3 = arith.constant 0 : index
    %c0_4 = arith.constant 0 : index
    %2 = vector.load %arg2[%c0_3, %c0_4] : memref<2x16xf32, #tpu.memory_space<vmem>>, vector<2x16xf32>
    %c0_5 = arith.constant 0 : index
    %c0_6 = arith.constant 0 : index
    %3 = vector.load %arg3[%c0_5, %c0_6] : memref<16x2xf32, #tpu.memory_space<vmem>>, vector<16x2xf32>
    %c0_7 = arith.constant 0 : index
    %c0_8 = arith.constant 0 : index
    %4 = vector.load %arg10[%c0_7, %c0_8] : memref<32x33xf32, #tpu.memory_space<vmem>>, vector<32x33xf32>
    %c0_9 = arith.constant 0 : index
    %c0_10 = arith.constant 0 : index
    %5 = vector.load %arg11[%c0_9, %c0_10] : memref<1x33xf32, #tpu.memory_space<vmem>>, vector<1x33xf32>
    %cst = arith.constant dense<0.000000e+00> : vector<16x32xf32>
    %6 = tpu.matmul %1, %0, %cst {dimension_numbers = #tpu.dot_dimension_numbers<[1], [0], [0], [1], [0, 0, 1, 1], [], []>} : vector<16x16xf32>, vector<16x32xf32>, vector<16x32xf32> -> vector<16x32xf32>
    %7 = tpu.concatenate %0, %6 in 1 : vector<16x32xf32>, vector<16x32xf32> -> vector<16x64xf32>
    %c0_11 = arith.constant 0 : index
    %c0_12 = arith.constant 0 : index
    %c0_13 = arith.constant 0 : index
    %8 = vector.load %arg4[%c0_11, %c0_12, %c0_13] : memref<8x64x32xf32, #tpu.memory_space<vmem>>, vector<1x64x32xf32>
    %9 = vector.shape_cast %8 : vector<1x64x32xf32> to vector<64x32xf32>
    %cst_14 = arith.constant dense<0.000000e+00> : vector<16x32xf32>
    %10 = tpu.matmul %7, %9, %cst_14 {dimension_numbers = #tpu.dot_dimension_numbers<[1], [0], [0], [1], [0, 0, 1, 1], [], []>} : vector<16x64xf32>, vector<64x32xf32>, vector<16x32xf32> -> vector<16x32xf32>
    %c0_15 = arith.constant 0 : index
    %c0_16 = arith.constant 0 : index
    %c0_17 = arith.constant 0 : index
    %11 = vector.load %arg5[%c0_15, %c0_16, %c0_17] : memref<8x1x32xf32, #tpu.memory_space<vmem>>, vector<1x1x32xf32>
    %12 = vector.shape_cast %11 : vector<1x1x32xf32> to vector<1x32xf32>
    %13 = vector.broadcast %12 : vector<1x32xf32> to vector<16x32xf32>
    %14 = arith.addf %10, %13 : vector<16x32xf32>
    %c0_18 = arith.constant 0 : index
    %c0_19 = arith.constant 0 : index
    %c0_20 = arith.constant 0 : index
    %15 = vector.load %arg6[%c0_18, %c0_19, %c0_20] : memref<16x32x32xf32, #tpu.memory_space<vmem>>, vector<1x32x32xf32>
    %16 = vector.shape_cast %15 : vector<1x32x32xf32> to vector<32x32xf32>
    %cst_21 = arith.constant dense<0.000000e+00> : vector<16x32xf32>
    %17 = tpu.matmul %14, %16, %cst_21 {dimension_numbers = #tpu.dot_dimension_numbers<[1], [0], [0], [1], [0, 0, 1, 1], [], []>} : vector<16x32xf32>, vector<32x32xf32>, vector<16x32xf32> -> vector<16x32xf32>
    %c0_22 = arith.constant 0 : index
    %c0_23 = arith.constant 0 : index
    %c0_24 = arith.constant 0 : index
    %18 = vector.load %arg7[%c0_22, %c0_23, %c0_24] : memref<16x1x32xf32, #tpu.memory_space<vmem>>, vector<1x1x32xf32>
    %19 = vector.shape_cast %18 : vector<1x1x32xf32> to vector<1x32xf32>
    %20 = vector.broadcast %19 : vector<1x32xf32> to vector<16x32xf32>
    %21 = arith.addf %17, %20 : vector<16x32xf32>
    %cst_25 = arith.constant 0.000000e+00 : f32
    %22 = vector.broadcast %cst_25 : f32 to vector<16x32xf32>
    %23 = arith.maximumf %21, %22 : vector<16x32xf32>
    %c1 = arith.constant 1 : index
    %c0_26 = arith.constant 0 : index
    %c0_27 = arith.constant 0 : index
    %24 = vector.load %arg6[%c1, %c0_26, %c0_27] : memref<16x32x32xf32, #tpu.memory_space<vmem>>, vector<1x32x32xf32>
    %25 = vector.shape_cast %24 : vector<1x32x32xf32> to vector<32x32xf32>
    %cst_28 = arith.constant dense<0.000000e+00> : vector<16x32xf32>
    %26 = tpu.matmul %23, %25, %cst_28 {dimension_numbers = #tpu.dot_dimension_numbers<[1], [0], [0], [1], [0, 0, 1, 1], [], []>} : vector<16x32xf32>, vector<32x32xf32>, vector<16x32xf32> -> vector<16x32xf32>
    %c1_29 = arith.constant 1 : index
    %c0_30 = arith.constant 0 : index
    %c0_31 = arith.constant 0 : index
    %27 = vector.load %arg7[%c1_29, %c0_30, %c0_31] : memref<16x1x32xf32, #tpu.memory_space<vmem>>, vector<1x1x32xf32>
    %28 = vector.shape_cast %27 : vector<1x1x32xf32> to vector<1x32xf32>
    %29 = vector.broadcast %28 : vector<1x32xf32> to vector<16x32xf32>
    %30 = arith.addf %26, %29 : vector<16x32xf32>
    %cst_32 = arith.constant 0.000000e+00 : f32
    %31 = vector.broadcast %cst_32 : f32 to vector<16x32xf32>
    %32 = arith.maximumf %30, %31 : vector<16x32xf32>
    %cst_33 = arith.constant dense<0.000000e+00> : vector<32xf32>
    %33 = vector.multi_reduction <add>, %32, %cst_33 [0] : vector<16x32xf32> to vector<32xf32>
    %34 = vector.shape_cast %33 : vector<32xf32> to vector<1x32xf32>
    %cst_34 = arith.constant 1.600000e+01 : f32
    %35 = vector.broadcast %cst_34 : f32 to vector<1x32xf32>
    %36 = arith.divf %34, %35 : vector<1x32xf32>
    %37 = vector.broadcast %36 : vector<1x32xf32> to vector<16x32xf32>
    %38 = arith.subf %32, %37 : vector<16x32xf32>
    %39 = arith.mulf %38, %38 : vector<16x32xf32>
    %cst_35 = arith.constant dense<0.000000e+00> : vector<32xf32>
    %40 = vector.multi_reduction <add>, %39, %cst_35 [0] : vector<16x32xf32> to vector<32xf32>
    %41 = vector.shape_cast %40 : vector<32xf32> to vector<1x32xf32>
    %cst_36 = arith.constant 1.600000e+01 : f32
    %42 = vector.broadcast %cst_36 : f32 to vector<1x32xf32>
    %43 = arith.divf %41, %42 : vector<1x32xf32>
    %cst_37 = arith.constant 9.99999974E-6 : f32
    %44 = vector.broadcast %cst_37 : f32 to vector<1x32xf32>
    %45 = arith.addf %43, %44 : vector<1x32xf32>
    %46 = math.rsqrt %45 : vector<1x32xf32>
    %47 = vector.broadcast %46 : vector<1x32xf32> to vector<16x32xf32>
    %48 = arith.mulf %38, %47 : vector<16x32xf32>
    %c0_38 = arith.constant 0 : index
    %c0_39 = arith.constant 0 : index
    %c0_40 = arith.constant 0 : index
    %49 = vector.load %arg8[%c0_38, %c0_39, %c0_40] : memref<8x1x32xf32, #tpu.memory_space<vmem>>, vector<1x1x32xf32>
    %50 = vector.shape_cast %49 : vector<1x1x32xf32> to vector<1x32xf32>
    %51 = vector.broadcast %50 : vector<1x32xf32> to vector<16x32xf32>
    %52 = arith.mulf %48, %51 : vector<16x32xf32>
    %c0_41 = arith.constant 0 : index
    %c0_42 = arith.constant 0 : index
    %c0_43 = arith.constant 0 : index
    %53 = vector.load %arg9[%c0_41, %c0_42, %c0_43] : memref<8x1x32xf32, #tpu.memory_space<vmem>>, vector<1x1x32xf32>
    %54 = vector.shape_cast %53 : vector<1x1x32xf32> to vector<1x32xf32>
    %55 = vector.broadcast %54 : vector<1x32xf32> to vector<16x32xf32>
    %56 = arith.addf %52, %55 : vector<16x32xf32>
    %cst_44 = arith.constant dense<0.000000e+00> : vector<16x33xf32>
    %57 = tpu.matmul %56, %4, %cst_44 {dimension_numbers = #tpu.dot_dimension_numbers<[1], [0], [0], [1], [0, 0, 1, 1], [], []>} : vector<16x32xf32>, vector<32x33xf32>, vector<16x33xf32> -> vector<16x33xf32>
    %58 = vector.broadcast %5 : vector<1x33xf32> to vector<16x33xf32>
    %59 = arith.addf %57, %58 : vector<16x33xf32>
    %60 = vector.extract_strided_slice %59 {offsets = [0, 0], sizes = [16, 32], strides = [1, 1]} : vector<16x33xf32> to vector<16x32xf32>
    %61 = vector.extract_strided_slice %59 {offsets = [0, 32], sizes = [16, 1], strides = [1, 1]} : vector<16x33xf32> to vector<16x1xf32>
    %cst_45 = arith.constant 0.000000e+00 : f32
    %62 = vector.broadcast %cst_45 : f32 to vector<16x2xf32>
    %63 = arith.cmpf ogt, %3, %62 : vector<16x2xf32>
    %cst_46 = arith.constant -1.000000e+30 : f32
    %64 = vector.shape_cast %61 : vector<16x1xf32> to vector<16x1xf32>
    %65 = vector.broadcast %64 : vector<16x1xf32> to vector<16x2xf32>
    %66 = vector.broadcast %cst_46 : f32 to vector<16x2xf32>
    %67 = arith.select %63, %65, %66 : vector<16x2xi1>, vector<16x2xf32>
    %cst_47 = arith.constant dense<0xFF800000> : vector<2xf32>
    %68 = vector.multi_reduction <maximumf>, %67, %cst_47 [0] : vector<16x2xf32> to vector<2xf32>
    %69 = vector.shape_cast %68 : vector<2xf32> to vector<1x2xf32>
    %cst_48 = arith.constant 0.000000e+00 : f32
    %70 = vector.broadcast %cst_48 : f32 to vector<16x2xf32>
    %71 = arith.cmpf ogt, %3, %70 : vector<16x2xf32>
    %cst_49 = arith.constant 0.000000e+00 : f32
    %72 = vector.shape_cast %69 : vector<1x2xf32> to vector<1x2xf32>
    %73 = vector.broadcast %72 : vector<1x2xf32> to vector<16x2xf32>
    %74 = vector.broadcast %cst_49 : f32 to vector<16x2xf32>
    %75 = arith.select %71, %73, %74 : vector<16x2xi1>, vector<16x2xf32>
    %cst_50 = arith.constant dense<0.000000e+00> : vector<16xf32>
    %76 = vector.multi_reduction <add>, %75, %cst_50 [1] : vector<16x2xf32> to vector<16xf32>
    %77 = vector.shape_cast %76 : vector<16xf32> to vector<16x1xf32>
    %78 = arith.subf %61, %77 : vector<16x1xf32>
    %79 = math.exp %78 : vector<16x1xf32>
    %80 = vector.broadcast %79 : vector<16x1xf32> to vector<16x32xf32>
    %81 = arith.mulf %80, %60 : vector<16x32xf32>
    %82 = tpu.concatenate %81, %79 in 1 : vector<16x32xf32>, vector<16x1xf32> -> vector<16x33xf32>
    %cst_51 = arith.constant dense<0.000000e+00> : vector<2x33xf32>
    %83 = tpu.matmul %2, %82, %cst_51 {dimension_numbers = #tpu.dot_dimension_numbers<[1], [0], [0], [1], [0, 0, 1, 1], [], []>} : vector<2x16xf32>, vector<16x33xf32>, vector<2x33xf32> -> vector<2x33xf32>
    %84 = vector.extract_strided_slice %83 {offsets = [0, 0], sizes = [2, 32], strides = [1, 1]} : vector<2x33xf32> to vector<2x32xf32>
    %85 = vector.extract_strided_slice %83 {offsets = [0, 32], sizes = [2, 1], strides = [1, 1]} : vector<2x33xf32> to vector<2x1xf32>
    %cst_52 = arith.constant 1.000000e-30 : f32
    %86 = vector.broadcast %cst_52 : f32 to vector<2x1xf32>
    %87 = arith.maximumf %85, %86 : vector<2x1xf32>
    %88 = tpu.reciprocal %87 {approx = true} : vector<2x1xf32> -> vector<2x1xf32>
    %89 = vector.broadcast %88 : vector<2x1xf32> to vector<2x32xf32>
    %90 = arith.mulf %84, %89 : vector<2x32xf32>
    %cst_53 = arith.constant dense<0.000000e+00> : vector<16x32xf32>
    %91 = tpu.matmul %1, %56, %cst_53 {dimension_numbers = #tpu.dot_dimension_numbers<[1], [0], [0], [1], [0, 0, 1, 1], [], []>} : vector<16x16xf32>, vector<16x32xf32>, vector<16x32xf32> -> vector<16x32xf32>
    %92 = tpu.concatenate %56, %91 in 1 : vector<16x32xf32>, vector<16x32xf32> -> vector<16x64xf32>
    %c1_54 = arith.constant 1 : index
    %c0_55 = arith.constant 0 : index
    %c0_56 = arith.constant 0 : index
    %93 = vector.load %arg4[%c1_54, %c0_55, %c0_56] : memref<8x64x32xf32, #tpu.memory_space<vmem>>, vector<1x64x32xf32>
    %94 = vector.shape_cast %93 : vector<1x64x32xf32> to vector<64x32xf32>
    %cst_57 = arith.constant dense<0.000000e+00> : vector<16x32xf32>
    %95 = tpu.matmul %92, %94, %cst_57 {dimension_numbers = #tpu.dot_dimension_numbers<[1], [0], [0], [1], [0, 0, 1, 1], [], []>} : vector<16x64xf32>, vector<64x32xf32>, vector<16x32xf32> -> vector<16x32xf32>
    %c1_58 = arith.constant 1 : index
    %c0_59 = arith.constant 0 : index
    %c0_60 = arith.constant 0 : index
    %96 = vector.load %arg5[%c1_58, %c0_59, %c0_60] : memref<8x1x32xf32, #tpu.memory_space<vmem>>, vector<1x1x32xf32>
    %97 = vector.shape_cast %96 : vector<1x1x32xf32> to vector<1x32xf32>
    %98 = vector.broadcast %97 : vector<1x32xf32> to vector<16x32xf32>
    %99 = arith.addf %95, %98 : vector<16x32xf32>
    %c2 = arith.constant 2 : index
    %c0_61 = arith.constant 0 : index
    %c0_62 = arith.constant 0 : index
    %100 = vector.load %arg6[%c2, %c0_61, %c0_62] : memref<16x32x32xf32, #tpu.memory_space<vmem>>, vector<1x32x32xf32>
    %101 = vector.shape_cast %100 : vector<1x32x32xf32> to vector<32x32xf32>
    %cst_63 = arith.constant dense<0.000000e+00> : vector<16x32xf32>
    %102 = tpu.matmul %99, %101, %cst_63 {dimension_numbers = #tpu.dot_dimension_numbers<[1], [0], [0], [1], [0, 0, 1, 1], [], []>} : vector<16x32xf32>, vector<32x32xf32>, vector<16x32xf32> -> vector<16x32xf32>
    %c2_64 = arith.constant 2 : index
    %c0_65 = arith.constant 0 : index
    %c0_66 = arith.constant 0 : index
    %103 = vector.load %arg7[%c2_64, %c0_65, %c0_66] : memref<16x1x32xf32, #tpu.memory_space<vmem>>, vector<1x1x32xf32>
    %104 = vector.shape_cast %103 : vector<1x1x32xf32> to vector<1x32xf32>
    %105 = vector.broadcast %104 : vector<1x32xf32> to vector<16x32xf32>
    %106 = arith.addf %102, %105 : vector<16x32xf32>
    %cst_67 = arith.constant 0.000000e+00 : f32
    %107 = vector.broadcast %cst_67 : f32 to vector<16x32xf32>
    %108 = arith.maximumf %106, %107 : vector<16x32xf32>
    %c3 = arith.constant 3 : index
    %c0_68 = arith.constant 0 : index
    %c0_69 = arith.constant 0 : index
    %109 = vector.load %arg6[%c3, %c0_68, %c0_69] : memref<16x32x32xf32, #tpu.memory_space<vmem>>, vector<1x32x32xf32>
    %110 = vector.shape_cast %109 : vector<1x32x32xf32> to vector<32x32xf32>
    %cst_70 = arith.constant dense<0.000000e+00> : vector<16x32xf32>
    %111 = tpu.matmul %108, %110, %cst_70 {dimension_numbers = #tpu.dot_dimension_numbers<[1], [0], [0], [1], [0, 0, 1, 1], [], []>} : vector<16x32xf32>, vector<32x32xf32>, vector<16x32xf32> -> vector<16x32xf32>
    %c3_71 = arith.constant 3 : index
    %c0_72 = arith.constant 0 : index
    %c0_73 = arith.constant 0 : index
    %112 = vector.load %arg7[%c3_71, %c0_72, %c0_73] : memref<16x1x32xf32, #tpu.memory_space<vmem>>, vector<1x1x32xf32>
    %113 = vector.shape_cast %112 : vector<1x1x32xf32> to vector<1x32xf32>
    %114 = vector.broadcast %113 : vector<1x32xf32> to vector<16x32xf32>
    %115 = arith.addf %111, %114 : vector<16x32xf32>
    %cst_74 = arith.constant 0.000000e+00 : f32
    %116 = vector.broadcast %cst_74 : f32 to vector<16x32xf32>
    %117 = arith.maximumf %115, %116 : vector<16x32xf32>
    %cst_75 = arith.constant dense<0.000000e+00> : vector<32xf32>
    %118 = vector.multi_reduction <add>, %117, %cst_75 [0] : vector<16x32xf32> to vector<32xf32>
    %119 = vector.shape_cast %118 : vector<32xf32> to vector<1x32xf32>
    %cst_76 = arith.constant 1.600000e+01 : f32
    %120 = vector.broadcast %cst_76 : f32 to vector<1x32xf32>
    %121 = arith.divf %119, %120 : vector<1x32xf32>
    %122 = vector.broadcast %121 : vector<1x32xf32> to vector<16x32xf32>
    %123 = arith.subf %117, %122 : vector<16x32xf32>
    %124 = arith.mulf %123, %123 : vector<16x32xf32>
    %cst_77 = arith.constant dense<0.000000e+00> : vector<32xf32>
    %125 = vector.multi_reduction <add>, %124, %cst_77 [0] : vector<16x32xf32> to vector<32xf32>
    %126 = vector.shape_cast %125 : vector<32xf32> to vector<1x32xf32>
    %cst_78 = arith.constant 1.600000e+01 : f32
    %127 = vector.broadcast %cst_78 : f32 to vector<1x32xf32>
    %128 = arith.divf %126, %127 : vector<1x32xf32>
    %cst_79 = arith.constant 9.99999974E-6 : f32
    %129 = vector.broadcast %cst_79 : f32 to vector<1x32xf32>
    %130 = arith.addf %128, %129 : vector<1x32xf32>
    %131 = math.rsqrt %130 : vector<1x32xf32>
    %132 = vector.broadcast %131 : vector<1x32xf32> to vector<16x32xf32>
    %133 = arith.mulf %123, %132 : vector<16x32xf32>
    %c1_80 = arith.constant 1 : index
    %c0_81 = arith.constant 0 : index
    %c0_82 = arith.constant 0 : index
    %134 = vector.load %arg8[%c1_80, %c0_81, %c0_82] : memref<8x1x32xf32, #tpu.memory_space<vmem>>, vector<1x1x32xf32>
    %135 = vector.shape_cast %134 : vector<1x1x32xf32> to vector<1x32xf32>
    %136 = vector.broadcast %135 : vector<1x32xf32> to vector<16x32xf32>
    %137 = arith.mulf %133, %136 : vector<16x32xf32>
    %c1_83 = arith.constant 1 : index
    %c0_84 = arith.constant 0 : index
    %c0_85 = arith.constant 0 : index
    %138 = vector.load %arg9[%c1_83, %c0_84, %c0_85] : memref<8x1x32xf32, #tpu.memory_space<vmem>>, vector<1x1x32xf32>
    %139 = vector.shape_cast %138 : vector<1x1x32xf32> to vector<1x32xf32>
    %140 = vector.broadcast %139 : vector<1x32xf32> to vector<16x32xf32>
    %141 = arith.addf %137, %140 : vector<16x32xf32>
    %cst_86 = arith.constant dense<0.000000e+00> : vector<16x33xf32>
    %142 = tpu.matmul %141, %4, %cst_86 {dimension_numbers = #tpu.dot_dimension_numbers<[1], [0], [0], [1], [0, 0, 1, 1], [], []>} : vector<16x32xf32>, vector<32x33xf32>, vector<16x33xf32> -> vector<16x33xf32>
    %143 = vector.broadcast %5 : vector<1x33xf32> to vector<16x33xf32>
    %144 = arith.addf %142, %143 : vector<16x33xf32>
    %145 = vector.extract_strided_slice %144 {offsets = [0, 0], sizes = [16, 32], strides = [1, 1]} : vector<16x33xf32> to vector<16x32xf32>
    %146 = vector.extract_strided_slice %144 {offsets = [0, 32], sizes = [16, 1], strides = [1, 1]} : vector<16x33xf32> to vector<16x1xf32>
    %cst_87 = arith.constant 0.000000e+00 : f32
    %147 = vector.broadcast %cst_87 : f32 to vector<16x2xf32>
    %148 = arith.cmpf ogt, %3, %147 : vector<16x2xf32>
    %cst_88 = arith.constant -1.000000e+30 : f32
    %149 = vector.shape_cast %146 : vector<16x1xf32> to vector<16x1xf32>
    %150 = vector.broadcast %149 : vector<16x1xf32> to vector<16x2xf32>
    %151 = vector.broadcast %cst_88 : f32 to vector<16x2xf32>
    %152 = arith.select %148, %150, %151 : vector<16x2xi1>, vector<16x2xf32>
    %cst_89 = arith.constant dense<0xFF800000> : vector<2xf32>
    %153 = vector.multi_reduction <maximumf>, %152, %cst_89 [0] : vector<16x2xf32> to vector<2xf32>
    %154 = vector.shape_cast %153 : vector<2xf32> to vector<1x2xf32>
    %cst_90 = arith.constant 0.000000e+00 : f32
    %155 = vector.broadcast %cst_90 : f32 to vector<16x2xf32>
    %156 = arith.cmpf ogt, %3, %155 : vector<16x2xf32>
    %cst_91 = arith.constant 0.000000e+00 : f32
    %157 = vector.shape_cast %154 : vector<1x2xf32> to vector<1x2xf32>
    %158 = vector.broadcast %157 : vector<1x2xf32> to vector<16x2xf32>
    %159 = vector.broadcast %cst_91 : f32 to vector<16x2xf32>
    %160 = arith.select %156, %158, %159 : vector<16x2xi1>, vector<16x2xf32>
    %cst_92 = arith.constant dense<0.000000e+00> : vector<16xf32>
    %161 = vector.multi_reduction <add>, %160, %cst_92 [1] : vector<16x2xf32> to vector<16xf32>
    %162 = vector.shape_cast %161 : vector<16xf32> to vector<16x1xf32>
    %163 = arith.subf %146, %162 : vector<16x1xf32>
    %164 = math.exp %163 : vector<16x1xf32>
    %165 = vector.broadcast %164 : vector<16x1xf32> to vector<16x32xf32>
    %166 = arith.mulf %165, %145 : vector<16x32xf32>
    %167 = tpu.concatenate %166, %164 in 1 : vector<16x32xf32>, vector<16x1xf32> -> vector<16x33xf32>
    %cst_93 = arith.constant dense<0.000000e+00> : vector<2x33xf32>
    %168 = tpu.matmul %2, %167, %cst_93 {dimension_numbers = #tpu.dot_dimension_numbers<[1], [0], [0], [1], [0, 0, 1, 1], [], []>} : vector<2x16xf32>, vector<16x33xf32>, vector<2x33xf32> -> vector<2x33xf32>
    %169 = vector.extract_strided_slice %168 {offsets = [0, 0], sizes = [2, 32], strides = [1, 1]} : vector<2x33xf32> to vector<2x32xf32>
    %170 = vector.extract_strided_slice %168 {offsets = [0, 32], sizes = [2, 1], strides = [1, 1]} : vector<2x33xf32> to vector<2x1xf32>
    %cst_94 = arith.constant 1.000000e-30 : f32
    %171 = vector.broadcast %cst_94 : f32 to vector<2x1xf32>
    %172 = arith.maximumf %170, %171 : vector<2x1xf32>
    %173 = tpu.reciprocal %172 {approx = true} : vector<2x1xf32> -> vector<2x1xf32>
    %174 = vector.broadcast %173 : vector<2x1xf32> to vector<2x32xf32>
    %175 = arith.mulf %169, %174 : vector<2x32xf32>
    %cst_95 = arith.constant dense<0.000000e+00> : vector<16x32xf32>
    %176 = tpu.matmul %1, %141, %cst_95 {dimension_numbers = #tpu.dot_dimension_numbers<[1], [0], [0], [1], [0, 0, 1, 1], [], []>} : vector<16x16xf32>, vector<16x32xf32>, vector<16x32xf32> -> vector<16x32xf32>
    %177 = tpu.concatenate %141, %176 in 1 : vector<16x32xf32>, vector<16x32xf32> -> vector<16x64xf32>
    %c2_96 = arith.constant 2 : index
    %c0_97 = arith.constant 0 : index
    %c0_98 = arith.constant 0 : index
    %178 = vector.load %arg4[%c2_96, %c0_97, %c0_98] : memref<8x64x32xf32, #tpu.memory_space<vmem>>, vector<1x64x32xf32>
    %179 = vector.shape_cast %178 : vector<1x64x32xf32> to vector<64x32xf32>
    %cst_99 = arith.constant dense<0.000000e+00> : vector<16x32xf32>
    %180 = tpu.matmul %177, %179, %cst_99 {dimension_numbers = #tpu.dot_dimension_numbers<[1], [0], [0], [1], [0, 0, 1, 1], [], []>} : vector<16x64xf32>, vector<64x32xf32>, vector<16x32xf32> -> vector<16x32xf32>
    %c2_100 = arith.constant 2 : index
    %c0_101 = arith.constant 0 : index
    %c0_102 = arith.constant 0 : index
    %181 = vector.load %arg5[%c2_100, %c0_101, %c0_102] : memref<8x1x32xf32, #tpu.memory_space<vmem>>, vector<1x1x32xf32>
    %182 = vector.shape_cast %181 : vector<1x1x32xf32> to vector<1x32xf32>
    %183 = vector.broadcast %182 : vector<1x32xf32> to vector<16x32xf32>
    %184 = arith.addf %180, %183 : vector<16x32xf32>
    %c4 = arith.constant 4 : index
    %c0_103 = arith.constant 0 : index
    %c0_104 = arith.constant 0 : index
    %185 = vector.load %arg6[%c4, %c0_103, %c0_104] : memref<16x32x32xf32, #tpu.memory_space<vmem>>, vector<1x32x32xf32>
    %186 = vector.shape_cast %185 : vector<1x32x32xf32> to vector<32x32xf32>
    %cst_105 = arith.constant dense<0.000000e+00> : vector<16x32xf32>
    %187 = tpu.matmul %184, %186, %cst_105 {dimension_numbers = #tpu.dot_dimension_numbers<[1], [0], [0], [1], [0, 0, 1, 1], [], []>} : vector<16x32xf32>, vector<32x32xf32>, vector<16x32xf32> -> vector<16x32xf32>
    %c4_106 = arith.constant 4 : index
    %c0_107 = arith.constant 0 : index
    %c0_108 = arith.constant 0 : index
    %188 = vector.load %arg7[%c4_106, %c0_107, %c0_108] : memref<16x1x32xf32, #tpu.memory_space<vmem>>, vector<1x1x32xf32>
    %189 = vector.shape_cast %188 : vector<1x1x32xf32> to vector<1x32xf32>
    %190 = vector.broadcast %189 : vector<1x32xf32> to vector<16x32xf32>
    %191 = arith.addf %187, %190 : vector<16x32xf32>
    %cst_109 = arith.constant 0.000000e+00 : f32
    %192 = vector.broadcast %cst_109 : f32 to vector<16x32xf32>
    %193 = arith.maximumf %191, %192 : vector<16x32xf32>
    %c5 = arith.constant 5 : index
    %c0_110 = arith.constant 0 : index
    %c0_111 = arith.constant 0 : index
    %194 = vector.load %arg6[%c5, %c0_110, %c0_111] : memref<16x32x32xf32, #tpu.memory_space<vmem>>, vector<1x32x32xf32>
    %195 = vector.shape_cast %194 : vector<1x32x32xf32> to vector<32x32xf32>
    %cst_112 = arith.constant dense<0.000000e+00> : vector<16x32xf32>
    %196 = tpu.matmul %193, %195, %cst_112 {dimension_numbers = #tpu.dot_dimension_numbers<[1], [0], [0], [1], [0, 0, 1, 1], [], []>} : vector<16x32xf32>, vector<32x32xf32>, vector<16x32xf32> -> vector<16x32xf32>
    %c5_113 = arith.constant 5 : index
    %c0_114 = arith.constant 0 : index
    %c0_115 = arith.constant 0 : index
    %197 = vector.load %arg7[%c5_113, %c0_114, %c0_115] : memref<16x1x32xf32, #tpu.memory_space<vmem>>, vector<1x1x32xf32>
    %198 = vector.shape_cast %197 : vector<1x1x32xf32> to vector<1x32xf32>
    %199 = vector.broadcast %198 : vector<1x32xf32> to vector<16x32xf32>
    %200 = arith.addf %196, %199 : vector<16x32xf32>
    %cst_116 = arith.constant 0.000000e+00 : f32
    %201 = vector.broadcast %cst_116 : f32 to vector<16x32xf32>
    %202 = arith.maximumf %200, %201 : vector<16x32xf32>
    %cst_117 = arith.constant dense<0.000000e+00> : vector<32xf32>
    %203 = vector.multi_reduction <add>, %202, %cst_117 [0] : vector<16x32xf32> to vector<32xf32>
    %204 = vector.shape_cast %203 : vector<32xf32> to vector<1x32xf32>
    %cst_118 = arith.constant 1.600000e+01 : f32
    %205 = vector.broadcast %cst_118 : f32 to vector<1x32xf32>
    %206 = arith.divf %204, %205 : vector<1x32xf32>
    %207 = vector.broadcast %206 : vector<1x32xf32> to vector<16x32xf32>
    %208 = arith.subf %202, %207 : vector<16x32xf32>
    %209 = arith.mulf %208, %208 : vector<16x32xf32>
    %cst_119 = arith.constant dense<0.000000e+00> : vector<32xf32>
    %210 = vector.multi_reduction <add>, %209, %cst_119 [0] : vector<16x32xf32> to vector<32xf32>
    %211 = vector.shape_cast %210 : vector<32xf32> to vector<1x32xf32>
    %cst_120 = arith.constant 1.600000e+01 : f32
    %212 = vector.broadcast %cst_120 : f32 to vector<1x32xf32>
    %213 = arith.divf %211, %212 : vector<1x32xf32>
    %cst_121 = arith.constant 9.99999974E-6 : f32
    %214 = vector.broadcast %cst_121 : f32 to vector<1x32xf32>
    %215 = arith.addf %213, %214 : vector<1x32xf32>
    %216 = math.rsqrt %215 : vector<1x32xf32>
    %217 = vector.broadcast %216 : vector<1x32xf32> to vector<16x32xf32>
    %218 = arith.mulf %208, %217 : vector<16x32xf32>
    %c2_122 = arith.constant 2 : index
    %c0_123 = arith.constant 0 : index
    %c0_124 = arith.constant 0 : index
    %219 = vector.load %arg8[%c2_122, %c0_123, %c0_124] : memref<8x1x32xf32, #tpu.memory_space<vmem>>, vector<1x1x32xf32>
    %220 = vector.shape_cast %219 : vector<1x1x32xf32> to vector<1x32xf32>
    %221 = vector.broadcast %220 : vector<1x32xf32> to vector<16x32xf32>
    %222 = arith.mulf %218, %221 : vector<16x32xf32>
    %c2_125 = arith.constant 2 : index
    %c0_126 = arith.constant 0 : index
    %c0_127 = arith.constant 0 : index
    %223 = vector.load %arg9[%c2_125, %c0_126, %c0_127] : memref<8x1x32xf32, #tpu.memory_space<vmem>>, vector<1x1x32xf32>
    %224 = vector.shape_cast %223 : vector<1x1x32xf32> to vector<1x32xf32>
    %225 = vector.broadcast %224 : vector<1x32xf32> to vector<16x32xf32>
    %226 = arith.addf %222, %225 : vector<16x32xf32>
    %cst_128 = arith.constant dense<0.000000e+00> : vector<16x33xf32>
    %227 = tpu.matmul %226, %4, %cst_128 {dimension_numbers = #tpu.dot_dimension_numbers<[1], [0], [0], [1], [0, 0, 1, 1], [], []>} : vector<16x32xf32>, vector<32x33xf32>, vector<16x33xf32> -> vector<16x33xf32>
    %228 = vector.broadcast %5 : vector<1x33xf32> to vector<16x33xf32>
    %229 = arith.addf %227, %228 : vector<16x33xf32>
    %230 = vector.extract_strided_slice %229 {offsets = [0, 0], sizes = [16, 32], strides = [1, 1]} : vector<16x33xf32> to vector<16x32xf32>
    %231 = vector.extract_strided_slice %229 {offsets = [0, 32], sizes = [16, 1], strides = [1, 1]} : vector<16x33xf32> to vector<16x1xf32>
    %cst_129 = arith.constant 0.000000e+00 : f32
    %232 = vector.broadcast %cst_129 : f32 to vector<16x2xf32>
    %233 = arith.cmpf ogt, %3, %232 : vector<16x2xf32>
    %cst_130 = arith.constant -1.000000e+30 : f32
    %234 = vector.shape_cast %231 : vector<16x1xf32> to vector<16x1xf32>
    %235 = vector.broadcast %234 : vector<16x1xf32> to vector<16x2xf32>
    %236 = vector.broadcast %cst_130 : f32 to vector<16x2xf32>
    %237 = arith.select %233, %235, %236 : vector<16x2xi1>, vector<16x2xf32>
    %cst_131 = arith.constant dense<0xFF800000> : vector<2xf32>
    %238 = vector.multi_reduction <maximumf>, %237, %cst_131 [0] : vector<16x2xf32> to vector<2xf32>
    %239 = vector.shape_cast %238 : vector<2xf32> to vector<1x2xf32>
    %cst_132 = arith.constant 0.000000e+00 : f32
    %240 = vector.broadcast %cst_132 : f32 to vector<16x2xf32>
    %241 = arith.cmpf ogt, %3, %240 : vector<16x2xf32>
    %cst_133 = arith.constant 0.000000e+00 : f32
    %242 = vector.shape_cast %239 : vector<1x2xf32> to vector<1x2xf32>
    %243 = vector.broadcast %242 : vector<1x2xf32> to vector<16x2xf32>
    %244 = vector.broadcast %cst_133 : f32 to vector<16x2xf32>
    %245 = arith.select %241, %243, %244 : vector<16x2xi1>, vector<16x2xf32>
    %cst_134 = arith.constant dense<0.000000e+00> : vector<16xf32>
    %246 = vector.multi_reduction <add>, %245, %cst_134 [1] : vector<16x2xf32> to vector<16xf32>
    %247 = vector.shape_cast %246 : vector<16xf32> to vector<16x1xf32>
    %248 = arith.subf %231, %247 : vector<16x1xf32>
    %249 = math.exp %248 : vector<16x1xf32>
    %250 = vector.broadcast %249 : vector<16x1xf32> to vector<16x32xf32>
    %251 = arith.mulf %250, %230 : vector<16x32xf32>
    %252 = tpu.concatenate %251, %249 in 1 : vector<16x32xf32>, vector<16x1xf32> -> vector<16x33xf32>
    %cst_135 = arith.constant dense<0.000000e+00> : vector<2x33xf32>
    %253 = tpu.matmul %2, %252, %cst_135 {dimension_numbers = #tpu.dot_dimension_numbers<[1], [0], [0], [1], [0, 0, 1, 1], [], []>} : vector<2x16xf32>, vector<16x33xf32>, vector<2x33xf32> -> vector<2x33xf32>
    %254 = vector.extract_strided_slice %253 {offsets = [0, 0], sizes = [2, 32], strides = [1, 1]} : vector<2x33xf32> to vector<2x32xf32>
    %255 = vector.extract_strided_slice %253 {offsets = [0, 32], sizes = [2, 1], strides = [1, 1]} : vector<2x33xf32> to vector<2x1xf32>
    %cst_136 = arith.constant 1.000000e-30 : f32
    %256 = vector.broadcast %cst_136 : f32 to vector<2x1xf32>
    %257 = arith.maximumf %255, %256 : vector<2x1xf32>
    %258 = tpu.reciprocal %257 {approx = true} : vector<2x1xf32> -> vector<2x1xf32>
    %259 = vector.broadcast %258 : vector<2x1xf32> to vector<2x32xf32>
    %260 = arith.mulf %254, %259 : vector<2x32xf32>
    %cst_137 = arith.constant dense<0.000000e+00> : vector<16x32xf32>
    %261 = tpu.matmul %1, %226, %cst_137 {dimension_numbers = #tpu.dot_dimension_numbers<[1], [0], [0], [1], [0, 0, 1, 1], [], []>} : vector<16x16xf32>, vector<16x32xf32>, vector<16x32xf32> -> vector<16x32xf32>
    %262 = tpu.concatenate %226, %261 in 1 : vector<16x32xf32>, vector<16x32xf32> -> vector<16x64xf32>
    %c3_138 = arith.constant 3 : index
    %c0_139 = arith.constant 0 : index
    %c0_140 = arith.constant 0 : index
    %263 = vector.load %arg4[%c3_138, %c0_139, %c0_140] : memref<8x64x32xf32, #tpu.memory_space<vmem>>, vector<1x64x32xf32>
    %264 = vector.shape_cast %263 : vector<1x64x32xf32> to vector<64x32xf32>
    %cst_141 = arith.constant dense<0.000000e+00> : vector<16x32xf32>
    %265 = tpu.matmul %262, %264, %cst_141 {dimension_numbers = #tpu.dot_dimension_numbers<[1], [0], [0], [1], [0, 0, 1, 1], [], []>} : vector<16x64xf32>, vector<64x32xf32>, vector<16x32xf32> -> vector<16x32xf32>
    %c3_142 = arith.constant 3 : index
    %c0_143 = arith.constant 0 : index
    %c0_144 = arith.constant 0 : index
    %266 = vector.load %arg5[%c3_142, %c0_143, %c0_144] : memref<8x1x32xf32, #tpu.memory_space<vmem>>, vector<1x1x32xf32>
    %267 = vector.shape_cast %266 : vector<1x1x32xf32> to vector<1x32xf32>
    %268 = vector.broadcast %267 : vector<1x32xf32> to vector<16x32xf32>
    %269 = arith.addf %265, %268 : vector<16x32xf32>
    %c6 = arith.constant 6 : index
    %c0_145 = arith.constant 0 : index
    %c0_146 = arith.constant 0 : index
    %270 = vector.load %arg6[%c6, %c0_145, %c0_146] : memref<16x32x32xf32, #tpu.memory_space<vmem>>, vector<1x32x32xf32>
    %271 = vector.shape_cast %270 : vector<1x32x32xf32> to vector<32x32xf32>
    %cst_147 = arith.constant dense<0.000000e+00> : vector<16x32xf32>
    %272 = tpu.matmul %269, %271, %cst_147 {dimension_numbers = #tpu.dot_dimension_numbers<[1], [0], [0], [1], [0, 0, 1, 1], [], []>} : vector<16x32xf32>, vector<32x32xf32>, vector<16x32xf32> -> vector<16x32xf32>
    %c6_148 = arith.constant 6 : index
    %c0_149 = arith.constant 0 : index
    %c0_150 = arith.constant 0 : index
    %273 = vector.load %arg7[%c6_148, %c0_149, %c0_150] : memref<16x1x32xf32, #tpu.memory_space<vmem>>, vector<1x1x32xf32>
    %274 = vector.shape_cast %273 : vector<1x1x32xf32> to vector<1x32xf32>
    %275 = vector.broadcast %274 : vector<1x32xf32> to vector<16x32xf32>
    %276 = arith.addf %272, %275 : vector<16x32xf32>
    %cst_151 = arith.constant 0.000000e+00 : f32
    %277 = vector.broadcast %cst_151 : f32 to vector<16x32xf32>
    %278 = arith.maximumf %276, %277 : vector<16x32xf32>
    %c7 = arith.constant 7 : index
    %c0_152 = arith.constant 0 : index
    %c0_153 = arith.constant 0 : index
    %279 = vector.load %arg6[%c7, %c0_152, %c0_153] : memref<16x32x32xf32, #tpu.memory_space<vmem>>, vector<1x32x32xf32>
    %280 = vector.shape_cast %279 : vector<1x32x32xf32> to vector<32x32xf32>
    %cst_154 = arith.constant dense<0.000000e+00> : vector<16x32xf32>
    %281 = tpu.matmul %278, %280, %cst_154 {dimension_numbers = #tpu.dot_dimension_numbers<[1], [0], [0], [1], [0, 0, 1, 1], [], []>} : vector<16x32xf32>, vector<32x32xf32>, vector<16x32xf32> -> vector<16x32xf32>
    %c7_155 = arith.constant 7 : index
    %c0_156 = arith.constant 0 : index
    %c0_157 = arith.constant 0 : index
    %282 = vector.load %arg7[%c7_155, %c0_156, %c0_157] : memref<16x1x32xf32, #tpu.memory_space<vmem>>, vector<1x1x32xf32>
    %283 = vector.shape_cast %282 : vector<1x1x32xf32> to vector<1x32xf32>
    %284 = vector.broadcast %283 : vector<1x32xf32> to vector<16x32xf32>
    %285 = arith.addf %281, %284 : vector<16x32xf32>
    %cst_158 = arith.constant 0.000000e+00 : f32
    %286 = vector.broadcast %cst_158 : f32 to vector<16x32xf32>
    %287 = arith.maximumf %285, %286 : vector<16x32xf32>
    %cst_159 = arith.constant dense<0.000000e+00> : vector<32xf32>
    %288 = vector.multi_reduction <add>, %287, %cst_159 [0] : vector<16x32xf32> to vector<32xf32>
    %289 = vector.shape_cast %288 : vector<32xf32> to vector<1x32xf32>
    %cst_160 = arith.constant 1.600000e+01 : f32
    %290 = vector.broadcast %cst_160 : f32 to vector<1x32xf32>
    %291 = arith.divf %289, %290 : vector<1x32xf32>
    %292 = vector.broadcast %291 : vector<1x32xf32> to vector<16x32xf32>
    %293 = arith.subf %287, %292 : vector<16x32xf32>
    %294 = arith.mulf %293, %293 : vector<16x32xf32>
    %cst_161 = arith.constant dense<0.000000e+00> : vector<32xf32>
    %295 = vector.multi_reduction <add>, %294, %cst_161 [0] : vector<16x32xf32> to vector<32xf32>
    %296 = vector.shape_cast %295 : vector<32xf32> to vector<1x32xf32>
    %cst_162 = arith.constant 1.600000e+01 : f32
    %297 = vector.broadcast %cst_162 : f32 to vector<1x32xf32>
    %298 = arith.divf %296, %297 : vector<1x32xf32>
    %cst_163 = arith.constant 9.99999974E-6 : f32
    %299 = vector.broadcast %cst_163 : f32 to vector<1x32xf32>
    %300 = arith.addf %298, %299 : vector<1x32xf32>
    %301 = math.rsqrt %300 : vector<1x32xf32>
    %302 = vector.broadcast %301 : vector<1x32xf32> to vector<16x32xf32>
    %303 = arith.mulf %293, %302 : vector<16x32xf32>
    %c3_164 = arith.constant 3 : index
    %c0_165 = arith.constant 0 : index
    %c0_166 = arith.constant 0 : index
    %304 = vector.load %arg8[%c3_164, %c0_165, %c0_166] : memref<8x1x32xf32, #tpu.memory_space<vmem>>, vector<1x1x32xf32>
    %305 = vector.shape_cast %304 : vector<1x1x32xf32> to vector<1x32xf32>
    %306 = vector.broadcast %305 : vector<1x32xf32> to vector<16x32xf32>
    %307 = arith.mulf %303, %306 : vector<16x32xf32>
    %c3_167 = arith.constant 3 : index
    %c0_168 = arith.constant 0 : index
    %c0_169 = arith.constant 0 : index
    %308 = vector.load %arg9[%c3_167, %c0_168, %c0_169] : memref<8x1x32xf32, #tpu.memory_space<vmem>>, vector<1x1x32xf32>
    %309 = vector.shape_cast %308 : vector<1x1x32xf32> to vector<1x32xf32>
    %310 = vector.broadcast %309 : vector<1x32xf32> to vector<16x32xf32>
    %311 = arith.addf %307, %310 : vector<16x32xf32>
    %cst_170 = arith.constant dense<0.000000e+00> : vector<16x33xf32>
    %312 = tpu.matmul %311, %4, %cst_170 {dimension_numbers = #tpu.dot_dimension_numbers<[1], [0], [0], [1], [0, 0, 1, 1], [], []>} : vector<16x32xf32>, vector<32x33xf32>, vector<16x33xf32> -> vector<16x33xf32>
    %313 = vector.broadcast %5 : vector<1x33xf32> to vector<16x33xf32>
    %314 = arith.addf %312, %313 : vector<16x33xf32>
    %315 = vector.extract_strided_slice %314 {offsets = [0, 0], sizes = [16, 32], strides = [1, 1]} : vector<16x33xf32> to vector<16x32xf32>
    %316 = vector.extract_strided_slice %314 {offsets = [0, 32], sizes = [16, 1], strides = [1, 1]} : vector<16x33xf32> to vector<16x1xf32>
    %cst_171 = arith.constant 0.000000e+00 : f32
    %317 = vector.broadcast %cst_171 : f32 to vector<16x2xf32>
    %318 = arith.cmpf ogt, %3, %317 : vector<16x2xf32>
    %cst_172 = arith.constant -1.000000e+30 : f32
    %319 = vector.shape_cast %316 : vector<16x1xf32> to vector<16x1xf32>
    %320 = vector.broadcast %319 : vector<16x1xf32> to vector<16x2xf32>
    %321 = vector.broadcast %cst_172 : f32 to vector<16x2xf32>
    %322 = arith.select %318, %320, %321 : vector<16x2xi1>, vector<16x2xf32>
    %cst_173 = arith.constant dense<0xFF800000> : vector<2xf32>
    %323 = vector.multi_reduction <maximumf>, %322, %cst_173 [0] : vector<16x2xf32> to vector<2xf32>
    %324 = vector.shape_cast %323 : vector<2xf32> to vector<1x2xf32>
    %cst_174 = arith.constant 0.000000e+00 : f32
    %325 = vector.broadcast %cst_174 : f32 to vector<16x2xf32>
    %326 = arith.cmpf ogt, %3, %325 : vector<16x2xf32>
    %cst_175 = arith.constant 0.000000e+00 : f32
    %327 = vector.shape_cast %324 : vector<1x2xf32> to vector<1x2xf32>
    %328 = vector.broadcast %327 : vector<1x2xf32> to vector<16x2xf32>
    %329 = vector.broadcast %cst_175 : f32 to vector<16x2xf32>
    %330 = arith.select %326, %328, %329 : vector<16x2xi1>, vector<16x2xf32>
    %cst_176 = arith.constant dense<0.000000e+00> : vector<16xf32>
    %331 = vector.multi_reduction <add>, %330, %cst_176 [1] : vector<16x2xf32> to vector<16xf32>
    %332 = vector.shape_cast %331 : vector<16xf32> to vector<16x1xf32>
    %333 = arith.subf %316, %332 : vector<16x1xf32>
    %334 = math.exp %333 : vector<16x1xf32>
    %335 = vector.broadcast %334 : vector<16x1xf32> to vector<16x32xf32>
    %336 = arith.mulf %335, %315 : vector<16x32xf32>
    %337 = tpu.concatenate %336, %334 in 1 : vector<16x32xf32>, vector<16x1xf32> -> vector<16x33xf32>
    %cst_177 = arith.constant dense<0.000000e+00> : vector<2x33xf32>
    %338 = tpu.matmul %2, %337, %cst_177 {dimension_numbers = #tpu.dot_dimension_numbers<[1], [0], [0], [1], [0, 0, 1, 1], [], []>} : vector<2x16xf32>, vector<16x33xf32>, vector<2x33xf32> -> vector<2x33xf32>
    %339 = vector.extract_strided_slice %338 {offsets = [0, 0], sizes = [2, 32], strides = [1, 1]} : vector<2x33xf32> to vector<2x32xf32>
    %340 = vector.extract_strided_slice %338 {offsets = [0, 32], sizes = [2, 1], strides = [1, 1]} : vector<2x33xf32> to vector<2x1xf32>
    %cst_178 = arith.constant 1.000000e-30 : f32
    %341 = vector.broadcast %cst_178 : f32 to vector<2x1xf32>
    %342 = arith.maximumf %340, %341 : vector<2x1xf32>
    %343 = tpu.reciprocal %342 {approx = true} : vector<2x1xf32> -> vector<2x1xf32>
    %344 = vector.broadcast %343 : vector<2x1xf32> to vector<2x32xf32>
    %345 = arith.mulf %339, %344 : vector<2x32xf32>
    %cst_179 = arith.constant dense<0.000000e+00> : vector<16x32xf32>
    %346 = tpu.matmul %1, %311, %cst_179 {dimension_numbers = #tpu.dot_dimension_numbers<[1], [0], [0], [1], [0, 0, 1, 1], [], []>} : vector<16x16xf32>, vector<16x32xf32>, vector<16x32xf32> -> vector<16x32xf32>
    %347 = tpu.concatenate %311, %346 in 1 : vector<16x32xf32>, vector<16x32xf32> -> vector<16x64xf32>
    %c4_180 = arith.constant 4 : index
    %c0_181 = arith.constant 0 : index
    %c0_182 = arith.constant 0 : index
    %348 = vector.load %arg4[%c4_180, %c0_181, %c0_182] : memref<8x64x32xf32, #tpu.memory_space<vmem>>, vector<1x64x32xf32>
    %349 = vector.shape_cast %348 : vector<1x64x32xf32> to vector<64x32xf32>
    %cst_183 = arith.constant dense<0.000000e+00> : vector<16x32xf32>
    %350 = tpu.matmul %347, %349, %cst_183 {dimension_numbers = #tpu.dot_dimension_numbers<[1], [0], [0], [1], [0, 0, 1, 1], [], []>} : vector<16x64xf32>, vector<64x32xf32>, vector<16x32xf32> -> vector<16x32xf32>
    %c4_184 = arith.constant 4 : index
    %c0_185 = arith.constant 0 : index
    %c0_186 = arith.constant 0 : index
    %351 = vector.load %arg5[%c4_184, %c0_185, %c0_186] : memref<8x1x32xf32, #tpu.memory_space<vmem>>, vector<1x1x32xf32>
    %352 = vector.shape_cast %351 : vector<1x1x32xf32> to vector<1x32xf32>
    %353 = vector.broadcast %352 : vector<1x32xf32> to vector<16x32xf32>
    %354 = arith.addf %350, %353 : vector<16x32xf32>
    %c8 = arith.constant 8 : index
    %c0_187 = arith.constant 0 : index
    %c0_188 = arith.constant 0 : index
    %355 = vector.load %arg6[%c8, %c0_187, %c0_188] : memref<16x32x32xf32, #tpu.memory_space<vmem>>, vector<1x32x32xf32>
    %356 = vector.shape_cast %355 : vector<1x32x32xf32> to vector<32x32xf32>
    %cst_189 = arith.constant dense<0.000000e+00> : vector<16x32xf32>
    %357 = tpu.matmul %354, %356, %cst_189 {dimension_numbers = #tpu.dot_dimension_numbers<[1], [0], [0], [1], [0, 0, 1, 1], [], []>} : vector<16x32xf32>, vector<32x32xf32>, vector<16x32xf32> -> vector<16x32xf32>
    %c8_190 = arith.constant 8 : index
    %c0_191 = arith.constant 0 : index
    %c0_192 = arith.constant 0 : index
    %358 = vector.load %arg7[%c8_190, %c0_191, %c0_192] : memref<16x1x32xf32, #tpu.memory_space<vmem>>, vector<1x1x32xf32>
    %359 = vector.shape_cast %358 : vector<1x1x32xf32> to vector<1x32xf32>
    %360 = vector.broadcast %359 : vector<1x32xf32> to vector<16x32xf32>
    %361 = arith.addf %357, %360 : vector<16x32xf32>
    %cst_193 = arith.constant 0.000000e+00 : f32
    %362 = vector.broadcast %cst_193 : f32 to vector<16x32xf32>
    %363 = arith.maximumf %361, %362 : vector<16x32xf32>
    %c9 = arith.constant 9 : index
    %c0_194 = arith.constant 0 : index
    %c0_195 = arith.constant 0 : index
    %364 = vector.load %arg6[%c9, %c0_194, %c0_195] : memref<16x32x32xf32, #tpu.memory_space<vmem>>, vector<1x32x32xf32>
    %365 = vector.shape_cast %364 : vector<1x32x32xf32> to vector<32x32xf32>
    %cst_196 = arith.constant dense<0.000000e+00> : vector<16x32xf32>
    %366 = tpu.matmul %363, %365, %cst_196 {dimension_numbers = #tpu.dot_dimension_numbers<[1], [0], [0], [1], [0, 0, 1, 1], [], []>} : vector<16x32xf32>, vector<32x32xf32>, vector<16x32xf32> -> vector<16x32xf32>
    %c9_197 = arith.constant 9 : index
    %c0_198 = arith.constant 0 : index
    %c0_199 = arith.constant 0 : index
    %367 = vector.load %arg7[%c9_197, %c0_198, %c0_199] : memref<16x1x32xf32, #tpu.memory_space<vmem>>, vector<1x1x32xf32>
    %368 = vector.shape_cast %367 : vector<1x1x32xf32> to vector<1x32xf32>
    %369 = vector.broadcast %368 : vector<1x32xf32> to vector<16x32xf32>
    %370 = arith.addf %366, %369 : vector<16x32xf32>
    %cst_200 = arith.constant 0.000000e+00 : f32
    %371 = vector.broadcast %cst_200 : f32 to vector<16x32xf32>
    %372 = arith.maximumf %370, %371 : vector<16x32xf32>
    %cst_201 = arith.constant dense<0.000000e+00> : vector<32xf32>
    %373 = vector.multi_reduction <add>, %372, %cst_201 [0] : vector<16x32xf32> to vector<32xf32>
    %374 = vector.shape_cast %373 : vector<32xf32> to vector<1x32xf32>
    %cst_202 = arith.constant 1.600000e+01 : f32
    %375 = vector.broadcast %cst_202 : f32 to vector<1x32xf32>
    %376 = arith.divf %374, %375 : vector<1x32xf32>
    %377 = vector.broadcast %376 : vector<1x32xf32> to vector<16x32xf32>
    %378 = arith.subf %372, %377 : vector<16x32xf32>
    %379 = arith.mulf %378, %378 : vector<16x32xf32>
    %cst_203 = arith.constant dense<0.000000e+00> : vector<32xf32>
    %380 = vector.multi_reduction <add>, %379, %cst_203 [0] : vector<16x32xf32> to vector<32xf32>
    %381 = vector.shape_cast %380 : vector<32xf32> to vector<1x32xf32>
    %cst_204 = arith.constant 1.600000e+01 : f32
    %382 = vector.broadcast %cst_204 : f32 to vector<1x32xf32>
    %383 = arith.divf %381, %382 : vector<1x32xf32>
    %cst_205 = arith.constant 9.99999974E-6 : f32
    %384 = vector.broadcast %cst_205 : f32 to vector<1x32xf32>
    %385 = arith.addf %383, %384 : vector<1x32xf32>
    %386 = math.rsqrt %385 : vector<1x32xf32>
    %387 = vector.broadcast %386 : vector<1x32xf32> to vector<16x32xf32>
    %388 = arith.mulf %378, %387 : vector<16x32xf32>
    %c4_206 = arith.constant 4 : index
    %c0_207 = arith.constant 0 : index
    %c0_208 = arith.constant 0 : index
    %389 = vector.load %arg8[%c4_206, %c0_207, %c0_208] : memref<8x1x32xf32, #tpu.memory_space<vmem>>, vector<1x1x32xf32>
    %390 = vector.shape_cast %389 : vector<1x1x32xf32> to vector<1x32xf32>
    %391 = vector.broadcast %390 : vector<1x32xf32> to vector<16x32xf32>
    %392 = arith.mulf %388, %391 : vector<16x32xf32>
    %c4_209 = arith.constant 4 : index
    %c0_210 = arith.constant 0 : index
    %c0_211 = arith.constant 0 : index
    %393 = vector.load %arg9[%c4_209, %c0_210, %c0_211] : memref<8x1x32xf32, #tpu.memory_space<vmem>>, vector<1x1x32xf32>
    %394 = vector.shape_cast %393 : vector<1x1x32xf32> to vector<1x32xf32>
    %395 = vector.broadcast %394 : vector<1x32xf32> to vector<16x32xf32>
    %396 = arith.addf %392, %395 : vector<16x32xf32>
    %cst_212 = arith.constant dense<0.000000e+00> : vector<16x33xf32>
    %397 = tpu.matmul %396, %4, %cst_212 {dimension_numbers = #tpu.dot_dimension_numbers<[1], [0], [0], [1], [0, 0, 1, 1], [], []>} : vector<16x32xf32>, vector<32x33xf32>, vector<16x33xf32> -> vector<16x33xf32>
    %398 = vector.broadcast %5 : vector<1x33xf32> to vector<16x33xf32>
    %399 = arith.addf %397, %398 : vector<16x33xf32>
    %400 = vector.extract_strided_slice %399 {offsets = [0, 0], sizes = [16, 32], strides = [1, 1]} : vector<16x33xf32> to vector<16x32xf32>
    %401 = vector.extract_strided_slice %399 {offsets = [0, 32], sizes = [16, 1], strides = [1, 1]} : vector<16x33xf32> to vector<16x1xf32>
    %cst_213 = arith.constant 0.000000e+00 : f32
    %402 = vector.broadcast %cst_213 : f32 to vector<16x2xf32>
    %403 = arith.cmpf ogt, %3, %402 : vector<16x2xf32>
    %cst_214 = arith.constant -1.000000e+30 : f32
    %404 = vector.shape_cast %401 : vector<16x1xf32> to vector<16x1xf32>
    %405 = vector.broadcast %404 : vector<16x1xf32> to vector<16x2xf32>
    %406 = vector.broadcast %cst_214 : f32 to vector<16x2xf32>
    %407 = arith.select %403, %405, %406 : vector<16x2xi1>, vector<16x2xf32>
    %cst_215 = arith.constant dense<0xFF800000> : vector<2xf32>
    %408 = vector.multi_reduction <maximumf>, %407, %cst_215 [0] : vector<16x2xf32> to vector<2xf32>
    %409 = vector.shape_cast %408 : vector<2xf32> to vector<1x2xf32>
    %cst_216 = arith.constant 0.000000e+00 : f32
    %410 = vector.broadcast %cst_216 : f32 to vector<16x2xf32>
    %411 = arith.cmpf ogt, %3, %410 : vector<16x2xf32>
    %cst_217 = arith.constant 0.000000e+00 : f32
    %412 = vector.shape_cast %409 : vector<1x2xf32> to vector<1x2xf32>
    %413 = vector.broadcast %412 : vector<1x2xf32> to vector<16x2xf32>
    %414 = vector.broadcast %cst_217 : f32 to vector<16x2xf32>
    %415 = arith.select %411, %413, %414 : vector<16x2xi1>, vector<16x2xf32>
    %cst_218 = arith.constant dense<0.000000e+00> : vector<16xf32>
    %416 = vector.multi_reduction <add>, %415, %cst_218 [1] : vector<16x2xf32> to vector<16xf32>
    %417 = vector.shape_cast %416 : vector<16xf32> to vector<16x1xf32>
    %418 = arith.subf %401, %417 : vector<16x1xf32>
    %419 = math.exp %418 : vector<16x1xf32>
    %420 = vector.broadcast %419 : vector<16x1xf32> to vector<16x32xf32>
    %421 = arith.mulf %420, %400 : vector<16x32xf32>
    %422 = tpu.concatenate %421, %419 in 1 : vector<16x32xf32>, vector<16x1xf32> -> vector<16x33xf32>
    %cst_219 = arith.constant dense<0.000000e+00> : vector<2x33xf32>
    %423 = tpu.matmul %2, %422, %cst_219 {dimension_numbers = #tpu.dot_dimension_numbers<[1], [0], [0], [1], [0, 0, 1, 1], [], []>} : vector<2x16xf32>, vector<16x33xf32>, vector<2x33xf32> -> vector<2x33xf32>
    %424 = vector.extract_strided_slice %423 {offsets = [0, 0], sizes = [2, 32], strides = [1, 1]} : vector<2x33xf32> to vector<2x32xf32>
    %425 = vector.extract_strided_slice %423 {offsets = [0, 32], sizes = [2, 1], strides = [1, 1]} : vector<2x33xf32> to vector<2x1xf32>
    %cst_220 = arith.constant 1.000000e-30 : f32
    %426 = vector.broadcast %cst_220 : f32 to vector<2x1xf32>
    %427 = arith.maximumf %425, %426 : vector<2x1xf32>
    %428 = tpu.reciprocal %427 {approx = true} : vector<2x1xf32> -> vector<2x1xf32>
    %429 = vector.broadcast %428 : vector<2x1xf32> to vector<2x32xf32>
    %430 = arith.mulf %424, %429 : vector<2x32xf32>
    %cst_221 = arith.constant dense<0.000000e+00> : vector<16x32xf32>
    %431 = tpu.matmul %1, %396, %cst_221 {dimension_numbers = #tpu.dot_dimension_numbers<[1], [0], [0], [1], [0, 0, 1, 1], [], []>} : vector<16x16xf32>, vector<16x32xf32>, vector<16x32xf32> -> vector<16x32xf32>
    %432 = tpu.concatenate %396, %431 in 1 : vector<16x32xf32>, vector<16x32xf32> -> vector<16x64xf32>
    %c5_222 = arith.constant 5 : index
    %c0_223 = arith.constant 0 : index
    %c0_224 = arith.constant 0 : index
    %433 = vector.load %arg4[%c5_222, %c0_223, %c0_224] : memref<8x64x32xf32, #tpu.memory_space<vmem>>, vector<1x64x32xf32>
    %434 = vector.shape_cast %433 : vector<1x64x32xf32> to vector<64x32xf32>
    %cst_225 = arith.constant dense<0.000000e+00> : vector<16x32xf32>
    %435 = tpu.matmul %432, %434, %cst_225 {dimension_numbers = #tpu.dot_dimension_numbers<[1], [0], [0], [1], [0, 0, 1, 1], [], []>} : vector<16x64xf32>, vector<64x32xf32>, vector<16x32xf32> -> vector<16x32xf32>
    %c5_226 = arith.constant 5 : index
    %c0_227 = arith.constant 0 : index
    %c0_228 = arith.constant 0 : index
    %436 = vector.load %arg5[%c5_226, %c0_227, %c0_228] : memref<8x1x32xf32, #tpu.memory_space<vmem>>, vector<1x1x32xf32>
    %437 = vector.shape_cast %436 : vector<1x1x32xf32> to vector<1x32xf32>
    %438 = vector.broadcast %437 : vector<1x32xf32> to vector<16x32xf32>
    %439 = arith.addf %435, %438 : vector<16x32xf32>
    %c10 = arith.constant 10 : index
    %c0_229 = arith.constant 0 : index
    %c0_230 = arith.constant 0 : index
    %440 = vector.load %arg6[%c10, %c0_229, %c0_230] : memref<16x32x32xf32, #tpu.memory_space<vmem>>, vector<1x32x32xf32>
    %441 = vector.shape_cast %440 : vector<1x32x32xf32> to vector<32x32xf32>
    %cst_231 = arith.constant dense<0.000000e+00> : vector<16x32xf32>
    %442 = tpu.matmul %439, %441, %cst_231 {dimension_numbers = #tpu.dot_dimension_numbers<[1], [0], [0], [1], [0, 0, 1, 1], [], []>} : vector<16x32xf32>, vector<32x32xf32>, vector<16x32xf32> -> vector<16x32xf32>
    %c10_232 = arith.constant 10 : index
    %c0_233 = arith.constant 0 : index
    %c0_234 = arith.constant 0 : index
    %443 = vector.load %arg7[%c10_232, %c0_233, %c0_234] : memref<16x1x32xf32, #tpu.memory_space<vmem>>, vector<1x1x32xf32>
    %444 = vector.shape_cast %443 : vector<1x1x32xf32> to vector<1x32xf32>
    %445 = vector.broadcast %444 : vector<1x32xf32> to vector<16x32xf32>
    %446 = arith.addf %442, %445 : vector<16x32xf32>
    %cst_235 = arith.constant 0.000000e+00 : f32
    %447 = vector.broadcast %cst_235 : f32 to vector<16x32xf32>
    %448 = arith.maximumf %446, %447 : vector<16x32xf32>
    %c11 = arith.constant 11 : index
    %c0_236 = arith.constant 0 : index
    %c0_237 = arith.constant 0 : index
    %449 = vector.load %arg6[%c11, %c0_236, %c0_237] : memref<16x32x32xf32, #tpu.memory_space<vmem>>, vector<1x32x32xf32>
    %450 = vector.shape_cast %449 : vector<1x32x32xf32> to vector<32x32xf32>
    %cst_238 = arith.constant dense<0.000000e+00> : vector<16x32xf32>
    %451 = tpu.matmul %448, %450, %cst_238 {dimension_numbers = #tpu.dot_dimension_numbers<[1], [0], [0], [1], [0, 0, 1, 1], [], []>} : vector<16x32xf32>, vector<32x32xf32>, vector<16x32xf32> -> vector<16x32xf32>
    %c11_239 = arith.constant 11 : index
    %c0_240 = arith.constant 0 : index
    %c0_241 = arith.constant 0 : index
    %452 = vector.load %arg7[%c11_239, %c0_240, %c0_241] : memref<16x1x32xf32, #tpu.memory_space<vmem>>, vector<1x1x32xf32>
    %453 = vector.shape_cast %452 : vector<1x1x32xf32> to vector<1x32xf32>
    %454 = vector.broadcast %453 : vector<1x32xf32> to vector<16x32xf32>
    %455 = arith.addf %451, %454 : vector<16x32xf32>
    %cst_242 = arith.constant 0.000000e+00 : f32
    %456 = vector.broadcast %cst_242 : f32 to vector<16x32xf32>
    %457 = arith.maximumf %455, %456 : vector<16x32xf32>
    %cst_243 = arith.constant dense<0.000000e+00> : vector<32xf32>
    %458 = vector.multi_reduction <add>, %457, %cst_243 [0] : vector<16x32xf32> to vector<32xf32>
    %459 = vector.shape_cast %458 : vector<32xf32> to vector<1x32xf32>
    %cst_244 = arith.constant 1.600000e+01 : f32
    %460 = vector.broadcast %cst_244 : f32 to vector<1x32xf32>
    %461 = arith.divf %459, %460 : vector<1x32xf32>
    %462 = vector.broadcast %461 : vector<1x32xf32> to vector<16x32xf32>
    %463 = arith.subf %457, %462 : vector<16x32xf32>
    %464 = arith.mulf %463, %463 : vector<16x32xf32>
    %cst_245 = arith.constant dense<0.000000e+00> : vector<32xf32>
    %465 = vector.multi_reduction <add>, %464, %cst_245 [0] : vector<16x32xf32> to vector<32xf32>
    %466 = vector.shape_cast %465 : vector<32xf32> to vector<1x32xf32>
    %cst_246 = arith.constant 1.600000e+01 : f32
    %467 = vector.broadcast %cst_246 : f32 to vector<1x32xf32>
    %468 = arith.divf %466, %467 : vector<1x32xf32>
    %cst_247 = arith.constant 9.99999974E-6 : f32
    %469 = vector.broadcast %cst_247 : f32 to vector<1x32xf32>
    %470 = arith.addf %468, %469 : vector<1x32xf32>
    %471 = math.rsqrt %470 : vector<1x32xf32>
    %472 = vector.broadcast %471 : vector<1x32xf32> to vector<16x32xf32>
    %473 = arith.mulf %463, %472 : vector<16x32xf32>
    %c5_248 = arith.constant 5 : index
    %c0_249 = arith.constant 0 : index
    %c0_250 = arith.constant 0 : index
    %474 = vector.load %arg8[%c5_248, %c0_249, %c0_250] : memref<8x1x32xf32, #tpu.memory_space<vmem>>, vector<1x1x32xf32>
    %475 = vector.shape_cast %474 : vector<1x1x32xf32> to vector<1x32xf32>
    %476 = vector.broadcast %475 : vector<1x32xf32> to vector<16x32xf32>
    %477 = arith.mulf %473, %476 : vector<16x32xf32>
    %c5_251 = arith.constant 5 : index
    %c0_252 = arith.constant 0 : index
    %c0_253 = arith.constant 0 : index
    %478 = vector.load %arg9[%c5_251, %c0_252, %c0_253] : memref<8x1x32xf32, #tpu.memory_space<vmem>>, vector<1x1x32xf32>
    %479 = vector.shape_cast %478 : vector<1x1x32xf32> to vector<1x32xf32>
    %480 = vector.broadcast %479 : vector<1x32xf32> to vector<16x32xf32>
    %481 = arith.addf %477, %480 : vector<16x32xf32>
    %cst_254 = arith.constant dense<0.000000e+00> : vector<16x33xf32>
    %482 = tpu.matmul %481, %4, %cst_254 {dimension_numbers = #tpu.dot_dimension_numbers<[1], [0], [0], [1], [0, 0, 1, 1], [], []>} : vector<16x32xf32>, vector<32x33xf32>, vector<16x33xf32> -> vector<16x33xf32>
    %483 = vector.broadcast %5 : vector<1x33xf32> to vector<16x33xf32>
    %484 = arith.addf %482, %483 : vector<16x33xf32>
    %485 = vector.extract_strided_slice %484 {offsets = [0, 0], sizes = [16, 32], strides = [1, 1]} : vector<16x33xf32> to vector<16x32xf32>
    %486 = vector.extract_strided_slice %484 {offsets = [0, 32], sizes = [16, 1], strides = [1, 1]} : vector<16x33xf32> to vector<16x1xf32>
    %cst_255 = arith.constant 0.000000e+00 : f32
    %487 = vector.broadcast %cst_255 : f32 to vector<16x2xf32>
    %488 = arith.cmpf ogt, %3, %487 : vector<16x2xf32>
    %cst_256 = arith.constant -1.000000e+30 : f32
    %489 = vector.shape_cast %486 : vector<16x1xf32> to vector<16x1xf32>
    %490 = vector.broadcast %489 : vector<16x1xf32> to vector<16x2xf32>
    %491 = vector.broadcast %cst_256 : f32 to vector<16x2xf32>
    %492 = arith.select %488, %490, %491 : vector<16x2xi1>, vector<16x2xf32>
    %cst_257 = arith.constant dense<0xFF800000> : vector<2xf32>
    %493 = vector.multi_reduction <maximumf>, %492, %cst_257 [0] : vector<16x2xf32> to vector<2xf32>
    %494 = vector.shape_cast %493 : vector<2xf32> to vector<1x2xf32>
    %cst_258 = arith.constant 0.000000e+00 : f32
    %495 = vector.broadcast %cst_258 : f32 to vector<16x2xf32>
    %496 = arith.cmpf ogt, %3, %495 : vector<16x2xf32>
    %cst_259 = arith.constant 0.000000e+00 : f32
    %497 = vector.shape_cast %494 : vector<1x2xf32> to vector<1x2xf32>
    %498 = vector.broadcast %497 : vector<1x2xf32> to vector<16x2xf32>
    %499 = vector.broadcast %cst_259 : f32 to vector<16x2xf32>
    %500 = arith.select %496, %498, %499 : vector<16x2xi1>, vector<16x2xf32>
    %cst_260 = arith.constant dense<0.000000e+00> : vector<16xf32>
    %501 = vector.multi_reduction <add>, %500, %cst_260 [1] : vector<16x2xf32> to vector<16xf32>
    %502 = vector.shape_cast %501 : vector<16xf32> to vector<16x1xf32>
    %503 = arith.subf %486, %502 : vector<16x1xf32>
    %504 = math.exp %503 : vector<16x1xf32>
    %505 = vector.broadcast %504 : vector<16x1xf32> to vector<16x32xf32>
    %506 = arith.mulf %505, %485 : vector<16x32xf32>
    %507 = tpu.concatenate %506, %504 in 1 : vector<16x32xf32>, vector<16x1xf32> -> vector<16x33xf32>
    %cst_261 = arith.constant dense<0.000000e+00> : vector<2x33xf32>
    %508 = tpu.matmul %2, %507, %cst_261 {dimension_numbers = #tpu.dot_dimension_numbers<[1], [0], [0], [1], [0, 0, 1, 1], [], []>} : vector<2x16xf32>, vector<16x33xf32>, vector<2x33xf32> -> vector<2x33xf32>
    %509 = vector.extract_strided_slice %508 {offsets = [0, 0], sizes = [2, 32], strides = [1, 1]} : vector<2x33xf32> to vector<2x32xf32>
    %510 = vector.extract_strided_slice %508 {offsets = [0, 32], sizes = [2, 1], strides = [1, 1]} : vector<2x33xf32> to vector<2x1xf32>
    %cst_262 = arith.constant 1.000000e-30 : f32
    %511 = vector.broadcast %cst_262 : f32 to vector<2x1xf32>
    %512 = arith.maximumf %510, %511 : vector<2x1xf32>
    %513 = tpu.reciprocal %512 {approx = true} : vector<2x1xf32> -> vector<2x1xf32>
    %514 = vector.broadcast %513 : vector<2x1xf32> to vector<2x32xf32>
    %515 = arith.mulf %509, %514 : vector<2x32xf32>
    %cst_263 = arith.constant dense<0.000000e+00> : vector<16x32xf32>
    %516 = tpu.matmul %1, %481, %cst_263 {dimension_numbers = #tpu.dot_dimension_numbers<[1], [0], [0], [1], [0, 0, 1, 1], [], []>} : vector<16x16xf32>, vector<16x32xf32>, vector<16x32xf32> -> vector<16x32xf32>
    %517 = tpu.concatenate %481, %516 in 1 : vector<16x32xf32>, vector<16x32xf32> -> vector<16x64xf32>
    %c6_264 = arith.constant 6 : index
    %c0_265 = arith.constant 0 : index
    %c0_266 = arith.constant 0 : index
    %518 = vector.load %arg4[%c6_264, %c0_265, %c0_266] : memref<8x64x32xf32, #tpu.memory_space<vmem>>, vector<1x64x32xf32>
    %519 = vector.shape_cast %518 : vector<1x64x32xf32> to vector<64x32xf32>
    %cst_267 = arith.constant dense<0.000000e+00> : vector<16x32xf32>
    %520 = tpu.matmul %517, %519, %cst_267 {dimension_numbers = #tpu.dot_dimension_numbers<[1], [0], [0], [1], [0, 0, 1, 1], [], []>} : vector<16x64xf32>, vector<64x32xf32>, vector<16x32xf32> -> vector<16x32xf32>
    %c6_268 = arith.constant 6 : index
    %c0_269 = arith.constant 0 : index
    %c0_270 = arith.constant 0 : index
    %521 = vector.load %arg5[%c6_268, %c0_269, %c0_270] : memref<8x1x32xf32, #tpu.memory_space<vmem>>, vector<1x1x32xf32>
    %522 = vector.shape_cast %521 : vector<1x1x32xf32> to vector<1x32xf32>
    %523 = vector.broadcast %522 : vector<1x32xf32> to vector<16x32xf32>
    %524 = arith.addf %520, %523 : vector<16x32xf32>
    %c12 = arith.constant 12 : index
    %c0_271 = arith.constant 0 : index
    %c0_272 = arith.constant 0 : index
    %525 = vector.load %arg6[%c12, %c0_271, %c0_272] : memref<16x32x32xf32, #tpu.memory_space<vmem>>, vector<1x32x32xf32>
    %526 = vector.shape_cast %525 : vector<1x32x32xf32> to vector<32x32xf32>
    %cst_273 = arith.constant dense<0.000000e+00> : vector<16x32xf32>
    %527 = tpu.matmul %524, %526, %cst_273 {dimension_numbers = #tpu.dot_dimension_numbers<[1], [0], [0], [1], [0, 0, 1, 1], [], []>} : vector<16x32xf32>, vector<32x32xf32>, vector<16x32xf32> -> vector<16x32xf32>
    %c12_274 = arith.constant 12 : index
    %c0_275 = arith.constant 0 : index
    %c0_276 = arith.constant 0 : index
    %528 = vector.load %arg7[%c12_274, %c0_275, %c0_276] : memref<16x1x32xf32, #tpu.memory_space<vmem>>, vector<1x1x32xf32>
    %529 = vector.shape_cast %528 : vector<1x1x32xf32> to vector<1x32xf32>
    %530 = vector.broadcast %529 : vector<1x32xf32> to vector<16x32xf32>
    %531 = arith.addf %527, %530 : vector<16x32xf32>
    %cst_277 = arith.constant 0.000000e+00 : f32
    %532 = vector.broadcast %cst_277 : f32 to vector<16x32xf32>
    %533 = arith.maximumf %531, %532 : vector<16x32xf32>
    %c13 = arith.constant 13 : index
    %c0_278 = arith.constant 0 : index
    %c0_279 = arith.constant 0 : index
    %534 = vector.load %arg6[%c13, %c0_278, %c0_279] : memref<16x32x32xf32, #tpu.memory_space<vmem>>, vector<1x32x32xf32>
    %535 = vector.shape_cast %534 : vector<1x32x32xf32> to vector<32x32xf32>
    %cst_280 = arith.constant dense<0.000000e+00> : vector<16x32xf32>
    %536 = tpu.matmul %533, %535, %cst_280 {dimension_numbers = #tpu.dot_dimension_numbers<[1], [0], [0], [1], [0, 0, 1, 1], [], []>} : vector<16x32xf32>, vector<32x32xf32>, vector<16x32xf32> -> vector<16x32xf32>
    %c13_281 = arith.constant 13 : index
    %c0_282 = arith.constant 0 : index
    %c0_283 = arith.constant 0 : index
    %537 = vector.load %arg7[%c13_281, %c0_282, %c0_283] : memref<16x1x32xf32, #tpu.memory_space<vmem>>, vector<1x1x32xf32>
    %538 = vector.shape_cast %537 : vector<1x1x32xf32> to vector<1x32xf32>
    %539 = vector.broadcast %538 : vector<1x32xf32> to vector<16x32xf32>
    %540 = arith.addf %536, %539 : vector<16x32xf32>
    %cst_284 = arith.constant 0.000000e+00 : f32
    %541 = vector.broadcast %cst_284 : f32 to vector<16x32xf32>
    %542 = arith.maximumf %540, %541 : vector<16x32xf32>
    %cst_285 = arith.constant dense<0.000000e+00> : vector<32xf32>
    %543 = vector.multi_reduction <add>, %542, %cst_285 [0] : vector<16x32xf32> to vector<32xf32>
    %544 = vector.shape_cast %543 : vector<32xf32> to vector<1x32xf32>
    %cst_286 = arith.constant 1.600000e+01 : f32
    %545 = vector.broadcast %cst_286 : f32 to vector<1x32xf32>
    %546 = arith.divf %544, %545 : vector<1x32xf32>
    %547 = vector.broadcast %546 : vector<1x32xf32> to vector<16x32xf32>
    %548 = arith.subf %542, %547 : vector<16x32xf32>
    %549 = arith.mulf %548, %548 : vector<16x32xf32>
    %cst_287 = arith.constant dense<0.000000e+00> : vector<32xf32>
    %550 = vector.multi_reduction <add>, %549, %cst_287 [0] : vector<16x32xf32> to vector<32xf32>
    %551 = vector.shape_cast %550 : vector<32xf32> to vector<1x32xf32>
    %cst_288 = arith.constant 1.600000e+01 : f32
    %552 = vector.broadcast %cst_288 : f32 to vector<1x32xf32>
    %553 = arith.divf %551, %552 : vector<1x32xf32>
    %cst_289 = arith.constant 9.99999974E-6 : f32
    %554 = vector.broadcast %cst_289 : f32 to vector<1x32xf32>
    %555 = arith.addf %553, %554 : vector<1x32xf32>
    %556 = math.rsqrt %555 : vector<1x32xf32>
    %557 = vector.broadcast %556 : vector<1x32xf32> to vector<16x32xf32>
    %558 = arith.mulf %548, %557 : vector<16x32xf32>
    %c6_290 = arith.constant 6 : index
    %c0_291 = arith.constant 0 : index
    %c0_292 = arith.constant 0 : index
    %559 = vector.load %arg8[%c6_290, %c0_291, %c0_292] : memref<8x1x32xf32, #tpu.memory_space<vmem>>, vector<1x1x32xf32>
    %560 = vector.shape_cast %559 : vector<1x1x32xf32> to vector<1x32xf32>
    %561 = vector.broadcast %560 : vector<1x32xf32> to vector<16x32xf32>
    %562 = arith.mulf %558, %561 : vector<16x32xf32>
    %c6_293 = arith.constant 6 : index
    %c0_294 = arith.constant 0 : index
    %c0_295 = arith.constant 0 : index
    %563 = vector.load %arg9[%c6_293, %c0_294, %c0_295] : memref<8x1x32xf32, #tpu.memory_space<vmem>>, vector<1x1x32xf32>
    %564 = vector.shape_cast %563 : vector<1x1x32xf32> to vector<1x32xf32>
    %565 = vector.broadcast %564 : vector<1x32xf32> to vector<16x32xf32>
    %566 = arith.addf %562, %565 : vector<16x32xf32>
    %cst_296 = arith.constant dense<0.000000e+00> : vector<16x33xf32>
    %567 = tpu.matmul %566, %4, %cst_296 {dimension_numbers = #tpu.dot_dimension_numbers<[1], [0], [0], [1], [0, 0, 1, 1], [], []>} : vector<16x32xf32>, vector<32x33xf32>, vector<16x33xf32> -> vector<16x33xf32>
    %568 = vector.broadcast %5 : vector<1x33xf32> to vector<16x33xf32>
    %569 = arith.addf %567, %568 : vector<16x33xf32>
    %570 = vector.extract_strided_slice %569 {offsets = [0, 0], sizes = [16, 32], strides = [1, 1]} : vector<16x33xf32> to vector<16x32xf32>
    %571 = vector.extract_strided_slice %569 {offsets = [0, 32], sizes = [16, 1], strides = [1, 1]} : vector<16x33xf32> to vector<16x1xf32>
    %cst_297 = arith.constant 0.000000e+00 : f32
    %572 = vector.broadcast %cst_297 : f32 to vector<16x2xf32>
    %573 = arith.cmpf ogt, %3, %572 : vector<16x2xf32>
    %cst_298 = arith.constant -1.000000e+30 : f32
    %574 = vector.shape_cast %571 : vector<16x1xf32> to vector<16x1xf32>
    %575 = vector.broadcast %574 : vector<16x1xf32> to vector<16x2xf32>
    %576 = vector.broadcast %cst_298 : f32 to vector<16x2xf32>
    %577 = arith.select %573, %575, %576 : vector<16x2xi1>, vector<16x2xf32>
    %cst_299 = arith.constant dense<0xFF800000> : vector<2xf32>
    %578 = vector.multi_reduction <maximumf>, %577, %cst_299 [0] : vector<16x2xf32> to vector<2xf32>
    %579 = vector.shape_cast %578 : vector<2xf32> to vector<1x2xf32>
    %cst_300 = arith.constant 0.000000e+00 : f32
    %580 = vector.broadcast %cst_300 : f32 to vector<16x2xf32>
    %581 = arith.cmpf ogt, %3, %580 : vector<16x2xf32>
    %cst_301 = arith.constant 0.000000e+00 : f32
    %582 = vector.shape_cast %579 : vector<1x2xf32> to vector<1x2xf32>
    %583 = vector.broadcast %582 : vector<1x2xf32> to vector<16x2xf32>
    %584 = vector.broadcast %cst_301 : f32 to vector<16x2xf32>
    %585 = arith.select %581, %583, %584 : vector<16x2xi1>, vector<16x2xf32>
    %cst_302 = arith.constant dense<0.000000e+00> : vector<16xf32>
    %586 = vector.multi_reduction <add>, %585, %cst_302 [1] : vector<16x2xf32> to vector<16xf32>
    %587 = vector.shape_cast %586 : vector<16xf32> to vector<16x1xf32>
    %588 = arith.subf %571, %587 : vector<16x1xf32>
    %589 = math.exp %588 : vector<16x1xf32>
    %590 = vector.broadcast %589 : vector<16x1xf32> to vector<16x32xf32>
    %591 = arith.mulf %590, %570 : vector<16x32xf32>
    %592 = tpu.concatenate %591, %589 in 1 : vector<16x32xf32>, vector<16x1xf32> -> vector<16x33xf32>
    %cst_303 = arith.constant dense<0.000000e+00> : vector<2x33xf32>
    %593 = tpu.matmul %2, %592, %cst_303 {dimension_numbers = #tpu.dot_dimension_numbers<[1], [0], [0], [1], [0, 0, 1, 1], [], []>} : vector<2x16xf32>, vector<16x33xf32>, vector<2x33xf32> -> vector<2x33xf32>
    %594 = vector.extract_strided_slice %593 {offsets = [0, 0], sizes = [2, 32], strides = [1, 1]} : vector<2x33xf32> to vector<2x32xf32>
    %595 = vector.extract_strided_slice %593 {offsets = [0, 32], sizes = [2, 1], strides = [1, 1]} : vector<2x33xf32> to vector<2x1xf32>
    %cst_304 = arith.constant 1.000000e-30 : f32
    %596 = vector.broadcast %cst_304 : f32 to vector<2x1xf32>
    %597 = arith.maximumf %595, %596 : vector<2x1xf32>
    %598 = tpu.reciprocal %597 {approx = true} : vector<2x1xf32> -> vector<2x1xf32>
    %599 = vector.broadcast %598 : vector<2x1xf32> to vector<2x32xf32>
    %600 = arith.mulf %594, %599 : vector<2x32xf32>
    %cst_305 = arith.constant dense<0.000000e+00> : vector<16x32xf32>
    %601 = tpu.matmul %1, %566, %cst_305 {dimension_numbers = #tpu.dot_dimension_numbers<[1], [0], [0], [1], [0, 0, 1, 1], [], []>} : vector<16x16xf32>, vector<16x32xf32>, vector<16x32xf32> -> vector<16x32xf32>
    %602 = tpu.concatenate %566, %601 in 1 : vector<16x32xf32>, vector<16x32xf32> -> vector<16x64xf32>
    %c7_306 = arith.constant 7 : index
    %c0_307 = arith.constant 0 : index
    %c0_308 = arith.constant 0 : index
    %603 = vector.load %arg4[%c7_306, %c0_307, %c0_308] : memref<8x64x32xf32, #tpu.memory_space<vmem>>, vector<1x64x32xf32>
    %604 = vector.shape_cast %603 : vector<1x64x32xf32> to vector<64x32xf32>
    %cst_309 = arith.constant dense<0.000000e+00> : vector<16x32xf32>
    %605 = tpu.matmul %602, %604, %cst_309 {dimension_numbers = #tpu.dot_dimension_numbers<[1], [0], [0], [1], [0, 0, 1, 1], [], []>} : vector<16x64xf32>, vector<64x32xf32>, vector<16x32xf32> -> vector<16x32xf32>
    %c7_310 = arith.constant 7 : index
    %c0_311 = arith.constant 0 : index
    %c0_312 = arith.constant 0 : index
    %606 = vector.load %arg5[%c7_310, %c0_311, %c0_312] : memref<8x1x32xf32, #tpu.memory_space<vmem>>, vector<1x1x32xf32>
    %607 = vector.shape_cast %606 : vector<1x1x32xf32> to vector<1x32xf32>
    %608 = vector.broadcast %607 : vector<1x32xf32> to vector<16x32xf32>
    %609 = arith.addf %605, %608 : vector<16x32xf32>
    %c14 = arith.constant 14 : index
    %c0_313 = arith.constant 0 : index
    %c0_314 = arith.constant 0 : index
    %610 = vector.load %arg6[%c14, %c0_313, %c0_314] : memref<16x32x32xf32, #tpu.memory_space<vmem>>, vector<1x32x32xf32>
    %611 = vector.shape_cast %610 : vector<1x32x32xf32> to vector<32x32xf32>
    %cst_315 = arith.constant dense<0.000000e+00> : vector<16x32xf32>
    %612 = tpu.matmul %609, %611, %cst_315 {dimension_numbers = #tpu.dot_dimension_numbers<[1], [0], [0], [1], [0, 0, 1, 1], [], []>} : vector<16x32xf32>, vector<32x32xf32>, vector<16x32xf32> -> vector<16x32xf32>
    %c14_316 = arith.constant 14 : index
    %c0_317 = arith.constant 0 : index
    %c0_318 = arith.constant 0 : index
    %613 = vector.load %arg7[%c14_316, %c0_317, %c0_318] : memref<16x1x32xf32, #tpu.memory_space<vmem>>, vector<1x1x32xf32>
    %614 = vector.shape_cast %613 : vector<1x1x32xf32> to vector<1x32xf32>
    %615 = vector.broadcast %614 : vector<1x32xf32> to vector<16x32xf32>
    %616 = arith.addf %612, %615 : vector<16x32xf32>
    %cst_319 = arith.constant 0.000000e+00 : f32
    %617 = vector.broadcast %cst_319 : f32 to vector<16x32xf32>
    %618 = arith.maximumf %616, %617 : vector<16x32xf32>
    %c15 = arith.constant 15 : index
    %c0_320 = arith.constant 0 : index
    %c0_321 = arith.constant 0 : index
    %619 = vector.load %arg6[%c15, %c0_320, %c0_321] : memref<16x32x32xf32, #tpu.memory_space<vmem>>, vector<1x32x32xf32>
    %620 = vector.shape_cast %619 : vector<1x32x32xf32> to vector<32x32xf32>
    %cst_322 = arith.constant dense<0.000000e+00> : vector<16x32xf32>
    %621 = tpu.matmul %618, %620, %cst_322 {dimension_numbers = #tpu.dot_dimension_numbers<[1], [0], [0], [1], [0, 0, 1, 1], [], []>} : vector<16x32xf32>, vector<32x32xf32>, vector<16x32xf32> -> vector<16x32xf32>
    %c15_323 = arith.constant 15 : index
    %c0_324 = arith.constant 0 : index
    %c0_325 = arith.constant 0 : index
    %622 = vector.load %arg7[%c15_323, %c0_324, %c0_325] : memref<16x1x32xf32, #tpu.memory_space<vmem>>, vector<1x1x32xf32>
    %623 = vector.shape_cast %622 : vector<1x1x32xf32> to vector<1x32xf32>
    %624 = vector.broadcast %623 : vector<1x32xf32> to vector<16x32xf32>
    %625 = arith.addf %621, %624 : vector<16x32xf32>
    %cst_326 = arith.constant 0.000000e+00 : f32
    %626 = vector.broadcast %cst_326 : f32 to vector<16x32xf32>
    %627 = arith.maximumf %625, %626 : vector<16x32xf32>
    %cst_327 = arith.constant dense<0.000000e+00> : vector<32xf32>
    %628 = vector.multi_reduction <add>, %627, %cst_327 [0] : vector<16x32xf32> to vector<32xf32>
    %629 = vector.shape_cast %628 : vector<32xf32> to vector<1x32xf32>
    %cst_328 = arith.constant 1.600000e+01 : f32
    %630 = vector.broadcast %cst_328 : f32 to vector<1x32xf32>
    %631 = arith.divf %629, %630 : vector<1x32xf32>
    %632 = vector.broadcast %631 : vector<1x32xf32> to vector<16x32xf32>
    %633 = arith.subf %627, %632 : vector<16x32xf32>
    %634 = arith.mulf %633, %633 : vector<16x32xf32>
    %cst_329 = arith.constant dense<0.000000e+00> : vector<32xf32>
    %635 = vector.multi_reduction <add>, %634, %cst_329 [0] : vector<16x32xf32> to vector<32xf32>
    %636 = vector.shape_cast %635 : vector<32xf32> to vector<1x32xf32>
    %cst_330 = arith.constant 1.600000e+01 : f32
    %637 = vector.broadcast %cst_330 : f32 to vector<1x32xf32>
    %638 = arith.divf %636, %637 : vector<1x32xf32>
    %cst_331 = arith.constant 9.99999974E-6 : f32
    %639 = vector.broadcast %cst_331 : f32 to vector<1x32xf32>
    %640 = arith.addf %638, %639 : vector<1x32xf32>
    %641 = math.rsqrt %640 : vector<1x32xf32>
    %642 = vector.broadcast %641 : vector<1x32xf32> to vector<16x32xf32>
    %643 = arith.mulf %633, %642 : vector<16x32xf32>
    %c7_332 = arith.constant 7 : index
    %c0_333 = arith.constant 0 : index
    %c0_334 = arith.constant 0 : index
    %644 = vector.load %arg8[%c7_332, %c0_333, %c0_334] : memref<8x1x32xf32, #tpu.memory_space<vmem>>, vector<1x1x32xf32>
    %645 = vector.shape_cast %644 : vector<1x1x32xf32> to vector<1x32xf32>
    %646 = vector.broadcast %645 : vector<1x32xf32> to vector<16x32xf32>
    %647 = arith.mulf %643, %646 : vector<16x32xf32>
    %c7_335 = arith.constant 7 : index
    %c0_336 = arith.constant 0 : index
    %c0_337 = arith.constant 0 : index
    %648 = vector.load %arg9[%c7_335, %c0_336, %c0_337] : memref<8x1x32xf32, #tpu.memory_space<vmem>>, vector<1x1x32xf32>
    %649 = vector.shape_cast %648 : vector<1x1x32xf32> to vector<1x32xf32>
    %650 = vector.broadcast %649 : vector<1x32xf32> to vector<16x32xf32>
    %651 = arith.addf %647, %650 : vector<16x32xf32>
    %cst_338 = arith.constant dense<0.000000e+00> : vector<16x33xf32>
    %652 = tpu.matmul %651, %4, %cst_338 {dimension_numbers = #tpu.dot_dimension_numbers<[1], [0], [0], [1], [0, 0, 1, 1], [], []>} : vector<16x32xf32>, vector<32x33xf32>, vector<16x33xf32> -> vector<16x33xf32>
    %653 = vector.broadcast %5 : vector<1x33xf32> to vector<16x33xf32>
    %654 = arith.addf %652, %653 : vector<16x33xf32>
    %655 = vector.extract_strided_slice %654 {offsets = [0, 0], sizes = [16, 32], strides = [1, 1]} : vector<16x33xf32> to vector<16x32xf32>
    %656 = vector.extract_strided_slice %654 {offsets = [0, 32], sizes = [16, 1], strides = [1, 1]} : vector<16x33xf32> to vector<16x1xf32>
    %cst_339 = arith.constant 0.000000e+00 : f32
    %657 = vector.broadcast %cst_339 : f32 to vector<16x2xf32>
    %658 = arith.cmpf ogt, %3, %657 : vector<16x2xf32>
    %cst_340 = arith.constant -1.000000e+30 : f32
    %659 = vector.shape_cast %656 : vector<16x1xf32> to vector<16x1xf32>
    %660 = vector.broadcast %659 : vector<16x1xf32> to vector<16x2xf32>
    %661 = vector.broadcast %cst_340 : f32 to vector<16x2xf32>
    %662 = arith.select %658, %660, %661 : vector<16x2xi1>, vector<16x2xf32>
    %cst_341 = arith.constant dense<0xFF800000> : vector<2xf32>
    %663 = vector.multi_reduction <maximumf>, %662, %cst_341 [0] : vector<16x2xf32> to vector<2xf32>
    %664 = vector.shape_cast %663 : vector<2xf32> to vector<1x2xf32>
    %cst_342 = arith.constant 0.000000e+00 : f32
    %665 = vector.broadcast %cst_342 : f32 to vector<16x2xf32>
    %666 = arith.cmpf ogt, %3, %665 : vector<16x2xf32>
    %cst_343 = arith.constant 0.000000e+00 : f32
    %667 = vector.shape_cast %664 : vector<1x2xf32> to vector<1x2xf32>
    %668 = vector.broadcast %667 : vector<1x2xf32> to vector<16x2xf32>
    %669 = vector.broadcast %cst_343 : f32 to vector<16x2xf32>
    %670 = arith.select %666, %668, %669 : vector<16x2xi1>, vector<16x2xf32>
    %cst_344 = arith.constant dense<0.000000e+00> : vector<16xf32>
    %671 = vector.multi_reduction <add>, %670, %cst_344 [1] : vector<16x2xf32> to vector<16xf32>
    %672 = vector.shape_cast %671 : vector<16xf32> to vector<16x1xf32>
    %673 = arith.subf %656, %672 : vector<16x1xf32>
    %674 = math.exp %673 : vector<16x1xf32>
    %675 = vector.broadcast %674 : vector<16x1xf32> to vector<16x32xf32>
    %676 = arith.mulf %675, %655 : vector<16x32xf32>
    %677 = tpu.concatenate %676, %674 in 1 : vector<16x32xf32>, vector<16x1xf32> -> vector<16x33xf32>
    %cst_345 = arith.constant dense<0.000000e+00> : vector<2x33xf32>
    %678 = tpu.matmul %2, %677, %cst_345 {dimension_numbers = #tpu.dot_dimension_numbers<[1], [0], [0], [1], [0, 0, 1, 1], [], []>} : vector<2x16xf32>, vector<16x33xf32>, vector<2x33xf32> -> vector<2x33xf32>
    %679 = vector.extract_strided_slice %678 {offsets = [0, 0], sizes = [2, 32], strides = [1, 1]} : vector<2x33xf32> to vector<2x32xf32>
    %680 = vector.extract_strided_slice %678 {offsets = [0, 32], sizes = [2, 1], strides = [1, 1]} : vector<2x33xf32> to vector<2x1xf32>
    %cst_346 = arith.constant 1.000000e-30 : f32
    %681 = vector.broadcast %cst_346 : f32 to vector<2x1xf32>
    %682 = arith.maximumf %680, %681 : vector<2x1xf32>
    %683 = tpu.reciprocal %682 {approx = true} : vector<2x1xf32> -> vector<2x1xf32>
    %684 = vector.broadcast %683 : vector<2x1xf32> to vector<2x32xf32>
    %685 = arith.mulf %679, %684 : vector<2x32xf32>
    %686 = tpu.concatenate %90, %175, %260, %345, %430, %515, %600, %685 in 1 : vector<2x32xf32>, vector<2x32xf32>, vector<2x32xf32>, vector<2x32xf32>, vector<2x32xf32>, vector<2x32xf32>, vector<2x32xf32>, vector<2x32xf32> -> vector<2x256xf32>
    %c0_347 = arith.constant 0 : index
    %c0_348 = arith.constant 0 : index
    %687 = vector.load %arg12[%c0_347, %c0_348] : memref<256x8xf32, #tpu.memory_space<vmem>>, vector<256x8xf32>
    %cst_349 = arith.constant dense<0.000000e+00> : vector<2x8xf32>
    %688 = tpu.matmul %686, %687, %cst_349 {dimension_numbers = #tpu.dot_dimension_numbers<[1], [0], [0], [1], [0, 0, 1, 1], [], []>} : vector<2x256xf32>, vector<256x8xf32>, vector<2x8xf32> -> vector<2x8xf32>
    %c0_350 = arith.constant 0 : index
    %c0_351 = arith.constant 0 : index
    %689 = vector.load %arg13[%c0_350, %c0_351] : memref<1x8xf32, #tpu.memory_space<vmem>>, vector<1x8xf32>
    %690 = vector.broadcast %689 : vector<1x8xf32> to vector<2x8xf32>
    %691 = arith.addf %688, %690 : vector<2x8xf32>
    %cst_352 = arith.constant 0.000000e+00 : f32
    %692 = vector.broadcast %cst_352 : f32 to vector<2x8xf32>
    %693 = arith.maximumf %691, %692 : vector<2x8xf32>
    %c0_353 = arith.constant 0 : index
    %c0_354 = arith.constant 0 : index
    %694 = vector.load %arg14[%c0_353, %c0_354] : memref<8x8xf32, #tpu.memory_space<vmem>>, vector<8x8xf32>
    %cst_355 = arith.constant dense<0.000000e+00> : vector<2x8xf32>
    %695 = tpu.matmul %693, %694, %cst_355 {dimension_numbers = #tpu.dot_dimension_numbers<[1], [0], [0], [1], [0, 0, 1, 1], [], []>} : vector<2x8xf32>, vector<8x8xf32>, vector<2x8xf32> -> vector<2x8xf32>
    %c0_356 = arith.constant 0 : index
    %c0_357 = arith.constant 0 : index
    %696 = vector.load %arg15[%c0_356, %c0_357] : memref<1x8xf32, #tpu.memory_space<vmem>>, vector<1x8xf32>
    %697 = vector.broadcast %696 : vector<1x8xf32> to vector<2x8xf32>
    %698 = arith.addf %695, %697 : vector<2x8xf32>
    %c0_358 = arith.constant 0 : index
    %c0_359 = arith.constant 0 : index
    %699 = vector.load %arg16[%c0_358, %c0_359] : memref<2x8xf32, #tpu.memory_space<vmem>>, vector<2x8xf32>
    tpu.vector_store %arg16[%c0_358, %c0_359], %698 {strides = array<i32>} : memref<2x8xf32, #tpu.memory_space<vmem>>, vector<2x8xf32>,
    return
  }
}

</mosaic_0001>

<llo_original>
// kernel: tpu_custom_call.1
$region0: #{tpu_custom_call.1}
  #allocation0 [shape = 'u32[]', space=smem, size = 0x4, offset = 0x4, fixed_abs, tag = 'smem constant byte address 0x4 - core index']
  #allocation1 [shape = 'u32[72,128]{1,0:T(1,128)}', space=vmem, size = 0x9000, scoped, tag = 'internal scratch']
  %s0 = inlined_call_operand.vmem [shape: f32[16,32], index: 0, kind: input, shape index: {}]
  %s1 = inlined_call_operand.vmem [shape: f32[16,16], index: 1, kind: input, shape index: {}]
  %s2 = inlined_call_operand.vmem [shape: f32[2,16], index: 2, kind: input, shape index: {}]
  %s3 = inlined_call_operand.vmem [shape: f32[16,2], index: 3, kind: input, shape index: {}]
  %s4 = inlined_call_operand.vmem [shape: f32[8,64,32], index: 4, kind: input, shape index: {}]
  %s5 = inlined_call_operand.vmem [shape: f32[8,1,32], index: 5, kind: input, shape index: {}]
  %s6 = inlined_call_operand.vmem [shape: f32[16,32,32], index: 6, kind: input, shape index: {}]
  %s7 = inlined_call_operand.vmem [shape: f32[16,1,32], index: 7, kind: input, shape index: {}]
  %s8 = inlined_call_operand.vmem [shape: f32[8,1,32], index: 8, kind: input, shape index: {}]
  %s9 = inlined_call_operand.vmem [shape: f32[8,1,32], index: 9, kind: input, shape index: {}]
  %s10 = inlined_call_operand.vmem [shape: f32[32,33], index: 10, kind: input, shape index: {}]
  %s11 = inlined_call_operand.vmem [shape: f32[1,33], index: 11, kind: input, shape index: {}]
  %s12 = inlined_call_operand.vmem [shape: f32[256,8], index: 12, kind: input, shape index: {}]
  %s13 = inlined_call_operand.vmem [shape: f32[1,8], index: 13, kind: input, shape index: {}]
  %s14 = inlined_call_operand.vmem [shape: f32[8,8], index: 14, kind: input, shape index: {}]
  %s15 = inlined_call_operand.vmem [shape: f32[1,8], index: 15, kind: input, shape index: {}]
  %s16 = inlined_call_operand.hbm [shape: f32[2,8], index: 16, kind: output, shape index: {}]
  %s17 = sld [smem:[#allocation0]]
  $region74: #{tpu_custom_call.1} parent=0
    _
  %s19 = ssub.s32 1, %s17
  %s20 = scalar_select 0, %s19, %s17
  $region1: #{tpu_custom_call.1} parent=0
    #allocation2 [shape = 'u8[1024]{0}', space=vmem, size = 0x400, scoped, tag = 'output window, operand 0, single buffered']
    #allocation3 [shape = 's32[1]{0}', space=sflag, size = 0x4, scoped, tag = 'scoped memory for tpu_custom_call.1']
    %21 = vsyncpa [#allocation3], 0
    // Predicated region
    $region2: #{tpu_custom_call.1} parent=1 // pred_check
      _
    $region3: #{tpu_custom_call.1} parent=1 // pred_check_branch
      %23 = sbr.rel (0) target = $region5
    $region4: #{tpu_custom_call.1} parent=1 // pred_region
      _
    $region5: #{tpu_custom_call.1} parent=1 // pred_fallthru
      _
    // Predicated region
    $region6: #{tpu_custom_call.1} parent=1 // pred_check
      _
    $region7: #{tpu_custom_call.1} parent=1 // pred_check_branch
      %25 = sbr.rel (0) target = $region9
    $region8: #{tpu_custom_call.1} parent=1 // pred_region
      _
    $region9: #{tpu_custom_call.1} parent=1 // pred_fallthru
      _
    // Predicated region
    $region10: #{tpu_custom_call.1} parent=1 // pred_check
      _
    $region11: #{tpu_custom_call.1} parent=1 // pred_check_branch
      %27 = sbr.rel (0) target = $region13
    $region12: #{tpu_custom_call.1} parent=1 // pred_region
      _
    $region13: #{tpu_custom_call.1} parent=1 // pred_fallthru
      _
    // Predicated region
    $region14: #{tpu_custom_call.1} parent=1 // pred_check
      _
    $region15: #{tpu_custom_call.1} parent=1 // pred_check_branch
      %29 = sbr.rel (0) target = $region17
    $region16: #{tpu_custom_call.1} parent=1 // pred_region
      _
    $region17: #{tpu_custom_call.1} parent=1 // pred_fallthru
      _
    // Predicated region
    $region18: #{tpu_custom_call.1} parent=1 // pred_check
      _
    $region19: #{tpu_custom_call.1} parent=1 // pred_check_branch
      %31 = sbr.rel (0) target = $region21
    $region20: #{tpu_custom_call.1} parent=1 // pred_region
      _
    $region21: #{tpu_custom_call.1} parent=1 // pred_fallthru
      _
    // Predicated region
    $region22: #{tpu_custom_call.1} parent=1 // pred_check
      _
    $region23: #{tpu_custom_call.1} parent=1 // pred_check_branch
      %33 = sbr.rel (0) target = $region25
    $region24: #{tpu_custom_call.1} parent=1 // pred_region
      _
    $region25: #{tpu_custom_call.1} parent=1 // pred_fallthru
      _
    // Predicated region
    $region26: #{tpu_custom_call.1} parent=1 // pred_check
      _
    $region27: #{tpu_custom_call.1} parent=1 // pred_check_branch
      %35 = sbr.rel (0) target = $region29
    $region28: #{tpu_custom_call.1} parent=1 // pred_region
      _
    $region29: #{tpu_custom_call.1} parent=1 // pred_fallthru
      _
    // Predicated region
    $region30: #{tpu_custom_call.1} parent=1 // pred_check
      _
    $region31: #{tpu_custom_call.1} parent=1 // pred_check_branch
      %37 = sbr.rel (0) target = $region33
    $region32: #{tpu_custom_call.1} parent=1 // pred_region
      _
    $region33: #{tpu_custom_call.1} parent=1 // pred_fallthru
      _
    // Predicated region
    $region34: #{tpu_custom_call.1} parent=1 // pred_check
      _
    $region35: #{tpu_custom_call.1} parent=1 // pred_check_branch
      %39 = sbr.rel (0) target = $region37
    $region36: #{tpu_custom_call.1} parent=1 // pred_region
      _
    $region37: #{tpu_custom_call.1} parent=1 // pred_fallthru
      _
    // Predicated region
    $region38: #{tpu_custom_call.1} parent=1 // pred_check
      _
    $region39: #{tpu_custom_call.1} parent=1 // pred_check_branch
      %41 = sbr.rel (0) target = $region41
    $region40: #{tpu_custom_call.1} parent=1 // pred_region
      _
    $region41: #{tpu_custom_call.1} parent=1 // pred_fallthru
      _
    // Predicated region
    $region42: #{tpu_custom_call.1} parent=1 // pred_check
      _
    $region43: #{tpu_custom_call.1} parent=1 // pred_check_branch
      %43 = sbr.rel (0) target = $region45
    $region44: #{tpu_custom_call.1} parent=1 // pred_region
      _
    $region45: #{tpu_custom_call.1} parent=1 // pred_fallthru
      _
    // Predicated region
    $region46: #{tpu_custom_call.1} parent=1 // pred_check
      _
    $region47: #{tpu_custom_call.1} parent=1 // pred_check_branch
      %45 = sbr.rel (0) target = $region49
    $region48: #{tpu_custom_call.1} parent=1 // pred_region
      _
    $region49: #{tpu_custom_call.1} parent=1 // pred_fallthru
      _
    // Predicated region
    $region50: #{tpu_custom_call.1} parent=1 // pred_check
      _
    $region51: #{tpu_custom_call.1} parent=1 // pred_check_branch
      %47 = sbr.rel (0) target = $region53
    $region52: #{tpu_custom_call.1} parent=1 // pred_region
      _
    $region53: #{tpu_custom_call.1} parent=1 // pred_fallthru
      _
    // Predicated region
    $region54: #{tpu_custom_call.1} parent=1 // pred_check
      _
    $region55: #{tpu_custom_call.1} parent=1 // pred_check_branch
      %49 = sbr.rel (0) target = $region57
    $region56: #{tpu_custom_call.1} parent=1 // pred_region
      _
    $region57: #{tpu_custom_call.1} parent=1 // pred_fallthru
      _
    // Predicated region
    $region58: #{tpu_custom_call.1} parent=1 // pred_check
      _
    $region59: #{tpu_custom_call.1} parent=1 // pred_check_branch
      %51 = sbr.rel (0) target = $region61
    $region60: #{tpu_custom_call.1} parent=1 // pred_region
      _
    $region61: #{tpu_custom_call.1} parent=1 // pred_fallthru
      _
    // Predicated region
    $region62: #{tpu_custom_call.1} parent=1 // pred_check
      _
    $region63: #{tpu_custom_call.1} parent=1 // pred_check_branch
      %53 = sbr.rel (0) target = $region65
    $region64: #{tpu_custom_call.1} parent=1 // pred_region
      _
    $region65: #{tpu_custom_call.1} parent=1 // pred_fallthru
      _
    %v54 = vld [vmem:[%s0] sm:$0xff]
    %v55 = vld [vmem:[%s0 + $0x8] sm:$0xff]
    %v56 = vld [vmem:[%s1] sm:$0xff]
    %v57 = vld [vmem:[%s1 + $0x8] sm:$0xff]
    %v58 = vld [vmem:[%s2] sm:$0x3]
    %v59 = vld [vmem:[%s3] sm:$0xff]
    %v60 = vld [vmem:[%s3 + $0x8] sm:$0xff]
    %v61 = vld [vmem:[%s10] sm:$0xff]
    %v62 = vld [vmem:[%s10 + $0x8] sm:$0xff]
    %v63 = vld [vmem:[%s10 + $0x10] sm:$0xff]
    %v64 = vld [vmem:[%s10 + $0x18] sm:$0xff]
    %v65 = vld [vmem:[%s11] sm:$0x1]
    %vm66 = vcmask 130048
    %v68 = vsel %vm66, %v56, 0
    %v71 = vsel %vm66, %v57, 0
    %73 = vmatpush.msra.mxu0 0.0
    %74 = vmatpush.msra.mxu0 0.0
    %75 = vmatpush.msra.mxu0 0.0
    %76 = vmatpush.msra.mxu0 0.0
    %77 = vmatpush.msra.mxu0 0.0
    %78 = vmatpush.msra.mxu0 0.0
    %79 = vmatpush.msra.mxu0 0.0
    %80 = vmatpush.msra.mxu0 0.0
    %81 = vmatpush.msra.mxu0 0.0
    %82 = vmatpush.msra.mxu0 0.0
    %83 = vmatpush.msra.mxu0 0.0
    %84 = vmatpush.msra.mxu0 0.0
    %85 = vmatpush.msra.mxu0 0.0
    %86 = vmatpush.msra.mxu0 0.0
    %87 = vmatpush.msra.mxu0 %v55
    %88 = vmatpush.msra.mxu0 %v54
    %89 = vmatmul.f32.gmra.mxu0 %v68
    %v90 = vpop.f32.mrf.mxu0
    %v91 = vadd.f32 0.0, %v90
    %92 = vmatmul.f32.gmra.mxu0 %v71
    %v93 = vpop.f32.mrf.mxu0
    %v94 = vadd.f32 0.0, %v93
    %95 = vdwg.mxu0
    %98 = vrot.lane.b32.xlu0 %v91, 32
    %v99 = vpop.permute.xlu0 %98
    %100 = vrot.lane.b32.xlu0 %v94, 32
    %v101 = vpop.permute.xlu0 %100
    %vm104 = vcmask 261120
    %v105 = vsel %vm104, %v54, %v99
    %v106 = vsel %vm104, %v55, %v101
    %v107 = vld [vmem:[%s4] sm:$0xff]
    %v108 = vld [vmem:[%s4 + $0x8] sm:$0xff]
    %v109 = vld [vmem:[%s4 + $0x10] sm:$0xff]
    %v110 = vld [vmem:[%s4 + $0x18] sm:$0xff]
    %v111 = vld [vmem:[%s4 + $0x20] sm:$0xff]
    %v112 = vld [vmem:[%s4 + $0x28] sm:$0xff]
    %v113 = vld [vmem:[%s4 + $0x30] sm:$0xff]
    %v114 = vld [vmem:[%s4 + $0x38] sm:$0xff]
    %v115 = vld [vmem:[%s5] sm:$0x1]
    %v117 = vperm.slane %v115, 0
    %vm119 = vcmask 523264
    %v121 = vsel %vm119, %v105, 0
    %v124 = vsel %vm119, %v106, 0
    %126 = vmatpush.msra.mxu0 0.0
    %127 = vmatpush.msra.mxu0 0.0
    %128 = vmatpush.msra.mxu0 0.0
    %129 = vmatpush.msra.mxu0 0.0
    %130 = vmatpush.msra.mxu0 0.0
    %131 = vmatpush.msra.mxu0 0.0
    %132 = vmatpush.msra.mxu0 0.0
    %133 = vmatpush.msra.mxu0 0.0
    %134 = vmatpush.msra.mxu0 %v114
    %135 = vmatpush.msra.mxu0 %v113
    %136 = vmatpush.msra.mxu0 %v112
    %137 = vmatpush.msra.mxu0 %v111
    %138 = vmatpush.msra.mxu0 %v110
    %139 = vmatpush.msra.mxu0 %v109
    %140 = vmatpush.msra.mxu0 %v108
    %141 = vmatpush.msra.mxu0 %v107
    %142 = vmatmul.f32.gmra.mxu0 %v121
    %v143 = vpop.f32.mrf.mxu0
    %v144 = vadd.f32 %v117, %v143
    %145 = vmatmul.f32.gmra.mxu0 %v124
    %v146 = vpop.f32.mrf.mxu0
    %v147 = vadd.f32 %v117, %v146
    %148 = vdwg.mxu0
    %v149 = vld [vmem:[%s6] sm:$0xff]
    %v150 = vld [vmem:[%s6 + $0x8] sm:$0xff]
    %v151 = vld [vmem:[%s6 + $0x10] sm:$0xff]
    %v152 = vld [vmem:[%s6 + $0x18] sm:$0xff]
    %v153 = vld [vmem:[%s7] sm:$0x1]
    %v155 = vperm.slane %v153, 0
    %v158 = vsel %vm104, %v144, 0
    %v161 = vsel %vm104, %v147, 0
    %163 = vmatpush.msra.mxu0 0.0
    %164 = vmatpush.msra.mxu0 0.0
    %165 = vmatpush.msra.mxu0 0.0
    %166 = vmatpush.msra.mxu0 0.0
    %167 = vmatpush.msra.mxu0 0.0
    %168 = vmatpush.msra.mxu0 0.0
    %169 = vmatpush.msra.mxu0 0.0
    %170 = vmatpush.msra.mxu0 0.0
    %171 = vmatpush.msra.mxu0 0.0
    %172 = vmatpush.msra.mxu0 0.0
    %173 = vmatpush.msra.mxu0 0.0
    %174 = vmatpush.msra.mxu0 0.0
    %175 = vmatpush.msra.mxu0 %v152
    %176 = vmatpush.msra.mxu0 %v151
    %177 = vmatpush.msra.mxu0 %v150
    %178 = vmatpush.msra.mxu0 %v149
    %179 = vmatmul.f32.gmra.mxu0 %v158
    %v180 = vpop.f32.mrf.mxu0
    %v181 = vadd.f32 %v155, %v180
    %182 = vmatmul.f32.gmra.mxu0 %v161
    %v183 = vpop.f32.mrf.mxu0
    %v184 = vadd.f32 %v155, %v183
    %185 = vdwg.mxu0
    %v186 = vmax.f32 %v181, 0.0
    %v187 = vmax.f32 %v184, 0.0
    %s188 = scalar_lea.vmem %s6, 32
    %v189 = vld [vmem:[%s188] sm:$0xff]
    %v190 = vld [vmem:[%s188 + $0x8] sm:$0xff]
    %v191 = vld [vmem:[%s188 + $0x10] sm:$0xff]
    %v192 = vld [vmem:[%s188 + $0x18] sm:$0xff]
    %s193 = scalar_lea.vmem %s7, 1
    %v194 = vld [vmem:[%s193] sm:$0x1]
    %v196 = vperm.slane %v194, 0
    %v199 = vsel %vm104, %v186, 0
    %v202 = vsel %vm104, %v187, 0
    %204 = vmatpush.msra.mxu0 0.0
    %205 = vmatpush.msra.mxu0 0.0
    %206 = vmatpush.msra.mxu0 0.0
    %207 = vmatpush.msra.mxu0 0.0
    %208 = vmatpush.msra.mxu0 0.0
    %209 = vmatpush.msra.mxu0 0.0
    %210 = vmatpush.msra.mxu0 0.0
    %211 = vmatpush.msra.mxu0 0.0
    %212 = vmatpush.msra.mxu0 0.0
    %213 = vmatpush.msra.mxu0 0.0
    %214 = vmatpush.msra.mxu0 0.0
    %215 = vmatpush.msra.mxu0 0.0
    %216 = vmatpush.msra.mxu0 %v192
    %217 = vmatpush.msra.mxu0 %v191
    %218 = vmatpush.msra.mxu0 %v190
    %219 = vmatpush.msra.mxu0 %v189
    %220 = vmatmul.f32.gmra.mxu0 %v199
    %v221 = vpop.f32.mrf.mxu0
    %v222 = vadd.f32 %v196, %v221
    %223 = vmatmul.f32.gmra.mxu0 %v202
    %v224 = vpop.f32.mrf.mxu0
    %v225 = vadd.f32 %v196, %v224
    %226 = vdwg.mxu0
    %v227 = vmax.f32 %v222, 0.0
    %v228 = vmax.f32 %v225, 0.0
    %v229 = vsel %vm104, %v227, 0.0
    %v230 = vsel %vm104, %v228, 0.0
    %v231 = vadd.f32 %v229, %v230
    %v232 = vrot.slane %v231, 4
    %v233 = vadd.f32 %v231, %v232
    %v234 = vrot.slane %v233, 2
    %v235 = vadd.f32 %v233, %v234
    %v236 = vrot.slane %v235, 1
    %v237 = vadd.f32 %v235, %v236
    %v238 = vrcp.pop 16.0
    %v239 = vmul.f32 16.0, %v238
    %v240 = vsub.f32 1.0, %v239
    %v241 = vmul.f32 %v238, %v240
    %v242 = vadd.f32 %v238, %v241
    %vm243 = vweird.f32 %v238
    %v244 = vsel %vm243, %v238, %v242
    %v245 = vmul.f32 %v237, %v244
    %v246 = vsub.f32 %v227, %v245
    %v247 = vsub.f32 %v228, %v245
    %v248 = vmul.f32 %v246, %v246
    %v249 = vmul.f32 %v247, %v247
    %v250 = vsel %vm104, %v248, 0.0
    %v251 = vsel %vm104, %v249, 0.0
    %v252 = vadd.f32 %v250, %v251
    %v253 = vrot.slane %v252, 4
    %v254 = vadd.f32 %v252, %v253
    %v255 = vrot.slane %v254, 2
    %v256 = vadd.f32 %v254, %v255
    %v257 = vrot.slane %v256, 1
    %v258 = vadd.f32 %v256, %v257
    %v259 = vmul.f32 %v258, %v244
    %v260 = vadd.f32 %v259, 1e-05
    %v261 = vrsqrt.pop %v260
    %v262 = vmul.f32 %v261, %v260
    %v263 = vmul.f32 %v262, %v261
    %v264 = vmul.f32 0.5, %v263
    %v265 = vsub.f32 1.5, %v264
    %v266 = vmul.f32 %v261, %v265
    %vm267 = vweird.f32 %v260
    %vm268 = vweird.f32 %v261
    %vm269 = vmor %vm267, %vm268
    %v270 = vsel %vm269, %v261, %v266
    %v271 = vmul.f32 %v246, %v270
    %v272 = vmul.f32 %v247, %v270
    %v273 = vld [vmem:[%s8] sm:$0x1]
    %v275 = vperm.slane %v273, 0
    %v277 = vmul.f32 %v271, %v275
    %v278 = vmul.f32 %v272, %v275
    %v279 = vld [vmem:[%s9] sm:$0x1]
    %v281 = vperm.slane %v279, 0
    %v283 = vadd.f32 %v277, %v281
    %v284 = vadd.f32 %v278, %v281
    %v286 = vperm.slane %v65, 0
    %v289 = vsel %vm104, %v283, 0
    %v292 = vsel %vm104, %v284, 0
    %294 = vmatpush.msra.mxu0 0.0
    %295 = vmatpush.msra.mxu0 0.0
    %296 = vmatpush.msra.mxu0 0.0
    %297 = vmatpush.msra.mxu0 0.0
    %298 = vmatpush.msra.mxu0 0.0
    %299 = vmatpush.msra.mxu0 0.0
    %300 = vmatpush.msra.mxu0 0.0
    %301 = vmatpush.msra.mxu0 0.0
    %302 = vmatpush.msra.mxu0 0.0
    %303 = vmatpush.msra.mxu0 0.0
    %304 = vmatpush.msra.mxu0 0.0
    %305 = vmatpush.msra.mxu0 0.0
    %306 = vmatpush.msra.mxu0 %v64
    %307 = vmatpush.msra.mxu0 %v63
    %308 = vmatpush.msra.mxu0 %v62
    %309 = vmatpush.msra.mxu0 %v61
    %310 = vmatmul.f32.gmra.mxu0 %v289
    %v311 = vpop.f32.mrf.mxu0
    %v312 = vadd.f32 %v286, %v311
    %313 = vmatmul.f32.gmra.mxu0 %v292
    %v314 = vpop.f32.mrf.mxu0
    %v315 = vadd.f32 %v286, %v314
    %316 = vdwg.mxu0
    %vm317 = vcmp.gt.f32.partialorder %v59, 0.0
    %vm318 = vcmp.gt.f32.partialorder %v60, 0.0
    %320 = vset.pattern.permute.xlu0 32
    %321 = vperm.xlu0 %320, %v312
    %v322 = vpop.permute.xlu0 %321
    %325 = vset.pattern.permute.xlu0 32
    %326 = vperm.xlu0 %325, %v315
    %v327 = vpop.permute.xlu0 %326
    %v329 = vsel %vm317, %v322, -1e+30
    %v330 = vsel %vm318, %v327, -1e+30
    %vm331 = vcmask 15360
    %v332 = vsel %vm331, %v329, -inf
    %v333 = vsel %vm331, %v330, -inf
    %v334 = vmax.f32 %v332, %v333
    %v335 = vrot.slane %v334, 4
    %v336 = vmax.f32 %v334, %v335
    %v337 = vrot.slane %v336, 2
    %v338 = vmax.f32 %v336, %v337
    %v339 = vrot.slane %v338, 1
    %v340 = vmax.f32 %v338, %v339
    %v341 = vsel %vm317, %v340, 0.0
    %v342 = vsel %vm318, %v340, 0.0
    %v343 = vsel %vm331, %v341, 0.0
    %344 = vadd.xlane.f32.xlu0 %v343
    %v345 = vpop.xlane.xlu0 %344
    %v346 = vsel %vm331, %v342, 0.0
    %347 = vadd.xlane.f32.xlu0 %v346
    %v348 = vpop.xlane.xlu0 %347
    %v349 = vsub.f32 %v312, %v345
    %v350 = vsub.f32 %v315, %v348
    %v351 = vmul.f32 %v349, 1.442695
    %v352 = vpow.pop %v351
    %v353 = vmul.f32 %v350, 1.442695
    %v354 = vpow.pop %v353
    %356 = vset.pattern.permute.xlu0 32
    %357 = vperm.xlu0 %356, %v352
    %v358 = vpop.permute.xlu0 %357
    %361 = vset.pattern.permute.xlu0 32
    %362 = vperm.xlu0 %361, %v354
    %v363 = vpop.permute.xlu0 %362
    %v365 = vmul.f32 %v358, %v312
    %v366 = vmul.f32 %v363, %v315
    %v367 = vsel %vm104, %v365, %v352
    %v368 = vsel %vm104, %v366, %v354
    %v370 = vsel %vm66, %v58, 0
    %372 = vmatpush.msra.mxu0 0.0
    %373 = vmatpush.msra.mxu0 0.0
    %374 = vmatpush.msra.mxu0 0.0
    %375 = vmatpush.msra.mxu0 0.0
    %376 = vmatpush.msra.mxu0 0.0
    %377 = vmatpush.msra.mxu0 0.0
    %378 = vmatpush.msra.mxu0 0.0
    %379 = vmatpush.msra.mxu0 0.0
    %380 = vmatpush.msra.mxu0 0.0
    %381 = vmatpush.msra.mxu0 0.0
    %382 = vmatpush.msra.mxu0 0.0
    %383 = vmatpush.msra.mxu0 0.0
    %384 = vmatpush.msra.mxu0 0.0
    %385 = vmatpush.msra.mxu0 0.0
    %386 = vmatpush.msra.mxu0 %v368
    %387 = vmatpush.msra.mxu0 %v367
    %388 = vmatmul.f32.gmra.mxu0 %v370
    %v389 = vpop.f32.mrf.mxu0
    %v390 = vadd.f32 0.0, %v389
    %391 = vdwg.mxu0
    %v392 = vmax.f32 %v390, 1e-30
    %v393 = vrcp.pop %v392
    %395 = vset.pattern.permute.xlu0 32
    %396 = vperm.xlu0 %395, %v393
    %v397 = vpop.permute.xlu0 %396
    %v399 = vmul.f32 %v390, %v397
    %400 = vmatpush.msra.mxu0 0.0
    %401 = vmatpush.msra.mxu0 0.0
    %402 = vmatpush.msra.mxu0 0.0
    %403 = vmatpush.msra.mxu0 0.0
    %404 = vmatpush.msra.mxu0 0.0
    %405 = vmatpush.msra.mxu0 0.0
    %406 = vmatpush.msra.mxu0 0.0
    %407 = vmatpush.msra.mxu0 0.0
    %408 = vmatpush.msra.mxu0 0.0
    %409 = vmatpush.msra.mxu0 0.0
    %410 = vmatpush.msra.mxu0 0.0
    %411 = vmatpush.msra.mxu0 0.0
    %412 = vmatpush.msra.mxu0 0.0
    %413 = vmatpush.msra.mxu0 0.0
    %414 = vmatpush.msra.mxu0 %v284
    %415 = vmatpush.msra.mxu0 %v283
    %416 = vmatmul.f32.gmra.mxu0 %v68
    %v417 = vpop.f32.mrf.mxu0
    %v418 = vadd.f32 0.0, %v417
    %419 = vmatmul.f32.gmra.mxu0 %v71
    %v420 = vpop.f32.mrf.mxu0
    %v421 = vadd.f32 0.0, %v420
    %422 = vdwg.mxu0
    %425 = vrot.lane.b32.xlu0 %v418, 32
    %v426 = vpop.permute.xlu0 %425
    %427 = vrot.lane.b32.xlu0 %v421, 32
    %v428 = vpop.permute.xlu0 %427
    %v431 = vsel %vm104, %v283, %v426
    %v432 = vsel %vm104, %v284, %v428
    %s433 = scalar_lea.vmem %s4, 64
    %v434 = vld [vmem:[%s433] sm:$0xff]
    %v435 = vld [vmem:[%s433 + $0x8] sm:$0xff]
    %v436 = vld [vmem:[%s433 + $0x10] sm:$0xff]
    %v437 = vld [vmem:[%s433 + $0x18] sm:$0xff]
    %v438 = vld [vmem:[%s433 + $0x20] sm:$0xff]
    %v439 = vld [vmem:[%s433 + $0x28] sm:$0xff]
    %v440 = vld [vmem:[%s433 + $0x30] sm:$0xff]
    %v441 = vld [vmem:[%s433 + $0x38] sm:$0xff]
    %s442 = scalar_lea.vmem %s5, 1
    %v443 = vld [vmem:[%s442] sm:$0x1]
    %v445 = vperm.slane %v443, 0
    %v448 = vsel %vm119, %v431, 0
    %v451 = vsel %vm119, %v432, 0
    %453 = vmatpush.msra.mxu0 0.0
    %454 = vmatpush.msra.mxu0 0.0
    %455 = vmatpush.msra.mxu0 0.0
    %456 = vmatpush.msra.mxu0 0.0
    %457 = vmatpush.msra.mxu0 0.0
    %458 = vmatpush.msra.mxu0 0.0
    %459 = vmatpush.msra.mxu0 0.0
    %460 = vmatpush.msra.mxu0 0.0
    %461 = vmatpush.msra.mxu0 %v441
    %462 = vmatpush.msra.mxu0 %v440
    %463 = vmatpush.msra.mxu0 %v439
    %464 = vmatpush.msra.mxu0 %v438
    %465 = vmatpush.msra.mxu0 %v437
    %466 = vmatpush.msra.mxu0 %v436
    %467 = vmatpush.msra.mxu0 %v435
    %468 = vmatpush.msra.mxu0 %v434
    %469 = vmatmul.f32.gmra.mxu0 %v448
    %v470 = vpop.f32.mrf.mxu0
    %v471 = vadd.f32 %v445, %v470
    %472 = vmatmul.f32.gmra.mxu0 %v451
    %v473 = vpop.f32.mrf.mxu0
    %v474 = vadd.f32 %v445, %v473
    %475 = vdwg.mxu0
    %s476 = scalar_lea.vmem %s6, 64
    %v477 = vld [vmem:[%s476] sm:$0xff]
    %v478 = vld [vmem:[%s476 + $0x8] sm:$0xff]
    %v479 = vld [vmem:[%s476 + $0x10] sm:$0xff]
    %v480 = vld [vmem:[%s476 + $0x18] sm:$0xff]
    %s481 = scalar_lea.vmem %s7, 2
    %v482 = vld [vmem:[%s481] sm:$0x1]
    %v484 = vperm.slane %v482, 0
    %v487 = vsel %vm104, %v471, 0
    %v490 = vsel %vm104, %v474, 0
    %492 = vmatpush.msra.mxu0 0.0
    %493 = vmatpush.msra.mxu0 0.0
    %494 = vmatpush.msra.mxu0 0.0
    %495 = vmatpush.msra.mxu0 0.0
    %496 = vmatpush.msra.mxu0 0.0
    %497 = vmatpush.msra.mxu0 0.0
    %498 = vmatpush.msra.mxu0 0.0
    %499 = vmatpush.msra.mxu0 0.0
    %500 = vmatpush.msra.mxu0 0.0
    %501 = vmatpush.msra.mxu0 0.0
    %502 = vmatpush.msra.mxu0 0.0
    %503 = vmatpush.msra.mxu0 0.0
    %504 = vmatpush.msra.mxu0 %v480
    %505 = vmatpush.msra.mxu0 %v479
    %506 = vmatpush.msra.mxu0 %v478
    %507 = vmatpush.msra.mxu0 %v477
    %508 = vmatmul.f32.gmra.mxu0 %v487
    %v509 = vpop.f32.mrf.mxu0
    %v510 = vadd.f32 %v484, %v509
    %511 = vmatmul.f32.gmra.mxu0 %v490
    %v512 = vpop.f32.mrf.mxu0
    %v513 = vadd.f32 %v484, %v512
    %514 = vdwg.mxu0
    %v515 = vmax.f32 %v510, 0.0
    %v516 = vmax.f32 %v513, 0.0
    %s517 = scalar_lea.vmem %s6, 96
    %v518 = vld [vmem:[%s517] sm:$0xff]
    %v519 = vld [vmem:[%s517 + $0x8] sm:$0xff]
    %v520 = vld [vmem:[%s517 + $0x10] sm:$0xff]
    %v521 = vld [vmem:[%s517 + $0x18] sm:$0xff]
    %s522 = scalar_lea.vmem %s7, 3
    %v523 = vld [vmem:[%s522] sm:$0x1]
    %v525 = vperm.slane %v523, 0
    %v528 = vsel %vm104, %v515, 0
    %v531 = vsel %vm104, %v516, 0
    %533 = vmatpush.msra.mxu0 0.0
    %534 = vmatpush.msra.mxu0 0.0
    %535 = vmatpush.msra.mxu0 0.0
    %536 = vmatpush.msra.mxu0 0.0
    %537 = vmatpush.msra.mxu0 0.0
    %538 = vmatpush.msra.mxu0 0.0
    %539 = vmatpush.msra.mxu0 0.0
    %540 = vmatpush.msra.mxu0 0.0
    %541 = vmatpush.msra.mxu0 0.0
    %542 = vmatpush.msra.mxu0 0.0
    %543 = vmatpush.msra.mxu0 0.0
    %544 = vmatpush.msra.mxu0 0.0
    %545 = vmatpush.msra.mxu0 %v521
    %546 = vmatpush.msra.mxu0 %v520
    %547 = vmatpush.msra.mxu0 %v519
    %548 = vmatpush.msra.mxu0 %v518
    %549 = vmatmul.f32.gmra.mxu0 %v528
    %v550 = vpop.f32.mrf.mxu0
    %v551 = vadd.f32 %v525, %v550
    %552 = vmatmul.f32.gmra.mxu0 %v531
    %v553 = vpop.f32.mrf.mxu0
    %v554 = vadd.f32 %v525, %v553
    %555 = vdwg.mxu0
    %v556 = vmax.f32 %v551, 0.0
    %v557 = vmax.f32 %v554, 0.0
    %v558 = vsel %vm104, %v556, 0.0
    %v559 = vsel %vm104, %v557, 0.0
    %v560 = vadd.f32 %v558, %v559
    %v561 = vrot.slane %v560, 4
    %v562 = vadd.f32 %v560, %v561
    %v563 = vrot.slane %v562, 2
    %v564 = vadd.f32 %v562, %v563
    %v565 = vrot.slane %v564, 1
    %v566 = vadd.f32 %v564, %v565
    %v567 = vmul.f32 %v566, %v244
    %v568 = vsub.f32 %v556, %v567
    %v569 = vsub.f32 %v557, %v567
    %v570 = vmul.f32 %v568, %v568
    %v571 = vmul.f32 %v569, %v569
    %v572 = vsel %vm104, %v570, 0.0
    %v573 = vsel %vm104, %v571, 0.0
    %v574 = vadd.f32 %v572, %v573
    %v575 = vrot.slane %v574, 4
    %v576 = vadd.f32 %v574, %v575
    %v577 = vrot.slane %v576, 2
    %v578 = vadd.f32 %v576, %v577
    %v579 = vrot.slane %v578, 1
    %v580 = vadd.f32 %v578, %v579
    %v581 = vmul.f32 %v580, %v244
    %v582 = vadd.f32 %v581, 1e-05
    %v583 = vrsqrt.pop %v582
    %v584 = vmul.f32 %v583, %v582
    %v585 = vmul.f32 %v584, %v583
    %v586 = vmul.f32 0.5, %v585
    %v587 = vsub.f32 1.5, %v586
    %v588 = vmul.f32 %v583, %v587
    %vm589 = vweird.f32 %v582
    %vm590 = vweird.f32 %v583
    %vm591 = vmor %vm589, %vm590
    %v592 = vsel %vm591, %v583, %v588
    %v593 = vmul.f32 %v568, %v592
    %v594 = vmul.f32 %v569, %v592
    %s595 = scalar_lea.vmem %s8, 1
    %v596 = vld [vmem:[%s595] sm:$0x1]
    %v598 = vperm.slane %v596, 0
    %v600 = vmul.f32 %v593, %v598
    %v601 = vmul.f32 %v594, %v598
    %s602 = scalar_lea.vmem %s9, 1
    %v603 = vld [vmem:[%s602] sm:$0x1]
    %v605 = vperm.slane %v603, 0
    %v607 = vadd.f32 %v600, %v605
    %v608 = vadd.f32 %v601, %v605
    %v610 = vsel %vm104, %v607, 0
    %v613 = vsel %vm104, %v608, 0
    %615 = vmatpush.msra.mxu0 0.0
    %616 = vmatpush.msra.mxu0 0.0
    %617 = vmatpush.msra.mxu0 0.0
    %618 = vmatpush.msra.mxu0 0.0
    %619 = vmatpush.msra.mxu0 0.0
    %620 = vmatpush.msra.mxu0 0.0
    %621 = vmatpush.msra.mxu0 0.0
    %622 = vmatpush.msra.mxu0 0.0
    %623 = vmatpush.msra.mxu0 0.0
    %624 = vmatpush.msra.mxu0 0.0
    %625 = vmatpush.msra.mxu0 0.0
    %626 = vmatpush.msra.mxu0 0.0
    %627 = vmatpush.msra.mxu0 %v64
    %628 = vmatpush.msra.mxu0 %v63
    %629 = vmatpush.msra.mxu0 %v62
    %630 = vmatpush.msra.mxu0 %v61
    %631 = vmatmul.f32.gmra.mxu0 %v610
    %v632 = vpop.f32.mrf.mxu0
    %v633 = vadd.f32 %v286, %v632
    %634 = vmatmul.f32.gmra.mxu0 %v613
    %v635 = vpop.f32.mrf.mxu0
    %v636 = vadd.f32 %v286, %v635
    %637 = vdwg.mxu0
    %639 = vset.pattern.permute.xlu0 32
    %640 = vperm.xlu0 %639, %v633
    %v641 = vpop.permute.xlu0 %640
    %644 = vset.pattern.permute.xlu0 32
    %645 = vperm.xlu0 %644, %v636
    %v646 = vpop.permute.xlu0 %645
    %v648 = vsel %vm317, %v641, -1e+30
    %v649 = vsel %vm318, %v646, -1e+30
    %v650 = vsel %vm331, %v648, -inf
    %v651 = vsel %vm331, %v649, -inf
    %v652 = vmax.f32 %v650, %v651
    %v653 = vrot.slane %v652, 4
    %v654 = vmax.f32 %v652, %v653
    %v655 = vrot.slane %v654, 2
    %v656 = vmax.f32 %v654, %v655
    %v657 = vrot.slane %v656, 1
    %v658 = vmax.f32 %v656, %v657
    %v659 = vsel %vm317, %v658, 0.0
    %v660 = vsel %vm318, %v658, 0.0
    %v661 = vsel %vm331, %v659, 0.0
    %662 = vadd.xlane.f32.xlu0 %v661
    %v663 = vpop.xlane.xlu0 %662
    %v664 = vsel %vm331, %v660, 0.0
    %665 = vadd.xlane.f32.xlu0 %v664
    %v666 = vpop.xlane.xlu0 %665
    %v667 = vsub.f32 %v633, %v663
    %v668 = vsub.f32 %v636, %v666
    %v669 = vmul.f32 %v667, 1.442695
    %v670 = vpow.pop %v669
    %v671 = vmul.f32 %v668, 1.442695
    %v672 = vpow.pop %v671
    %674 = vset.pattern.permute.xlu0 32
    %675 = vperm.xlu0 %674, %v670
    %v676 = vpop.permute.xlu0 %675
    %679 = vset.pattern.permute.xlu0 32
    %680 = vperm.xlu0 %679, %v672
    %v681 = vpop.permute.xlu0 %680
    %v683 = vmul.f32 %v676, %v633
    %v684 = vmul.f32 %v681, %v636
    %v685 = vsel %vm104, %v683, %v670
    %v686 = vsel %vm104, %v684, %v672
    %687 = vmatpush.msra.mxu0 0.0
    %688 = vmatpush.msra.mxu0 0.0
    %689 = vmatpush.msra.mxu0 0.0
    %690 = vmatpush.msra.mxu0 0.0
    %691 = vmatpush.msra.mxu0 0.0
    %692 = vmatpush.msra.mxu0 0.0
    %693 = vmatpush.msra.mxu0 0.0
    %694 = vmatpush.msra.mxu0 0.0
    %695 = vmatpush.msra.mxu0 0.0
    %696 = vmatpush.msra.mxu0 0.0
    %697 = vmatpush.msra.mxu0 0.0
    %698 = vmatpush.msra.mxu0 0.0
    %699 = vmatpush.msra.mxu0 0.0
    %700 = vmatpush.msra.mxu0 0.0
    %701 = vmatpush.msra.mxu0 %v686
    %702 = vmatpush.msra.mxu0 %v685
    %703 = vmatmul.f32.gmra.mxu0 %v370
    %v704 = vpop.f32.mrf.mxu0
    %v705 = vadd.f32 0.0, %v704
    %706 = vdwg.mxu0
    %v707 = vmax.f32 %v705, 1e-30
    %v708 = vrcp.pop %v707
    %710 = vset.pattern.permute.xlu0 32
    %711 = vperm.xlu0 %710, %v708
    %v712 = vpop.permute.xlu0 %711
    %v714 = vmul.f32 %v705, %v712
    %715 = vmatpush.msra.mxu0 0.0
    %716 = vmatpush.msra.mxu0 0.0
    %717 = vmatpush.msra.mxu0 0.0
    %718 = vmatpush.msra.mxu0 0.0
    %719 = vmatpush.msra.mxu0 0.0
    %720 = vmatpush.msra.mxu0 0.0
    %721 = vmatpush.msra.mxu0 0.0
    %722 = vmatpush.msra.mxu0 0.0
    %723 = vmatpush.msra.mxu0 0.0
    %724 = vmatpush.msra.mxu0 0.0
    %725 = vmatpush.msra.mxu0 0.0
    %726 = vmatpush.msra.mxu0 0.0
    %727 = vmatpush.msra.mxu0 0.0
    %728 = vmatpush.msra.mxu0 0.0
    %729 = vmatpush.msra.mxu0 %v608
    %730 = vmatpush.msra.mxu0 %v607
    %731 = vmatmul.f32.gmra.mxu0 %v68
    %v732 = vpop.f32.mrf.mxu0
    %v733 = vadd.f32 0.0, %v732
    %734 = vmatmul.f32.gmra.mxu0 %v71
    %v735 = vpop.f32.mrf.mxu0
    %v736 = vadd.f32 0.0, %v735
    %737 = vdwg.mxu0
    %740 = vrot.lane.b32.xlu0 %v733, 32
    %v741 = vpop.permute.xlu0 %740
    %742 = vrot.lane.b32.xlu0 %v736, 32
    %v743 = vpop.permute.xlu0 %742
    %v746 = vsel %vm104, %v607, %v741
    %v747 = vsel %vm104, %v608, %v743
    %s748 = scalar_lea.vmem %s4, 128
    %v749 = vld [vmem:[%s748] sm:$0xff]
    %v750 = vld [vmem:[%s748 + $0x8] sm:$0xff]
    %v751 = vld [vmem:[%s748 + $0x10] sm:$0xff]
    %v752 = vld [vmem:[%s748 + $0x18] sm:$0xff]
    %v753 = vld [vmem:[%s748 + $0x20] sm:$0xff]
    %v754 = vld [vmem:[%s748 + $0x28] sm:$0xff]
    %v755 = vld [vmem:[%s748 + $0x30] sm:$0xff]
    %v756 = vld [vmem:[%s748 + $0x38] sm:$0xff]
    %s757 = scalar_lea.vmem %s5, 2
    %v758 = vld [vmem:[%s757] sm:$0x1]
    %v760 = vperm.slane %v758, 0
    %v763 = vsel %vm119, %v746, 0
    %v766 = vsel %vm119, %v747, 0
    %768 = vmatpush.msra.mxu0 0.0
    %769 = vmatpush.msra.mxu0 0.0
    %770 = vmatpush.msra.mxu0 0.0
    %771 = vmatpush.msra.mxu0 0.0
    %772 = vmatpush.msra.mxu0 0.0
    %773 = vmatpush.msra.mxu0 0.0
    %774 = vmatpush.msra.mxu0 0.0
    %775 = vmatpush.msra.mxu0 0.0
    %776 = vmatpush.msra.mxu0 %v756
    %777 = vmatpush.msra.mxu0 %v755
    %778 = vmatpush.msra.mxu0 %v754
    %779 = vmatpush.msra.mxu0 %v753
    %780 = vmatpush.msra.mxu0 %v752
    %781 = vmatpush.msra.mxu0 %v751
    %782 = vmatpush.msra.mxu0 %v750
    %783 = vmatpush.msra.mxu0 %v749
    %784 = vmatmul.f32.gmra.mxu0 %v763
    %v785 = vpop.f32.mrf.mxu0
    %v786 = vadd.f32 %v760, %v785
    %787 = vmatmul.f32.gmra.mxu0 %v766
    %v788 = vpop.f32.mrf.mxu0
    %v789 = vadd.f32 %v760, %v788
    %790 = vdwg.mxu0
    %s791 = scalar_lea.vmem %s6, 128
    %v792 = vld [vmem:[%s791] sm:$0xff]
    %v793 = vld [vmem:[%s791 + $0x8] sm:$0xff]
    %v794 = vld [vmem:[%s791 + $0x10] sm:$0xff]
    %v795 = vld [vmem:[%s791 + $0x18] sm:$0xff]
    %s796 = scalar_lea.vmem %s7, 4
    %v797 = vld [vmem:[%s796] sm:$0x1]
    %v799 = vperm.slane %v797, 0
    %v802 = vsel %vm104, %v786, 0
    %v805 = vsel %vm104, %v789, 0
    %807 = vmatpush.msra.mxu0 0.0
    %808 = vmatpush.msra.mxu0 0.0
    %809 = vmatpush.msra.mxu0 0.0
    %810 = vmatpush.msra.mxu0 0.0
    %811 = vmatpush.msra.mxu0 0.0
    %812 = vmatpush.msra.mxu0 0.0
    %813 = vmatpush.msra.mxu0 0.0
    %814 = vmatpush.msra.mxu0 0.0
    %815 = vmatpush.msra.mxu0 0.0
    %816 = vmatpush.msra.mxu0 0.0
    %817 = vmatpush.msra.mxu0 0.0
    %818 = vmatpush.msra.mxu0 0.0
    %819 = vmatpush.msra.mxu0 %v795
    %820 = vmatpush.msra.mxu0 %v794
    %821 = vmatpush.msra.mxu0 %v793
    %822 = vmatpush.msra.mxu0 %v792
    %823 = vmatmul.f32.gmra.mxu0 %v802
    %v824 = vpop.f32.mrf.mxu0
    %v825 = vadd.f32 %v799, %v824
    %826 = vmatmul.f32.gmra.mxu0 %v805
    %v827 = vpop.f32.mrf.mxu0
    %v828 = vadd.f32 %v799, %v827
    %829 = vdwg.mxu0
    %v830 = vmax.f32 %v825, 0.0
    %v831 = vmax.f32 %v828, 0.0
    %s832 = scalar_lea.vmem %s6, 160
    %v833 = vld [vmem:[%s832] sm:$0xff]
    %v834 = vld [vmem:[%s832 + $0x8] sm:$0xff]
    %v835 = vld [vmem:[%s832 + $0x10] sm:$0xff]
    %v836 = vld [vmem:[%s832 + $0x18] sm:$0xff]
    %s837 = scalar_lea.vmem %s7, 5
    %v838 = vld [vmem:[%s837] sm:$0x1]
    %v840 = vperm.slane %v838, 0
    %v843 = vsel %vm104, %v830, 0
    %v846 = vsel %vm104, %v831, 0
    %848 = vmatpush.msra.mxu0 0.0
    %849 = vmatpush.msra.mxu0 0.0
    %850 = vmatpush.msra.mxu0 0.0
    %851 = vmatpush.msra.mxu0 0.0
    %852 = vmatpush.msra.mxu0 0.0
    %853 = vmatpush.msra.mxu0 0.0
    %854 = vmatpush.msra.mxu0 0.0
    %855 = vmatpush.msra.mxu0 0.0
    %856 = vmatpush.msra.mxu0 0.0
    %857 = vmatpush.msra.mxu0 0.0
    %858 = vmatpush.msra.mxu0 0.0
    %859 = vmatpush.msra.mxu0 0.0
    %860 = vmatpush.msra.mxu0 %v836
    %861 = vmatpush.msra.mxu0 %v835
    %862 = vmatpush.msra.mxu0 %v834
    %863 = vmatpush.msra.mxu0 %v833
    %864 = vmatmul.f32.gmra.mxu0 %v843
    %v865 = vpop.f32.mrf.mxu0
    %v866 = vadd.f32 %v840, %v865
    %867 = vmatmul.f32.gmra.mxu0 %v846
    %v868 = vpop.f32.mrf.mxu0
    %v869 = vadd.f32 %v840, %v868
    %870 = vdwg.mxu0
    %v871 = vmax.f32 %v866, 0.0
    %v872 = vmax.f32 %v869, 0.0
    %v873 = vsel %vm104, %v871, 0.0
    %v874 = vsel %vm104, %v872, 0.0
    %v875 = vadd.f32 %v873, %v874
    %v876 = vrot.slane %v875, 4
    %v877 = vadd.f32 %v875, %v876
    %v878 = vrot.slane %v877, 2
    %v879 = vadd.f32 %v877, %v878
    %v880 = vrot.slane %v879, 1
    %v881 = vadd.f32 %v879, %v880
    %v882 = vmul.f32 %v881, %v244
    %v883 = vsub.f32 %v871, %v882
    %v884 = vsub.f32 %v872, %v882
    %v885 = vmul.f32 %v883, %v883
    %v886 = vmul.f32 %v884, %v884
    %v887 = vsel %vm104, %v885, 0.0
    %v888 = vsel %vm104, %v886, 0.0
    %v889 = vadd.f32 %v887, %v888
    %v890 = vrot.slane %v889, 4
    %v891 = vadd.f32 %v889, %v890
    %v892 = vrot.slane %v891, 2
    %v893 = vadd.f32 %v891, %v892
    %v894 = vrot.slane %v893, 1
    %v895 = vadd.f32 %v893, %v894
    %v896 = vmul.f32 %v895, %v244
    %v897 = vadd.f32 %v896, 1e-05
    %v898 = vrsqrt.pop %v897
    %v899 = vmul.f32 %v898, %v897
    %v900 = vmul.f32 %v899, %v898
    %v901 = vmul.f32 0.5, %v900
    %v902 = vsub.f32 1.5, %v901
    %v903 = vmul.f32 %v898, %v902
    %vm904 = vweird.f32 %v897
    %vm905 = vweird.f32 %v898
    %vm906 = vmor %vm904, %vm905
    %v907 = vsel %vm906, %v898, %v903
    %v908 = vmul.f32 %v883, %v907
    %v909 = vmul.f32 %v884, %v907
    %s910 = scalar_lea.vmem %s8, 2
    %v911 = vld [vmem:[%s910] sm:$0x1]
    %v913 = vperm.slane %v911, 0
    %v915 = vmul.f32 %v908, %v913
    %v916 = vmul.f32 %v909, %v913
    %s917 = scalar_lea.vmem %s9, 2
    %v918 = vld [vmem:[%s917] sm:$0x1]
    %v920 = vperm.slane %v918, 0
    %v922 = vadd.f32 %v915, %v920
    %v923 = vadd.f32 %v916, %v920
    %v925 = vsel %vm104, %v922, 0
    %v928 = vsel %vm104, %v923, 0
    %930 = vmatpush.msra.mxu0 0.0
    %931 = vmatpush.msra.mxu0 0.0
    %932 = vmatpush.msra.mxu0 0.0
    %933 = vmatpush.msra.mxu0 0.0
    %934 = vmatpush.msra.mxu0 0.0
    %935 = vmatpush.msra.mxu0 0.0
    %936 = vmatpush.msra.mxu0 0.0
    %937 = vmatpush.msra.mxu0 0.0
    %938 = vmatpush.msra.mxu0 0.0
    %939 = vmatpush.msra.mxu0 0.0
    %940 = vmatpush.msra.mxu0 0.0
    %941 = vmatpush.msra.mxu0 0.0
    %942 = vmatpush.msra.mxu0 %v64
    %943 = vmatpush.msra.mxu0 %v63
    %944 = vmatpush.msra.mxu0 %v62
    %945 = vmatpush.msra.mxu0 %v61
    %946 = vmatmul.f32.gmra.mxu0 %v925
    %v947 = vpop.f32.mrf.mxu0
    %v948 = vadd.f32 %v286, %v947
    %949 = vmatmul.f32.gmra.mxu0 %v928
    %v950 = vpop.f32.mrf.mxu0
    %v951 = vadd.f32 %v286, %v950
    %952 = vdwg.mxu0
    %954 = vset.pattern.permute.xlu0 32
    %955 = vperm.xlu0 %954, %v948
    %v956 = vpop.permute.xlu0 %955
    %959 = vset.pattern.permute.xlu0 32
    %960 = vperm.xlu0 %959, %v951
    %v961 = vpop.permute.xlu0 %960
    %v963 = vsel %vm317, %v956, -1e+30
    %v964 = vsel %vm318, %v961, -1e+30
    %v965 = vsel %vm331, %v963, -inf
    %v966 = vsel %vm331, %v964, -inf
    %v967 = vmax.f32 %v965, %v966
    %v968 = vrot.slane %v967, 4
    %v969 = vmax.f32 %v967, %v968
    %v970 = vrot.slane %v969, 2
    %v971 = vmax.f32 %v969, %v970
    %v972 = vrot.slane %v971, 1
    %v973 = vmax.f32 %v971, %v972
    %v974 = vsel %vm317, %v973, 0.0
    %v975 = vsel %vm318, %v973, 0.0
    %v976 = vsel %vm331, %v974, 0.0
    %977 = vadd.xlane.f32.xlu0 %v976
    %v978 = vpop.xlane.xlu0 %977
    %v979 = vsel %vm331, %v975, 0.0
    %980 = vadd.xlane.f32.xlu0 %v979
    %v981 = vpop.xlane.xlu0 %980
    %v982 = vsub.f32 %v948, %v978
    %v983 = vsub.f32 %v951, %v981
    %v984 = vmul.f32 %v982, 1.442695
    %v985 = vpow.pop %v984
    %v986 = vmul.f32 %v983, 1.442695
    %v987 = vpow.pop %v986
    %989 = vset.pattern.permute.xlu0 32
    %990 = vperm.xlu0 %989, %v985
    %v991 = vpop.permute.xlu0 %990
    %994 = vset.pattern.permute.xlu0 32
    %995 = vperm.xlu0 %994, %v987
    %v996 = vpop.permute.xlu0 %995
    %v998 = vmul.f32 %v991, %v948
    %v999 = vmul.f32 %v996, %v951
    %v1000 = vsel %vm104, %v998, %v985
    %v1001 = vsel %vm104, %v999, %v987
    %1002 = vmatpush.msra.mxu0 0.0
    %1003 = vmatpush.msra.mxu0 0.0
    %1004 = vmatpush.msra.mxu0 0.0
    %1005 = vmatpush.msra.mxu0 0.0
    %1006 = vmatpush.msra.mxu0 0.0
    %1007 = vmatpush.msra.mxu0 0.0
    %1008 = vmatpush.msra.mxu0 0.0
    %1009 = vmatpush.msra.mxu0 0.0
    %1010 = vmatpush.msra.mxu0 0.0
    %1011 = vmatpush.msra.mxu0 0.0
    %1012 = vmatpush.msra.mxu0 0.0
    %1013 = vmatpush.msra.mxu0 0.0
    %1014 = vmatpush.msra.mxu0 0.0
    %1015 = vmatpush.msra.mxu0 0.0
    %1016 = vmatpush.msra.mxu0 %v1001
    %1017 = vmatpush.msra.mxu0 %v1000
    %1018 = vmatmul.f32.gmra.mxu0 %v370
    %v1019 = vpop.f32.mrf.mxu0
    %v1020 = vadd.f32 0.0, %v1019
    %1021 = vdwg.mxu0
    %v1022 = vmax.f32 %v1020, 1e-30
    %v1023 = vrcp.pop %v1022
    %1025 = vset.pattern.permute.xlu0 32
    %1026 = vperm.xlu0 %1025, %v1023
    %v1027 = vpop.permute.xlu0 %1026
    %v1029 = vmul.f32 %v1020, %v1027
    %1030 = vmatpush.msra.mxu0 0.0
    %1031 = vmatpush.msra.mxu0 0.0
    %1032 = vmatpush.msra.mxu0 0.0
    %1033 = vmatpush.msra.mxu0 0.0
    %1034 = vmatpush.msra.mxu0 0.0
    %1035 = vmatpush.msra.mxu0 0.0
    %1036 = vmatpush.msra.mxu0 0.0
    %1037 = vmatpush.msra.mxu0 0.0
    %1038 = vmatpush.msra.mxu0 0.0
    %1039 = vmatpush.msra.mxu0 0.0
    %1040 = vmatpush.msra.mxu0 0.0
    %1041 = vmatpush.msra.mxu0 0.0
    %1042 = vmatpush.msra.mxu0 0.0
    %1043 = vmatpush.msra.mxu0 0.0
    %1044 = vmatpush.msra.mxu0 %v923
    %1045 = vmatpush.msra.mxu0 %v922
    %1046 = vmatmul.f32.gmra.mxu0 %v68
    %v1047 = vpop.f32.mrf.mxu0
    %v1048 = vadd.f32 0.0, %v1047
    %1049 = vmatmul.f32.gmra.mxu0 %v71
    %v1050 = vpop.f32.mrf.mxu0
    %v1051 = vadd.f32 0.0, %v1050
    %1052 = vdwg.mxu0
    %1055 = vrot.lane.b32.xlu0 %v1048, 32
    %v1056 = vpop.permute.xlu0 %1055
    %1057 = vrot.lane.b32.xlu0 %v1051, 32
    %v1058 = vpop.permute.xlu0 %1057
    %v1061 = vsel %vm104, %v922, %v1056
    %v1062 = vsel %vm104, %v923, %v1058
    %s1063 = scalar_lea.vmem %s4, 192
    %v1064 = vld [vmem:[%s1063] sm:$0xff]
    %v1065 = vld [vmem:[%s1063 + $0x8] sm:$0xff]
    %v1066 = vld [vmem:[%s1063 + $0x10] sm:$0xff]
    %v1067 = vld [vmem:[%s1063 + $0x18] sm:$0xff]
    %v1068 = vld [vmem:[%s1063 + $0x20] sm:$0xff]
    %v1069 = vld [vmem:[%s1063 + $0x28] sm:$0xff]
    %v1070 = vld [vmem:[%s1063 + $0x30] sm:$0xff]
    %v1071 = vld [vmem:[%s1063 + $0x38] sm:$0xff]
    %s1072 = scalar_lea.vmem %s5, 3
    %v1073 = vld [vmem:[%s1072] sm:$0x1]
    %v1075 = vperm.slane %v1073, 0
    %v1078 = vsel %vm119, %v1061, 0
    %v1081 = vsel %vm119, %v1062, 0
    %1083 = vmatpush.msra.mxu0 0.0
    %1084 = vmatpush.msra.mxu0 0.0
    %1085 = vmatpush.msra.mxu0 0.0
    %1086 = vmatpush.msra.mxu0 0.0
    %1087 = vmatpush.msra.mxu0 0.0
    %1088 = vmatpush.msra.mxu0 0.0
    %1089 = vmatpush.msra.mxu0 0.0
    %1090 = vmatpush.msra.mxu0 0.0
    %1091 = vmatpush.msra.mxu0 %v1071
    %1092 = vmatpush.msra.mxu0 %v1070
    %1093 = vmatpush.msra.mxu0 %v1069
    %1094 = vmatpush.msra.mxu0 %v1068
    %1095 = vmatpush.msra.mxu0 %v1067
    %1096 = vmatpush.msra.mxu0 %v1066
    %1097 = vmatpush.msra.mxu0 %v1065
    %1098 = vmatpush.msra.mxu0 %v1064
    %1099 = vmatmul.f32.gmra.mxu0 %v1078
    %v1100 = vpop.f32.mrf.mxu0
    %v1101 = vadd.f32 %v1075, %v1100
    %1102 = vmatmul.f32.gmra.mxu0 %v1081
    %v1103 = vpop.f32.mrf.mxu0
    %v1104 = vadd.f32 %v1075, %v1103
    %1105 = vdwg.mxu0
    %s1106 = scalar_lea.vmem %s6, 192
    %v1107 = vld [vmem:[%s1106] sm:$0xff]
    %v1108 = vld [vmem:[%s1106 + $0x8] sm:$0xff]
    %v1109 = vld [vmem:[%s1106 + $0x10] sm:$0xff]
    %v1110 = vld [vmem:[%s1106 + $0x18] sm:$0xff]
    %s1111 = scalar_lea.vmem %s7, 6
    %v1112 = vld [vmem:[%s1111] sm:$0x1]
    %v1114 = vperm.slane %v1112, 0
    %v1117 = vsel %vm104, %v1101, 0
    %v1120 = vsel %vm104, %v1104, 0
    %1122 = vmatpush.msra.mxu0 0.0
    %1123 = vmatpush.msra.mxu0 0.0
    %1124 = vmatpush.msra.mxu0 0.0
    %1125 = vmatpush.msra.mxu0 0.0
    %1126 = vmatpush.msra.mxu0 0.0
    %1127 = vmatpush.msra.mxu0 0.0
    %1128 = vmatpush.msra.mxu0 0.0
    %1129 = vmatpush.msra.mxu0 0.0
    %1130 = vmatpush.msra.mxu0 0.0
    %1131 = vmatpush.msra.mxu0 0.0
    %1132 = vmatpush.msra.mxu0 0.0
    %1133 = vmatpush.msra.mxu0 0.0
    %1134 = vmatpush.msra.mxu0 %v1110
    %1135 = vmatpush.msra.mxu0 %v1109
    %1136 = vmatpush.msra.mxu0 %v1108
    %1137 = vmatpush.msra.mxu0 %v1107
    %1138 = vmatmul.f32.gmra.mxu0 %v1117
    %v1139 = vpop.f32.mrf.mxu0
    %v1140 = vadd.f32 %v1114, %v1139
    %1141 = vmatmul.f32.gmra.mxu0 %v1120
    %v1142 = vpop.f32.mrf.mxu0
    %v1143 = vadd.f32 %v1114, %v1142
    %1144 = vdwg.mxu0
    %v1145 = vmax.f32 %v1140, 0.0
    %v1146 = vmax.f32 %v1143, 0.0
    %s1147 = scalar_lea.vmem %s6, 224
    %v1148 = vld [vmem:[%s1147] sm:$0xff]
    %v1149 = vld [vmem:[%s1147 + $0x8] sm:$0xff]
    %v1150 = vld [vmem:[%s1147 + $0x10] sm:$0xff]
    %v1151 = vld [vmem:[%s1147 + $0x18] sm:$0xff]
    %s1152 = scalar_lea.vmem %s7, 7
    %v1153 = vld [vmem:[%s1152] sm:$0x1]
    %v1155 = vperm.slane %v1153, 0
    %v1158 = vsel %vm104, %v1145, 0
    %v1161 = vsel %vm104, %v1146, 0
    %1163 = vmatpush.msra.mxu0 0.0
    %1164 = vmatpush.msra.mxu0 0.0
    %1165 = vmatpush.msra.mxu0 0.0
    %1166 = vmatpush.msra.mxu0 0.0
    %1167 = vmatpush.msra.mxu0 0.0
    %1168 = vmatpush.msra.mxu0 0.0
    %1169 = vmatpush.msra.mxu0 0.0
    %1170 = vmatpush.msra.mxu0 0.0
    %1171 = vmatpush.msra.mxu0 0.0
    %1172 = vmatpush.msra.mxu0 0.0
    %1173 = vmatpush.msra.mxu0 0.0
    %1174 = vmatpush.msra.mxu0 0.0
    %1175 = vmatpush.msra.mxu0 %v1151
    %1176 = vmatpush.msra.mxu0 %v1150
    %1177 = vmatpush.msra.mxu0 %v1149
    %1178 = vmatpush.msra.mxu0 %v1148
    %1179 = vmatmul.f32.gmra.mxu0 %v1158
    %v1180 = vpop.f32.mrf.mxu0
    %v1181 = vadd.f32 %v1155, %v1180
    %1182 = vmatmul.f32.gmra.mxu0 %v1161
    %v1183 = vpop.f32.mrf.mxu0
    %v1184 = vadd.f32 %v1155, %v1183
    %1185 = vdwg.mxu0
    %v1186 = vmax.f32 %v1181, 0.0
    %v1187 = vmax.f32 %v1184, 0.0
    %v1188 = vsel %vm104, %v1186, 0.0
    %v1189 = vsel %vm104, %v1187, 0.0
    %v1190 = vadd.f32 %v1188, %v1189
    %v1191 = vrot.slane %v1190, 4
    %v1192 = vadd.f32 %v1190, %v1191
    %v1193 = vrot.slane %v1192, 2
    %v1194 = vadd.f32 %v1192, %v1193
    %v1195 = vrot.slane %v1194, 1
    %v1196 = vadd.f32 %v1194, %v1195
    %v1197 = vmul.f32 %v1196, %v244
    %v1198 = vsub.f32 %v1186, %v1197
    %v1199 = vsub.f32 %v1187, %v1197
    %v1200 = vmul.f32 %v1198, %v1198
    %v1201 = vmul.f32 %v1199, %v1199
    %v1202 = vsel %vm104, %v1200, 0.0
    %v1203 = vsel %vm104, %v1201, 0.0
    %v1204 = vadd.f32 %v1202, %v1203
    %v1205 = vrot.slane %v1204, 4
    %v1206 = vadd.f32 %v1204, %v1205
    %v1207 = vrot.slane %v1206, 2
    %v1208 = vadd.f32 %v1206, %v1207
    %v1209 = vrot.slane %v1208, 1
    %v1210 = vadd.f32 %v1208, %v1209
    %v1211 = vmul.f32 %v1210, %v244
    %v1212 = vadd.f32 %v1211, 1e-05
    %v1213 = vrsqrt.pop %v1212
    %v1214 = vmul.f32 %v1213, %v1212
    %v1215 = vmul.f32 %v1214, %v1213
    %v1216 = vmul.f32 0.5, %v1215
    %v1217 = vsub.f32 1.5, %v1216
    %v1218 = vmul.f32 %v1213, %v1217
    %vm1219 = vweird.f32 %v1212
    %vm1220 = vweird.f32 %v1213
    %vm1221 = vmor %vm1219, %vm1220
    %v1222 = vsel %vm1221, %v1213, %v1218
    %v1223 = vmul.f32 %v1198, %v1222
    %v1224 = vmul.f32 %v1199, %v1222
    %s1225 = scalar_lea.vmem %s8, 3
    %v1226 = vld [vmem:[%s1225] sm:$0x1]
    %v1228 = vperm.slane %v1226, 0
    %v1230 = vmul.f32 %v1223, %v1228
    %v1231 = vmul.f32 %v1224, %v1228
    %s1232 = scalar_lea.vmem %s9, 3
    %v1233 = vld [vmem:[%s1232] sm:$0x1]
    %v1235 = vperm.slane %v1233, 0
    %v1237 = vadd.f32 %v1230, %v1235
    %v1238 = vadd.f32 %v1231, %v1235
    %v1240 = vsel %vm104, %v1237, 0
    %v1243 = vsel %vm104, %v1238, 0
    %1245 = vmatpush.msra.mxu0 0.0
    %1246 = vmatpush.msra.mxu0 0.0
    %1247 = vmatpush.msra.mxu0 0.0
    %1248 = vmatpush.msra.mxu0 0.0
    %1249 = vmatpush.msra.mxu0 0.0
    %1250 = vmatpush.msra.mxu0 0.0
    %1251 = vmatpush.msra.mxu0 0.0
    %1252 = vmatpush.msra.mxu0 0.0
    %1253 = vmatpush.msra.mxu0 0.0
    %1254 = vmatpush.msra.mxu0 0.0
    %1255 = vmatpush.msra.mxu0 0.0
    %1256 = vmatpush.msra.mxu0 0.0
    %1257 = vmatpush.msra.mxu0 %v64
    %1258 = vmatpush.msra.mxu0 %v63
    %1259 = vmatpush.msra.mxu0 %v62
    %1260 = vmatpush.msra.mxu0 %v61
    %1261 = vmatmul.f32.gmra.mxu0 %v1240
    %v1262 = vpop.f32.mrf.mxu0
    %v1263 = vadd.f32 %v286, %v1262
    %1264 = vmatmul.f32.gmra.mxu0 %v1243
    %v1265 = vpop.f32.mrf.mxu0
    %v1266 = vadd.f32 %v286, %v1265
    %1267 = vdwg.mxu0
    %1269 = vset.pattern.permute.xlu0 32
    %1270 = vperm.xlu0 %1269, %v1263
    %v1271 = vpop.permute.xlu0 %1270
    %1274 = vset.pattern.permute.xlu0 32
    %1275 = vperm.xlu0 %1274, %v1266
    %v1276 = vpop.permute.xlu0 %1275
    %v1278 = vsel %vm317, %v1271, -1e+30
    %v1279 = vsel %vm318, %v1276, -1e+30
    %v1280 = vsel %vm331, %v1278, -inf
    %v1281 = vsel %vm331, %v1279, -inf
    %v1282 = vmax.f32 %v1280, %v1281
    %v1283 = vrot.slane %v1282, 4
    %v1284 = vmax.f32 %v1282, %v1283
    %v1285 = vrot.slane %v1284, 2
    %v1286 = vmax.f32 %v1284, %v1285
    %v1287 = vrot.slane %v1286, 1
    %v1288 = vmax.f32 %v1286, %v1287
    %v1289 = vsel %vm317, %v1288, 0.0
    %v1290 = vsel %vm318, %v1288, 0.0
    %v1291 = vsel %vm331, %v1289, 0.0
    %1292 = vadd.xlane.f32.xlu0 %v1291
    %v1293 = vpop.xlane.xlu0 %1292
    %v1294 = vsel %vm331, %v1290, 0.0
    %1295 = vadd.xlane.f32.xlu0 %v1294
    %v1296 = vpop.xlane.xlu0 %1295
    %v1297 = vsub.f32 %v1263, %v1293
    %v1298 = vsub.f32 %v1266, %v1296
    %v1299 = vmul.f32 %v1297, 1.442695
    %v1300 = vpow.pop %v1299
    %v1301 = vmul.f32 %v1298, 1.442695
    %v1302 = vpow.pop %v1301
    %1304 = vset.pattern.permute.xlu0 32
    %1305 = vperm.xlu0 %1304, %v1300
    %v1306 = vpop.permute.xlu0 %1305
    %1309 = vset.pattern.permute.xlu0 32
    %1310 = vperm.xlu0 %1309, %v1302
    %v1311 = vpop.permute.xlu0 %1310
    %v1313 = vmul.f32 %v1306, %v1263
    %v1314 = vmul.f32 %v1311, %v1266
    %v1315 = vsel %vm104, %v1313, %v1300
    %v1316 = vsel %vm104, %v1314, %v1302
    %1317 = vmatpush.msra.mxu0 0.0
    %1318 = vmatpush.msra.mxu0 0.0
    %1319 = vmatpush.msra.mxu0 0.0
    %1320 = vmatpush.msra.mxu0 0.0
    %1321 = vmatpush.msra.mxu0 0.0
    %1322 = vmatpush.msra.mxu0 0.0
    %1323 = vmatpush.msra.mxu0 0.0
    %1324 = vmatpush.msra.mxu0 0.0
    %1325 = vmatpush.msra.mxu0 0.0
    %1326 = vmatpush.msra.mxu0 0.0
    %1327 = vmatpush.msra.mxu0 0.0
    %1328 = vmatpush.msra.mxu0 0.0
    %1329 = vmatpush.msra.mxu0 0.0
    %1330 = vmatpush.msra.mxu0 0.0
    %1331 = vmatpush.msra.mxu0 %v1316
    %1332 = vmatpush.msra.mxu0 %v1315
    %1333 = vmatmul.f32.gmra.mxu0 %v370
    %v1334 = vpop.f32.mrf.mxu0
    %v1335 = vadd.f32 0.0, %v1334
    %1336 = vdwg.mxu0
    %v1337 = vmax.f32 %v1335, 1e-30
    %v1338 = vrcp.pop %v1337
    %1340 = vset.pattern.permute.xlu0 32
    %1341 = vperm.xlu0 %1340, %v1338
    %v1342 = vpop.permute.xlu0 %1341
    %v1344 = vmul.f32 %v1335, %v1342
    %1345 = vmatpush.msra.mxu0 0.0
    %1346 = vmatpush.msra.mxu0 0.0
    %1347 = vmatpush.msra.mxu0 0.0
    %1348 = vmatpush.msra.mxu0 0.0
    %1349 = vmatpush.msra.mxu0 0.0
    %1350 = vmatpush.msra.mxu0 0.0
    %1351 = vmatpush.msra.mxu0 0.0
    %1352 = vmatpush.msra.mxu0 0.0
    %1353 = vmatpush.msra.mxu0 0.0
    %1354 = vmatpush.msra.mxu0 0.0
    %1355 = vmatpush.msra.mxu0 0.0
    %1356 = vmatpush.msra.mxu0 0.0
    %1357 = vmatpush.msra.mxu0 0.0
    %1358 = vmatpush.msra.mxu0 0.0
    %1359 = vmatpush.msra.mxu0 %v1238
    %1360 = vmatpush.msra.mxu0 %v1237
    %1361 = vmatmul.f32.gmra.mxu0 %v68
    %v1362 = vpop.f32.mrf.mxu0
    %v1363 = vadd.f32 0.0, %v1362
    %1364 = vmatmul.f32.gmra.mxu0 %v71
    %v1365 = vpop.f32.mrf.mxu0
    %v1366 = vadd.f32 0.0, %v1365
    %1367 = vdwg.mxu0
    %1370 = vrot.lane.b32.xlu0 %v1363, 32
    %v1371 = vpop.permute.xlu0 %1370
    %1372 = vrot.lane.b32.xlu0 %v1366, 32
    %v1373 = vpop.permute.xlu0 %1372
    %v1376 = vsel %vm104, %v1237, %v1371
    %v1377 = vsel %vm104, %v1238, %v1373
    %s1378 = scalar_lea.vmem %s4, 256
    %v1379 = vld [vmem:[%s1378] sm:$0xff]
    %v1380 = vld [vmem:[%s1378 + $0x8] sm:$0xff]
    %v1381 = vld [vmem:[%s1378 + $0x10] sm:$0xff]
    %v1382 = vld [vmem:[%s1378 + $0x18] sm:$0xff]
    %v1383 = vld [vmem:[%s1378 + $0x20] sm:$0xff]
    %v1384 = vld [vmem:[%s1378 + $0x28] sm:$0xff]
    %v1385 = vld [vmem:[%s1378 + $0x30] sm:$0xff]
    %v1386 = vld [vmem:[%s1378 + $0x38] sm:$0xff]
    %s1387 = scalar_lea.vmem %s5, 4
    %v1388 = vld [vmem:[%s1387] sm:$0x1]
    %v1390 = vperm.slane %v1388, 0
    %v1393 = vsel %vm119, %v1376, 0
    %v1396 = vsel %vm119, %v1377, 0
    %1398 = vmatpush.msra.mxu0 0.0
    %1399 = vmatpush.msra.mxu0 0.0
    %1400 = vmatpush.msra.mxu0 0.0
    %1401 = vmatpush.msra.mxu0 0.0
    %1402 = vmatpush.msra.mxu0 0.0
    %1403 = vmatpush.msra.mxu0 0.0
    %1404 = vmatpush.msra.mxu0 0.0
    %1405 = vmatpush.msra.mxu0 0.0
    %1406 = vmatpush.msra.mxu0 %v1386
    %1407 = vmatpush.msra.mxu0 %v1385
    %1408 = vmatpush.msra.mxu0 %v1384
    %1409 = vmatpush.msra.mxu0 %v1383
    %1410 = vmatpush.msra.mxu0 %v1382
    %1411 = vmatpush.msra.mxu0 %v1381
    %1412 = vmatpush.msra.mxu0 %v1380
    %1413 = vmatpush.msra.mxu0 %v1379
    %1414 = vmatmul.f32.gmra.mxu0 %v1393
    %v1415 = vpop.f32.mrf.mxu0
    %v1416 = vadd.f32 %v1390, %v1415
    %1417 = vmatmul.f32.gmra.mxu0 %v1396
    %v1418 = vpop.f32.mrf.mxu0
    %v1419 = vadd.f32 %v1390, %v1418
    %1420 = vdwg.mxu0
    %s1421 = scalar_lea.vmem %s6, 256
    %v1422 = vld [vmem:[%s1421] sm:$0xff]
    %v1423 = vld [vmem:[%s1421 + $0x8] sm:$0xff]
    %v1424 = vld [vmem:[%s1421 + $0x10] sm:$0xff]
    %v1425 = vld [vmem:[%s1421 + $0x18] sm:$0xff]
    %s1426 = scalar_lea.vmem %s7, 8
    %v1427 = vld [vmem:[%s1426] sm:$0x1]
    %v1429 = vperm.slane %v1427, 0
    %v1432 = vsel %vm104, %v1416, 0
    %v1435 = vsel %vm104, %v1419, 0
    %1437 = vmatpush.msra.mxu0 0.0
    %1438 = vmatpush.msra.mxu0 0.0
    %1439 = vmatpush.msra.mxu0 0.0
    %1440 = vmatpush.msra.mxu0 0.0
    %1441 = vmatpush.msra.mxu0 0.0
    %1442 = vmatpush.msra.mxu0 0.0
    %1443 = vmatpush.msra.mxu0 0.0
    %1444 = vmatpush.msra.mxu0 0.0
    %1445 = vmatpush.msra.mxu0 0.0
    %1446 = vmatpush.msra.mxu0 0.0
    %1447 = vmatpush.msra.mxu0 0.0
    %1448 = vmatpush.msra.mxu0 0.0
    %1449 = vmatpush.msra.mxu0 %v1425
    %1450 = vmatpush.msra.mxu0 %v1424
    %1451 = vmatpush.msra.mxu0 %v1423
    %1452 = vmatpush.msra.mxu0 %v1422
    %1453 = vmatmul.f32.gmra.mxu0 %v1432
    %v1454 = vpop.f32.mrf.mxu0
    %v1455 = vadd.f32 %v1429, %v1454
    %1456 = vmatmul.f32.gmra.mxu0 %v1435
    %v1457 = vpop.f32.mrf.mxu0
    %v1458 = vadd.f32 %v1429, %v1457
    %1459 = vdwg.mxu0
    %v1460 = vmax.f32 %v1455, 0.0
    %v1461 = vmax.f32 %v1458, 0.0
    %s1462 = scalar_lea.vmem %s6, 288
    %v1463 = vld [vmem:[%s1462] sm:$0xff]
    %v1464 = vld [vmem:[%s1462 + $0x8] sm:$0xff]
    %v1465 = vld [vmem:[%s1462 + $0x10] sm:$0xff]
    %v1466 = vld [vmem:[%s1462 + $0x18] sm:$0xff]
    %s1467 = scalar_lea.vmem %s7, 9
    %v1468 = vld [vmem:[%s1467] sm:$0x1]
    %v1470 = vperm.slane %v1468, 0
    %v1473 = vsel %vm104, %v1460, 0
    %v1476 = vsel %vm104, %v1461, 0
    %1478 = vmatpush.msra.mxu0 0.0
    %1479 = vmatpush.msra.mxu0 0.0
    %1480 = vmatpush.msra.mxu0 0.0
    %1481 = vmatpush.msra.mxu0 0.0
    %1482 = vmatpush.msra.mxu0 0.0
    %1483 = vmatpush.msra.mxu0 0.0
    %1484 = vmatpush.msra.mxu0 0.0
    %1485 = vmatpush.msra.mxu0 0.0
    %1486 = vmatpush.msra.mxu0 0.0
    %1487 = vmatpush.msra.mxu0 0.0
    %1488 = vmatpush.msra.mxu0 0.0
    %1489 = vmatpush.msra.mxu0 0.0
    %1490 = vmatpush.msra.mxu0 %v1466
    %1491 = vmatpush.msra.mxu0 %v1465
    %1492 = vmatpush.msra.mxu0 %v1464
    %1493 = vmatpush.msra.mxu0 %v1463
    %1494 = vmatmul.f32.gmra.mxu0 %v1473
    %v1495 = vpop.f32.mrf.mxu0
    %v1496 = vadd.f32 %v1470, %v1495
    %1497 = vmatmul.f32.gmra.mxu0 %v1476
    %v1498 = vpop.f32.mrf.mxu0
    %v1499 = vadd.f32 %v1470, %v1498
    %1500 = vdwg.mxu0
    %v1501 = vmax.f32 %v1496, 0.0
    %v1502 = vmax.f32 %v1499, 0.0
    %v1503 = vsel %vm104, %v1501, 0.0
    %v1504 = vsel %vm104, %v1502, 0.0
    %v1505 = vadd.f32 %v1503, %v1504
    %v1506 = vrot.slane %v1505, 4
    %v1507 = vadd.f32 %v1505, %v1506
    %v1508 = vrot.slane %v1507, 2
    %v1509 = vadd.f32 %v1507, %v1508
    %v1510 = vrot.slane %v1509, 1
    %v1511 = vadd.f32 %v1509, %v1510
    %v1512 = vmul.f32 %v1511, %v244
    %v1513 = vsub.f32 %v1501, %v1512
    %v1514 = vsub.f32 %v1502, %v1512
    %v1515 = vmul.f32 %v1513, %v1513
    %v1516 = vmul.f32 %v1514, %v1514
    %v1517 = vsel %vm104, %v1515, 0.0
    %v1518 = vsel %vm104, %v1516, 0.0
    %v1519 = vadd.f32 %v1517, %v1518
    %v1520 = vrot.slane %v1519, 4
    %v1521 = vadd.f32 %v1519, %v1520
    %v1522 = vrot.slane %v1521, 2
    %v1523 = vadd.f32 %v1521, %v1522
    %v1524 = vrot.slane %v1523, 1
    %v1525 = vadd.f32 %v1523, %v1524
    %v1526 = vmul.f32 %v1525, %v244
    %v1527 = vadd.f32 %v1526, 1e-05
    %v1528 = vrsqrt.pop %v1527
    %v1529 = vmul.f32 %v1528, %v1527
    %v1530 = vmul.f32 %v1529, %v1528
    %v1531 = vmul.f32 0.5, %v1530
    %v1532 = vsub.f32 1.5, %v1531
    %v1533 = vmul.f32 %v1528, %v1532
    %vm1534 = vweird.f32 %v1527
    %vm1535 = vweird.f32 %v1528
    %vm1536 = vmor %vm1534, %vm1535
    %v1537 = vsel %vm1536, %v1528, %v1533
    %v1538 = vmul.f32 %v1513, %v1537
    %v1539 = vmul.f32 %v1514, %v1537
    %s1540 = scalar_lea.vmem %s8, 4
    %v1541 = vld [vmem:[%s1540] sm:$0x1]
    %v1543 = vperm.slane %v1541, 0
    %v1545 = vmul.f32 %v1538, %v1543
    %v1546 = vmul.f32 %v1539, %v1543
    %s1547 = scalar_lea.vmem %s9, 4
    %v1548 = vld [vmem:[%s1547] sm:$0x1]
    %v1550 = vperm.slane %v1548, 0
    %v1552 = vadd.f32 %v1545, %v1550
    %v1553 = vadd.f32 %v1546, %v1550
    %v1555 = vsel %vm104, %v1552, 0
    %v1558 = vsel %vm104, %v1553, 0
    %1560 = vmatpush.msra.mxu0 0.0
    %1561 = vmatpush.msra.mxu0 0.0
    %1562 = vmatpush.msra.mxu0 0.0
    %1563 = vmatpush.msra.mxu0 0.0
    %1564 = vmatpush.msra.mxu0 0.0
    %1565 = vmatpush.msra.mxu0 0.0
    %1566 = vmatpush.msra.mxu0 0.0
    %1567 = vmatpush.msra.mxu0 0.0
    %1568 = vmatpush.msra.mxu0 0.0
    %1569 = vmatpush.msra.mxu0 0.0
    %1570 = vmatpush.msra.mxu0 0.0
    %1571 = vmatpush.msra.mxu0 0.0
    %1572 = vmatpush.msra.mxu0 %v64
    %1573 = vmatpush.msra.mxu0 %v63
    %1574 = vmatpush.msra.mxu0 %v62
    %1575 = vmatpush.msra.mxu0 %v61
    %1576 = vmatmul.f32.gmra.mxu0 %v1555
    %v1577 = vpop.f32.mrf.mxu0
    %v1578 = vadd.f32 %v286, %v1577
    %1579 = vmatmul.f32.gmra.mxu0 %v1558
    %v1580 = vpop.f32.mrf.mxu0
    %v1581 = vadd.f32 %v286, %v1580
    %1582 = vdwg.mxu0
    %1584 = vset.pattern.permute.xlu0 32
    %1585 = vperm.xlu0 %1584, %v1578
    %v1586 = vpop.permute.xlu0 %1585
    %1589 = vset.pattern.permute.xlu0 32
    %1590 = vperm.xlu0 %1589, %v1581
    %v1591 = vpop.permute.xlu0 %1590
    %v1593 = vsel %vm317, %v1586, -1e+30
    %v1594 = vsel %vm318, %v1591, -1e+30
    %v1595 = vsel %vm331, %v1593, -inf
    %v1596 = vsel %vm331, %v1594, -inf
    %v1597 = vmax.f32 %v1595, %v1596
    %v1598 = vrot.slane %v1597, 4
    %v1599 = vmax.f32 %v1597, %v1598
    %v1600 = vrot.slane %v1599, 2
    %v1601 = vmax.f32 %v1599, %v1600
    %v1602 = vrot.slane %v1601, 1
    %v1603 = vmax.f32 %v1601, %v1602
    %v1604 = vsel %vm317, %v1603, 0.0
    %v1605 = vsel %vm318, %v1603, 0.0
    %v1606 = vsel %vm331, %v1604, 0.0
    %1607 = vadd.xlane.f32.xlu0 %v1606
    %v1608 = vpop.xlane.xlu0 %1607
    %v1609 = vsel %vm331, %v1605, 0.0
    %1610 = vadd.xlane.f32.xlu0 %v1609
    %v1611 = vpop.xlane.xlu0 %1610
    %v1612 = vsub.f32 %v1578, %v1608
    %v1613 = vsub.f32 %v1581, %v1611
    %v1614 = vmul.f32 %v1612, 1.442695
    %v1615 = vpow.pop %v1614
    %v1616 = vmul.f32 %v1613, 1.442695
    %v1617 = vpow.pop %v1616
    %1619 = vset.pattern.permute.xlu0 32
    %1620 = vperm.xlu0 %1619, %v1615
    %v1621 = vpop.permute.xlu0 %1620
    %1624 = vset.pattern.permute.xlu0 32
    %1625 = vperm.xlu0 %1624, %v1617
    %v1626 = vpop.permute.xlu0 %1625
    %v1628 = vmul.f32 %v1621, %v1578
    %v1629 = vmul.f32 %v1626, %v1581
    %v1630 = vsel %vm104, %v1628, %v1615
    %v1631 = vsel %vm104, %v1629, %v1617
    %1632 = vmatpush.msra.mxu0 0.0
    %1633 = vmatpush.msra.mxu0 0.0
    %1634 = vmatpush.msra.mxu0 0.0
    %1635 = vmatpush.msra.mxu0 0.0
    %1636 = vmatpush.msra.mxu0 0.0
    %1637 = vmatpush.msra.mxu0 0.0
    %1638 = vmatpush.msra.mxu0 0.0
    %1639 = vmatpush.msra.mxu0 0.0
    %1640 = vmatpush.msra.mxu0 0.0
    %1641 = vmatpush.msra.mxu0 0.0
    %1642 = vmatpush.msra.mxu0 0.0
    %1643 = vmatpush.msra.mxu0 0.0
    %1644 = vmatpush.msra.mxu0 0.0
    %1645 = vmatpush.msra.mxu0 0.0
    %1646 = vmatpush.msra.mxu0 %v1631
    %1647 = vmatpush.msra.mxu0 %v1630
    %1648 = vmatmul.f32.gmra.mxu0 %v370
    %v1649 = vpop.f32.mrf.mxu0
    %v1650 = vadd.f32 0.0, %v1649
    %1651 = vdwg.mxu0
    %v1652 = vmax.f32 %v1650, 1e-30
    %v1653 = vrcp.pop %v1652
    %1655 = vset.pattern.permute.xlu0 32
    %1656 = vperm.xlu0 %1655, %v1653
    %v1657 = vpop.permute.xlu0 %1656
    %v1659 = vmul.f32 %v1650, %v1657
    %1660 = vmatpush.msra.mxu0 0.0
    %1661 = vmatpush.msra.mxu0 0.0
    %1662 = vmatpush.msra.mxu0 0.0
    %1663 = vmatpush.msra.mxu0 0.0
    %1664 = vmatpush.msra.mxu0 0.0
    %1665 = vmatpush.msra.mxu0 0.0
    %1666 = vmatpush.msra.mxu0 0.0
    %1667 = vmatpush.msra.mxu0 0.0
    %1668 = vmatpush.msra.mxu0 0.0
    %1669 = vmatpush.msra.mxu0 0.0
    %1670 = vmatpush.msra.mxu0 0.0
    %1671 = vmatpush.msra.mxu0 0.0
    %1672 = vmatpush.msra.mxu0 0.0
    %1673 = vmatpush.msra.mxu0 0.0
    %1674 = vmatpush.msra.mxu0 %v1553
    %1675 = vmatpush.msra.mxu0 %v1552
    %1676 = vmatmul.f32.gmra.mxu0 %v68
    %v1677 = vpop.f32.mrf.mxu0
    %v1678 = vadd.f32 0.0, %v1677
    %1679 = vmatmul.f32.gmra.mxu0 %v71
    %v1680 = vpop.f32.mrf.mxu0
    %v1681 = vadd.f32 0.0, %v1680
    %1682 = vdwg.mxu0
    %1685 = vrot.lane.b32.xlu0 %v1678, 32
    %v1686 = vpop.permute.xlu0 %1685
    %1687 = vrot.lane.b32.xlu0 %v1681, 32
    %v1688 = vpop.permute.xlu0 %1687
    %v1691 = vsel %vm104, %v1552, %v1686
    %v1692 = vsel %vm104, %v1553, %v1688
    %s1693 = scalar_lea.vmem %s4, 320
    %v1694 = vld [vmem:[%s1693] sm:$0xff]
    %v1695 = vld [vmem:[%s1693 + $0x8] sm:$0xff]
    %v1696 = vld [vmem:[%s1693 + $0x10] sm:$0xff]
    %v1697 = vld [vmem:[%s1693 + $0x18] sm:$0xff]
    %v1698 = vld [vmem:[%s1693 + $0x20] sm:$0xff]
    %v1699 = vld [vmem:[%s1693 + $0x28] sm:$0xff]
    %v1700 = vld [vmem:[%s1693 + $0x30] sm:$0xff]
    %v1701 = vld [vmem:[%s1693 + $0x38] sm:$0xff]
    %s1702 = scalar_lea.vmem %s5, 5
    %v1703 = vld [vmem:[%s1702] sm:$0x1]
    %v1705 = vperm.slane %v1703, 0
    %v1708 = vsel %vm119, %v1691, 0
    %v1711 = vsel %vm119, %v1692, 0
    %1713 = vmatpush.msra.mxu0 0.0
    %1714 = vmatpush.msra.mxu0 0.0
    %1715 = vmatpush.msra.mxu0 0.0
    %1716 = vmatpush.msra.mxu0 0.0
    %1717 = vmatpush.msra.mxu0 0.0
    %1718 = vmatpush.msra.mxu0 0.0
    %1719 = vmatpush.msra.mxu0 0.0
    %1720 = vmatpush.msra.mxu0 0.0
    %1721 = vmatpush.msra.mxu0 %v1701
    %1722 = vmatpush.msra.mxu0 %v1700
    %1723 = vmatpush.msra.mxu0 %v1699
    %1724 = vmatpush.msra.mxu0 %v1698
    %1725 = vmatpush.msra.mxu0 %v1697
    %1726 = vmatpush.msra.mxu0 %v1696
    %1727 = vmatpush.msra.mxu0 %v1695
    %1728 = vmatpush.msra.mxu0 %v1694
    %1729 = vmatmul.f32.gmra.mxu0 %v1708
    %v1730 = vpop.f32.mrf.mxu0
    %v1731 = vadd.f32 %v1705, %v1730
    %1732 = vmatmul.f32.gmra.mxu0 %v1711
    %v1733 = vpop.f32.mrf.mxu0
    %v1734 = vadd.f32 %v1705, %v1733
    %1735 = vdwg.mxu0
    %s1736 = scalar_lea.vmem %s6, 320
    %v1737 = vld [vmem:[%s1736] sm:$0xff]
    %v1738 = vld [vmem:[%s1736 + $0x8] sm:$0xff]
    %v1739 = vld [vmem:[%s1736 + $0x10] sm:$0xff]
    %v1740 = vld [vmem:[%s1736 + $0x18] sm:$0xff]
    %s1741 = scalar_lea.vmem %s7, 10
    %v1742 = vld [vmem:[%s1741] sm:$0x1]
    %v1744 = vperm.slane %v1742, 0
    %v1747 = vsel %vm104, %v1731, 0
    %v1750 = vsel %vm104, %v1734, 0
    %1752 = vmatpush.msra.mxu0 0.0
    %1753 = vmatpush.msra.mxu0 0.0
    %1754 = vmatpush.msra.mxu0 0.0
    %1755 = vmatpush.msra.mxu0 0.0
    %1756 = vmatpush.msra.mxu0 0.0
    %1757 = vmatpush.msra.mxu0 0.0
    %1758 = vmatpush.msra.mxu0 0.0
    %1759 = vmatpush.msra.mxu0 0.0
    %1760 = vmatpush.msra.mxu0 0.0
    %1761 = vmatpush.msra.mxu0 0.0
    %1762 = vmatpush.msra.mxu0 0.0
    %1763 = vmatpush.msra.mxu0 0.0
    %1764 = vmatpush.msra.mxu0 %v1740
    %1765 = vmatpush.msra.mxu0 %v1739
    %1766 = vmatpush.msra.mxu0 %v1738
    %1767 = vmatpush.msra.mxu0 %v1737
    %1768 = vmatmul.f32.gmra.mxu0 %v1747
    %v1769 = vpop.f32.mrf.mxu0
    %v1770 = vadd.f32 %v1744, %v1769
    %1771 = vmatmul.f32.gmra.mxu0 %v1750
    %v1772 = vpop.f32.mrf.mxu0
    %v1773 = vadd.f32 %v1744, %v1772
    %1774 = vdwg.mxu0
    %v1775 = vmax.f32 %v1770, 0.0
    %v1776 = vmax.f32 %v1773, 0.0
    %s1777 = scalar_lea.vmem %s6, 352
    %v1778 = vld [vmem:[%s1777] sm:$0xff]
    %v1779 = vld [vmem:[%s1777 + $0x8] sm:$0xff]
    %v1780 = vld [vmem:[%s1777 + $0x10] sm:$0xff]
    %v1781 = vld [vmem:[%s1777 + $0x18] sm:$0xff]
    %s1782 = scalar_lea.vmem %s7, 11
    %v1783 = vld [vmem:[%s1782] sm:$0x1]
    %v1785 = vperm.slane %v1783, 0
    %v1788 = vsel %vm104, %v1775, 0
    %v1791 = vsel %vm104, %v1776, 0
    %1793 = vmatpush.msra.mxu0 0.0
    %1794 = vmatpush.msra.mxu0 0.0
    %1795 = vmatpush.msra.mxu0 0.0
    %1796 = vmatpush.msra.mxu0 0.0
    %1797 = vmatpush.msra.mxu0 0.0
    %1798 = vmatpush.msra.mxu0 0.0
    %1799 = vmatpush.msra.mxu0 0.0
    %1800 = vmatpush.msra.mxu0 0.0
    %1801 = vmatpush.msra.mxu0 0.0
    %1802 = vmatpush.msra.mxu0 0.0
    %1803 = vmatpush.msra.mxu0 0.0
    %1804 = vmatpush.msra.mxu0 0.0
    %1805 = vmatpush.msra.mxu0 %v1781
    %1806 = vmatpush.msra.mxu0 %v1780
    %1807 = vmatpush.msra.mxu0 %v1779
    %1808 = vmatpush.msra.mxu0 %v1778
    %1809 = vmatmul.f32.gmra.mxu0 %v1788
    %v1810 = vpop.f32.mrf.mxu0
    %v1811 = vadd.f32 %v1785, %v1810
    %1812 = vmatmul.f32.gmra.mxu0 %v1791
    %v1813 = vpop.f32.mrf.mxu0
    %v1814 = vadd.f32 %v1785, %v1813
    %1815 = vdwg.mxu0
    %v1816 = vmax.f32 %v1811, 0.0
    %v1817 = vmax.f32 %v1814, 0.0
    %v1818 = vsel %vm104, %v1816, 0.0
    %v1819 = vsel %vm104, %v1817, 0.0
    %v1820 = vadd.f32 %v1818, %v1819
    %v1821 = vrot.slane %v1820, 4
    %v1822 = vadd.f32 %v1820, %v1821
    %v1823 = vrot.slane %v1822, 2
    %v1824 = vadd.f32 %v1822, %v1823
    %v1825 = vrot.slane %v1824, 1
    %v1826 = vadd.f32 %v1824, %v1825
    %v1827 = vmul.f32 %v1826, %v244
    %v1828 = vsub.f32 %v1816, %v1827
    %v1829 = vsub.f32 %v1817, %v1827
    %v1830 = vmul.f32 %v1828, %v1828
    %v1831 = vmul.f32 %v1829, %v1829
    %v1832 = vsel %vm104, %v1830, 0.0
    %v1833 = vsel %vm104, %v1831, 0.0
    %v1834 = vadd.f32 %v1832, %v1833
    %v1835 = vrot.slane %v1834, 4
    %v1836 = vadd.f32 %v1834, %v1835
    %v1837 = vrot.slane %v1836, 2
    %v1838 = vadd.f32 %v1836, %v1837
    %v1839 = vrot.slane %v1838, 1
    %v1840 = vadd.f32 %v1838, %v1839
    %v1841 = vmul.f32 %v1840, %v244
    %v1842 = vadd.f32 %v1841, 1e-05
    %v1843 = vrsqrt.pop %v1842
    %v1844 = vmul.f32 %v1843, %v1842
    %v1845 = vmul.f32 %v1844, %v1843
    %v1846 = vmul.f32 0.5, %v1845
    %v1847 = vsub.f32 1.5, %v1846
    %v1848 = vmul.f32 %v1843, %v1847
    %vm1849 = vweird.f32 %v1842
    %vm1850 = vweird.f32 %v1843
    %vm1851 = vmor %vm1849, %vm1850
    %v1852 = vsel %vm1851, %v1843, %v1848
    %v1853 = vmul.f32 %v1828, %v1852
    %v1854 = vmul.f32 %v1829, %v1852
    %s1855 = scalar_lea.vmem %s8, 5
    %v1856 = vld [vmem:[%s1855] sm:$0x1]
    %v1858 = vperm.slane %v1856, 0
    %v1860 = vmul.f32 %v1853, %v1858
    %v1861 = vmul.f32 %v1854, %v1858
    %s1862 = scalar_lea.vmem %s9, 5
    %v1863 = vld [vmem:[%s1862] sm:$0x1]
    %v1865 = vperm.slane %v1863, 0
    %v1867 = vadd.f32 %v1860, %v1865
    %v1868 = vadd.f32 %v1861, %v1865
    %v1870 = vsel %vm104, %v1867, 0
    %v1873 = vsel %vm104, %v1868, 0
    %1875 = vmatpush.msra.mxu0 0.0
    %1876 = vmatpush.msra.mxu0 0.0
    %1877 = vmatpush.msra.mxu0 0.0
    %1878 = vmatpush.msra.mxu0 0.0
    %1879 = vmatpush.msra.mxu0 0.0
    %1880 = vmatpush.msra.mxu0 0.0
    %1881 = vmatpush.msra.mxu0 0.0
    %1882 = vmatpush.msra.mxu0 0.0
    %1883 = vmatpush.msra.mxu0 0.0
    %1884 = vmatpush.msra.mxu0 0.0
    %1885 = vmatpush.msra.mxu0 0.0
    %1886 = vmatpush.msra.mxu0 0.0
    %1887 = vmatpush.msra.mxu0 %v64
    %1888 = vmatpush.msra.mxu0 %v63
    %1889 = vmatpush.msra.mxu0 %v62
    %1890 = vmatpush.msra.mxu0 %v61
    %1891 = vmatmul.f32.gmra.mxu0 %v1870
    %v1892 = vpop.f32.mrf.mxu0
    %v1893 = vadd.f32 %v286, %v1892
    %1894 = vmatmul.f32.gmra.mxu0 %v1873
    %v1895 = vpop.f32.mrf.mxu0
    %v1896 = vadd.f32 %v286, %v1895
    %1897 = vdwg.mxu0
    %1899 = vset.pattern.permute.xlu0 32
    %1900 = vperm.xlu0 %1899, %v1893
    %v1901 = vpop.permute.xlu0 %1900
    %1904 = vset.pattern.permute.xlu0 32
    %1905 = vperm.xlu0 %1904, %v1896
    %v1906 = vpop.permute.xlu0 %1905
    %v1908 = vsel %vm317, %v1901, -1e+30
    %v1909 = vsel %vm318, %v1906, -1e+30
    %v1910 = vsel %vm331, %v1908, -inf
    %v1911 = vsel %vm331, %v1909, -inf
    %v1912 = vmax.f32 %v1910, %v1911
    %v1913 = vrot.slane %v1912, 4
    %v1914 = vmax.f32 %v1912, %v1913
    %v1915 = vrot.slane %v1914, 2
    %v1916 = vmax.f32 %v1914, %v1915
    %v1917 = vrot.slane %v1916, 1
    %v1918 = vmax.f32 %v1916, %v1917
    %v1919 = vsel %vm317, %v1918, 0.0
    %v1920 = vsel %vm318, %v1918, 0.0
    %v1921 = vsel %vm331, %v1919, 0.0
    %1922 = vadd.xlane.f32.xlu0 %v1921
    %v1923 = vpop.xlane.xlu0 %1922
    %v1924 = vsel %vm331, %v1920, 0.0
    %1925 = vadd.xlane.f32.xlu0 %v1924
    %v1926 = vpop.xlane.xlu0 %1925
    %v1927 = vsub.f32 %v1893, %v1923
    %v1928 = vsub.f32 %v1896, %v1926
    %v1929 = vmul.f32 %v1927, 1.442695
    %v1930 = vpow.pop %v1929
    %v1931 = vmul.f32 %v1928, 1.442695
    %v1932 = vpow.pop %v1931
    %1934 = vset.pattern.permute.xlu0 32
    %1935 = vperm.xlu0 %1934, %v1930
    %v1936 = vpop.permute.xlu0 %1935
    %1939 = vset.pattern.permute.xlu0 32
    %1940 = vperm.xlu0 %1939, %v1932
    %v1941 = vpop.permute.xlu0 %1940
    %v1943 = vmul.f32 %v1936, %v1893
    %v1944 = vmul.f32 %v1941, %v1896
    %v1945 = vsel %vm104, %v1943, %v1930
    %v1946 = vsel %vm104, %v1944, %v1932
    %1947 = vmatpush.msra.mxu0 0.0
    %1948 = vmatpush.msra.mxu0 0.0
    %1949 = vmatpush.msra.mxu0 0.0
    %1950 = vmatpush.msra.mxu0 0.0
    %1951 = vmatpush.msra.mxu0 0.0
    %1952 = vmatpush.msra.mxu0 0.0
    %1953 = vmatpush.msra.mxu0 0.0
    %1954 = vmatpush.msra.mxu0 0.0
    %1955 = vmatpush.msra.mxu0 0.0
    %1956 = vmatpush.msra.mxu0 0.0
    %1957 = vmatpush.msra.mxu0 0.0
    %1958 = vmatpush.msra.mxu0 0.0
    %1959 = vmatpush.msra.mxu0 0.0
    %1960 = vmatpush.msra.mxu0 0.0
    %1961 = vmatpush.msra.mxu0 %v1946
    %1962 = vmatpush.msra.mxu0 %v1945
    %1963 = vmatmul.f32.gmra.mxu0 %v370
    %v1964 = vpop.f32.mrf.mxu0
    %v1965 = vadd.f32 0.0, %v1964
    %1966 = vdwg.mxu0
    %v1967 = vmax.f32 %v1965, 1e-30
    %v1968 = vrcp.pop %v1967
    %1970 = vset.pattern.permute.xlu0 32
    %1971 = vperm.xlu0 %1970, %v1968
    %v1972 = vpop.permute.xlu0 %1971
    %v1974 = vmul.f32 %v1965, %v1972
    %1975 = vmatpush.msra.mxu0 0.0
    %1976 = vmatpush.msra.mxu0 0.0
    %1977 = vmatpush.msra.mxu0 0.0
    %1978 = vmatpush.msra.mxu0 0.0
    %1979 = vmatpush.msra.mxu0 0.0
    %1980 = vmatpush.msra.mxu0 0.0
    %1981 = vmatpush.msra.mxu0 0.0
    %1982 = vmatpush.msra.mxu0 0.0
    %1983 = vmatpush.msra.mxu0 0.0
    %1984 = vmatpush.msra.mxu0 0.0
    %1985 = vmatpush.msra.mxu0 0.0
    %1986 = vmatpush.msra.mxu0 0.0
    %1987 = vmatpush.msra.mxu0 0.0
    %1988 = vmatpush.msra.mxu0 0.0
    %1989 = vmatpush.msra.mxu0 %v1868
    %1990 = vmatpush.msra.mxu0 %v1867
    %1991 = vmatmul.f32.gmra.mxu0 %v68
    %v1992 = vpop.f32.mrf.mxu0
    %v1993 = vadd.f32 0.0, %v1992
    %1994 = vmatmul.f32.gmra.mxu0 %v71
    %v1995 = vpop.f32.mrf.mxu0
    %v1996 = vadd.f32 0.0, %v1995
    %1997 = vdwg.mxu0
    %2000 = vrot.lane.b32.xlu0 %v1993, 32
    %v2001 = vpop.permute.xlu0 %2000
    %2002 = vrot.lane.b32.xlu0 %v1996, 32
    %v2003 = vpop.permute.xlu0 %2002
    %v2006 = vsel %vm104, %v1867, %v2001
    %v2007 = vsel %vm104, %v1868, %v2003
    %s2008 = scalar_lea.vmem %s4, 384
    %v2009 = vld [vmem:[%s2008] sm:$0xff]
    %v2010 = vld [vmem:[%s2008 + $0x8] sm:$0xff]
    %v2011 = vld [vmem:[%s2008 + $0x10] sm:$0xff]
    %v2012 = vld [vmem:[%s2008 + $0x18] sm:$0xff]
    %v2013 = vld [vmem:[%s2008 + $0x20] sm:$0xff]
    %v2014 = vld [vmem:[%s2008 + $0x28] sm:$0xff]
    %v2015 = vld [vmem:[%s2008 + $0x30] sm:$0xff]
    %v2016 = vld [vmem:[%s2008 + $0x38] sm:$0xff]
    %s2017 = scalar_lea.vmem %s5, 6
    %v2018 = vld [vmem:[%s2017] sm:$0x1]
    %v2020 = vperm.slane %v2018, 0
    %v2023 = vsel %vm119, %v2006, 0
    %v2026 = vsel %vm119, %v2007, 0
    %2028 = vmatpush.msra.mxu0 0.0
    %2029 = vmatpush.msra.mxu0 0.0
    %2030 = vmatpush.msra.mxu0 0.0
    %2031 = vmatpush.msra.mxu0 0.0
    %2032 = vmatpush.msra.mxu0 0.0
    %2033 = vmatpush.msra.mxu0 0.0
    %2034 = vmatpush.msra.mxu0 0.0
    %2035 = vmatpush.msra.mxu0 0.0
    %2036 = vmatpush.msra.mxu0 %v2016
    %2037 = vmatpush.msra.mxu0 %v2015
    %2038 = vmatpush.msra.mxu0 %v2014
    %2039 = vmatpush.msra.mxu0 %v2013
    %2040 = vmatpush.msra.mxu0 %v2012
    %2041 = vmatpush.msra.mxu0 %v2011
    %2042 = vmatpush.msra.mxu0 %v2010
    %2043 = vmatpush.msra.mxu0 %v2009
    %2044 = vmatmul.f32.gmra.mxu0 %v2023
    %v2045 = vpop.f32.mrf.mxu0
    %v2046 = vadd.f32 %v2020, %v2045
    %2047 = vmatmul.f32.gmra.mxu0 %v2026
    %v2048 = vpop.f32.mrf.mxu0
    %v2049 = vadd.f32 %v2020, %v2048
    %2050 = vdwg.mxu0
    %s2051 = scalar_lea.vmem %s6, 384
    %v2052 = vld [vmem:[%s2051] sm:$0xff]
    %v2053 = vld [vmem:[%s2051 + $0x8] sm:$0xff]
    %v2054 = vld [vmem:[%s2051 + $0x10] sm:$0xff]
    %v2055 = vld [vmem:[%s2051 + $0x18] sm:$0xff]
    %s2056 = scalar_lea.vmem %s7, 12
    %v2057 = vld [vmem:[%s2056] sm:$0x1]
    %v2059 = vperm.slane %v2057, 0
    %v2062 = vsel %vm104, %v2046, 0
    %v2065 = vsel %vm104, %v2049, 0
    %2067 = vmatpush.msra.mxu0 0.0
    %2068 = vmatpush.msra.mxu0 0.0
    %2069 = vmatpush.msra.mxu0 0.0
    %2070 = vmatpush.msra.mxu0 0.0
    %2071 = vmatpush.msra.mxu0 0.0
    %2072 = vmatpush.msra.mxu0 0.0
    %2073 = vmatpush.msra.mxu0 0.0
    %2074 = vmatpush.msra.mxu0 0.0
    %2075 = vmatpush.msra.mxu0 0.0
    %2076 = vmatpush.msra.mxu0 0.0
    %2077 = vmatpush.msra.mxu0 0.0
    %2078 = vmatpush.msra.mxu0 0.0
    %2079 = vmatpush.msra.mxu0 %v2055
    %2080 = vmatpush.msra.mxu0 %v2054
    %2081 = vmatpush.msra.mxu0 %v2053
    %2082 = vmatpush.msra.mxu0 %v2052
    %2083 = vmatmul.f32.gmra.mxu0 %v2062
    %v2084 = vpop.f32.mrf.mxu0
    %v2085 = vadd.f32 %v2059, %v2084
    %2086 = vmatmul.f32.gmra.mxu0 %v2065
    %v2087 = vpop.f32.mrf.mxu0
    %v2088 = vadd.f32 %v2059, %v2087
    %2089 = vdwg.mxu0
    %v2090 = vmax.f32 %v2085, 0.0
    %v2091 = vmax.f32 %v2088, 0.0
    %s2092 = scalar_lea.vmem %s6, 416
    %v2093 = vld [vmem:[%s2092] sm:$0xff]
    %v2094 = vld [vmem:[%s2092 + $0x8] sm:$0xff]
    %v2095 = vld [vmem:[%s2092 + $0x10] sm:$0xff]
    %v2096 = vld [vmem:[%s2092 + $0x18] sm:$0xff]
    %s2097 = scalar_lea.vmem %s7, 13
    %v2098 = vld [vmem:[%s2097] sm:$0x1]
    %v2100 = vperm.slane %v2098, 0
    %v2103 = vsel %vm104, %v2090, 0
    %v2106 = vsel %vm104, %v2091, 0
    %2108 = vmatpush.msra.mxu0 0.0
    %2109 = vmatpush.msra.mxu0 0.0
    %2110 = vmatpush.msra.mxu0 0.0
    %2111 = vmatpush.msra.mxu0 0.0
    %2112 = vmatpush.msra.mxu0 0.0
    %2113 = vmatpush.msra.mxu0 0.0
    %2114 = vmatpush.msra.mxu0 0.0
    %2115 = vmatpush.msra.mxu0 0.0
    %2116 = vmatpush.msra.mxu0 0.0
    %2117 = vmatpush.msra.mxu0 0.0
    %2118 = vmatpush.msra.mxu0 0.0
    %2119 = vmatpush.msra.mxu0 0.0
    %2120 = vmatpush.msra.mxu0 %v2096
    %2121 = vmatpush.msra.mxu0 %v2095
    %2122 = vmatpush.msra.mxu0 %v2094
    %2123 = vmatpush.msra.mxu0 %v2093
    %2124 = vmatmul.f32.gmra.mxu0 %v2103
    %v2125 = vpop.f32.mrf.mxu0
    %v2126 = vadd.f32 %v2100, %v2125
    %2127 = vmatmul.f32.gmra.mxu0 %v2106
    %v2128 = vpop.f32.mrf.mxu0
    %v2129 = vadd.f32 %v2100, %v2128
    %2130 = vdwg.mxu0
    %v2131 = vmax.f32 %v2126, 0.0
    %v2132 = vmax.f32 %v2129, 0.0
    %v2133 = vsel %vm104, %v2131, 0.0
    %v2134 = vsel %vm104, %v2132, 0.0
    %v2135 = vadd.f32 %v2133, %v2134
    %v2136 = vrot.slane %v2135, 4
    %v2137 = vadd.f32 %v2135, %v2136
    %v2138 = vrot.slane %v2137, 2
    %v2139 = vadd.f32 %v2137, %v2138
    %v2140 = vrot.slane %v2139, 1
    %v2141 = vadd.f32 %v2139, %v2140
    %v2142 = vmul.f32 %v2141, %v244
    %v2143 = vsub.f32 %v2131, %v2142
    %v2144 = vsub.f32 %v2132, %v2142
    %v2145 = vmul.f32 %v2143, %v2143
    %v2146 = vmul.f32 %v2144, %v2144
    %v2147 = vsel %vm104, %v2145, 0.0
    %v2148 = vsel %vm104, %v2146, 0.0
    %v2149 = vadd.f32 %v2147, %v2148
    %v2150 = vrot.slane %v2149, 4
    %v2151 = vadd.f32 %v2149, %v2150
    %v2152 = vrot.slane %v2151, 2
    %v2153 = vadd.f32 %v2151, %v2152
    %v2154 = vrot.slane %v2153, 1
    %v2155 = vadd.f32 %v2153, %v2154
    %v2156 = vmul.f32 %v2155, %v244
    %v2157 = vadd.f32 %v2156, 1e-05
    %v2158 = vrsqrt.pop %v2157
    %v2159 = vmul.f32 %v2158, %v2157
    %v2160 = vmul.f32 %v2159, %v2158
    %v2161 = vmul.f32 0.5, %v2160
    %v2162 = vsub.f32 1.5, %v2161
    %v2163 = vmul.f32 %v2158, %v2162
    %vm2164 = vweird.f32 %v2157
    %vm2165 = vweird.f32 %v2158
    %vm2166 = vmor %vm2164, %vm2165
    %v2167 = vsel %vm2166, %v2158, %v2163
    %v2168 = vmul.f32 %v2143, %v2167
    %v2169 = vmul.f32 %v2144, %v2167
    %s2170 = scalar_lea.vmem %s8, 6
    %v2171 = vld [vmem:[%s2170] sm:$0x1]
    %v2173 = vperm.slane %v2171, 0
    %v2175 = vmul.f32 %v2168, %v2173
    %v2176 = vmul.f32 %v2169, %v2173
    %s2177 = scalar_lea.vmem %s9, 6
    %v2178 = vld [vmem:[%s2177] sm:$0x1]
    %v2180 = vperm.slane %v2178, 0
    %v2182 = vadd.f32 %v2175, %v2180
    %v2183 = vadd.f32 %v2176, %v2180
    %v2185 = vsel %vm104, %v2182, 0
    %v2188 = vsel %vm104, %v2183, 0
    %2190 = vmatpush.msra.mxu0 0.0
    %2191 = vmatpush.msra.mxu0 0.0
    %2192 = vmatpush.msra.mxu0 0.0
    %2193 = vmatpush.msra.mxu0 0.0
    %2194 = vmatpush.msra.mxu0 0.0
    %2195 = vmatpush.msra.mxu0 0.0
    %2196 = vmatpush.msra.mxu0 0.0
    %2197 = vmatpush.msra.mxu0 0.0
    %2198 = vmatpush.msra.mxu0 0.0
    %2199 = vmatpush.msra.mxu0 0.0
    %2200 = vmatpush.msra.mxu0 0.0
    %2201 = vmatpush.msra.mxu0 0.0
    %2202 = vmatpush.msra.mxu0 %v64
    %2203 = vmatpush.msra.mxu0 %v63
    %2204 = vmatpush.msra.mxu0 %v62
    %2205 = vmatpush.msra.mxu0 %v61
    %2206 = vmatmul.f32.gmra.mxu0 %v2185
    %v2207 = vpop.f32.mrf.mxu0
    %v2208 = vadd.f32 %v286, %v2207
    %2209 = vmatmul.f32.gmra.mxu0 %v2188
    %v2210 = vpop.f32.mrf.mxu0
    %v2211 = vadd.f32 %v286, %v2210
    %2212 = vdwg.mxu0
    %2214 = vset.pattern.permute.xlu0 32
    %2215 = vperm.xlu0 %2214, %v2208
    %v2216 = vpop.permute.xlu0 %2215
    %2219 = vset.pattern.permute.xlu0 32
    %2220 = vperm.xlu0 %2219, %v2211
    %v2221 = vpop.permute.xlu0 %2220
    %v2223 = vsel %vm317, %v2216, -1e+30
    %v2224 = vsel %vm318, %v2221, -1e+30
    %v2225 = vsel %vm331, %v2223, -inf
    %v2226 = vsel %vm331, %v2224, -inf
    %v2227 = vmax.f32 %v2225, %v2226
    %v2228 = vrot.slane %v2227, 4
    %v2229 = vmax.f32 %v2227, %v2228
    %v2230 = vrot.slane %v2229, 2
    %v2231 = vmax.f32 %v2229, %v2230
    %v2232 = vrot.slane %v2231, 1
    %v2233 = vmax.f32 %v2231, %v2232
    %v2234 = vsel %vm317, %v2233, 0.0
    %v2235 = vsel %vm318, %v2233, 0.0
    %v2236 = vsel %vm331, %v2234, 0.0
    %2237 = vadd.xlane.f32.xlu0 %v2236
    %v2238 = vpop.xlane.xlu0 %2237
    %v2239 = vsel %vm331, %v2235, 0.0
    %2240 = vadd.xlane.f32.xlu0 %v2239
    %v2241 = vpop.xlane.xlu0 %2240
    %v2242 = vsub.f32 %v2208, %v2238
    %v2243 = vsub.f32 %v2211, %v2241
    %v2244 = vmul.f32 %v2242, 1.442695
    %v2245 = vpow.pop %v2244
    %v2246 = vmul.f32 %v2243, 1.442695
    %v2247 = vpow.pop %v2246
    %2249 = vset.pattern.permute.xlu0 32
    %2250 = vperm.xlu0 %2249, %v2245
    %v2251 = vpop.permute.xlu0 %2250
    %2254 = vset.pattern.permute.xlu0 32
    %2255 = vperm.xlu0 %2254, %v2247
    %v2256 = vpop.permute.xlu0 %2255
    %v2258 = vmul.f32 %v2251, %v2208
    %v2259 = vmul.f32 %v2256, %v2211
    %v2260 = vsel %vm104, %v2258, %v2245
    %v2261 = vsel %vm104, %v2259, %v2247
    %2262 = vmatpush.msra.mxu0 0.0
    %2263 = vmatpush.msra.mxu0 0.0
    %2264 = vmatpush.msra.mxu0 0.0
    %2265 = vmatpush.msra.mxu0 0.0
    %2266 = vmatpush.msra.mxu0 0.0
    %2267 = vmatpush.msra.mxu0 0.0
    %2268 = vmatpush.msra.mxu0 0.0
    %2269 = vmatpush.msra.mxu0 0.0
    %2270 = vmatpush.msra.mxu0 0.0
    %2271 = vmatpush.msra.mxu0 0.0
    %2272 = vmatpush.msra.mxu0 0.0
    %2273 = vmatpush.msra.mxu0 0.0
    %2274 = vmatpush.msra.mxu0 0.0
    %2275 = vmatpush.msra.mxu0 0.0
    %2276 = vmatpush.msra.mxu0 %v2261
    %2277 = vmatpush.msra.mxu0 %v2260
    %2278 = vmatmul.f32.gmra.mxu0 %v370
    %v2279 = vpop.f32.mrf.mxu0
    %v2280 = vadd.f32 0.0, %v2279
    %2281 = vdwg.mxu0
    %v2282 = vmax.f32 %v2280, 1e-30
    %v2283 = vrcp.pop %v2282
    %2285 = vset.pattern.permute.xlu0 32
    %2286 = vperm.xlu0 %2285, %v2283
    %v2287 = vpop.permute.xlu0 %2286
    %v2289 = vmul.f32 %v2280, %v2287
    %2290 = vmatpush.msra.mxu0 0.0
    %2291 = vmatpush.msra.mxu0 0.0
    %2292 = vmatpush.msra.mxu0 0.0
    %2293 = vmatpush.msra.mxu0 0.0
    %2294 = vmatpush.msra.mxu0 0.0
    %2295 = vmatpush.msra.mxu0 0.0
    %2296 = vmatpush.msra.mxu0 0.0
    %2297 = vmatpush.msra.mxu0 0.0
    %2298 = vmatpush.msra.mxu0 0.0
    %2299 = vmatpush.msra.mxu0 0.0
    %2300 = vmatpush.msra.mxu0 0.0
    %2301 = vmatpush.msra.mxu0 0.0
    %2302 = vmatpush.msra.mxu0 0.0
    %2303 = vmatpush.msra.mxu0 0.0
    %2304 = vmatpush.msra.mxu0 %v2183
    %2305 = vmatpush.msra.mxu0 %v2182
    %2306 = vmatmul.f32.gmra.mxu0 %v68
    %v2307 = vpop.f32.mrf.mxu0
    %v2308 = vadd.f32 0.0, %v2307
    %2309 = vmatmul.f32.gmra.mxu0 %v71
    %v2310 = vpop.f32.mrf.mxu0
    %v2311 = vadd.f32 0.0, %v2310
    %2312 = vdwg.mxu0
    %2315 = vrot.lane.b32.xlu0 %v2308, 32
    %v2316 = vpop.permute.xlu0 %2315
    %2317 = vrot.lane.b32.xlu0 %v2311, 32
    %v2318 = vpop.permute.xlu0 %2317
    %v2321 = vsel %vm104, %v2182, %v2316
    %v2322 = vsel %vm104, %v2183, %v2318
    %s2323 = scalar_lea.vmem %s4, 448
    %v2324 = vld [vmem:[%s2323] sm:$0xff]
    %v2325 = vld [vmem:[%s2323 + $0x8] sm:$0xff]
    %v2326 = vld [vmem:[%s2323 + $0x10] sm:$0xff]
    %v2327 = vld [vmem:[%s2323 + $0x18] sm:$0xff]
    %v2328 = vld [vmem:[%s2323 + $0x20] sm:$0xff]
    %v2329 = vld [vmem:[%s2323 + $0x28] sm:$0xff]
    %v2330 = vld [vmem:[%s2323 + $0x30] sm:$0xff]
    %v2331 = vld [vmem:[%s2323 + $0x38] sm:$0xff]
    %s2332 = scalar_lea.vmem %s5, 7
    %v2333 = vld [vmem:[%s2332] sm:$0x1]
    %v2335 = vperm.slane %v2333, 0
    %v2338 = vsel %vm119, %v2321, 0
    %v2341 = vsel %vm119, %v2322, 0
    %2343 = vmatpush.msra.mxu0 0.0
    %2344 = vmatpush.msra.mxu0 0.0
    %2345 = vmatpush.msra.mxu0 0.0
    %2346 = vmatpush.msra.mxu0 0.0
    %2347 = vmatpush.msra.mxu0 0.0
    %2348 = vmatpush.msra.mxu0 0.0
    %2349 = vmatpush.msra.mxu0 0.0
    %2350 = vmatpush.msra.mxu0 0.0
    %2351 = vmatpush.msra.mxu0 %v2331
    %2352 = vmatpush.msra.mxu0 %v2330
    %2353 = vmatpush.msra.mxu0 %v2329
    %2354 = vmatpush.msra.mxu0 %v2328
    %2355 = vmatpush.msra.mxu0 %v2327
    %2356 = vmatpush.msra.mxu0 %v2326
    %2357 = vmatpush.msra.mxu0 %v2325
    %2358 = vmatpush.msra.mxu0 %v2324
    %2359 = vmatmul.f32.gmra.mxu0 %v2338
    %v2360 = vpop.f32.mrf.mxu0
    %v2361 = vadd.f32 %v2335, %v2360
    %2362 = vmatmul.f32.gmra.mxu0 %v2341
    %v2363 = vpop.f32.mrf.mxu0
    %v2364 = vadd.f32 %v2335, %v2363
    %2365 = vdwg.mxu0
    %s2366 = scalar_lea.vmem %s6, 448
    %v2367 = vld [vmem:[%s2366] sm:$0xff]
    %v2368 = vld [vmem:[%s2366 + $0x8] sm:$0xff]
    %v2369 = vld [vmem:[%s2366 + $0x10] sm:$0xff]
    %v2370 = vld [vmem:[%s2366 + $0x18] sm:$0xff]
    %s2371 = scalar_lea.vmem %s7, 14
    %v2372 = vld [vmem:[%s2371] sm:$0x1]
    %v2374 = vperm.slane %v2372, 0
    %v2377 = vsel %vm104, %v2361, 0
    %v2380 = vsel %vm104, %v2364, 0
    %2382 = vmatpush.msra.mxu0 0.0
    %2383 = vmatpush.msra.mxu0 0.0
    %2384 = vmatpush.msra.mxu0 0.0
    %2385 = vmatpush.msra.mxu0 0.0
    %2386 = vmatpush.msra.mxu0 0.0
    %2387 = vmatpush.msra.mxu0 0.0
    %2388 = vmatpush.msra.mxu0 0.0
    %2389 = vmatpush.msra.mxu0 0.0
    %2390 = vmatpush.msra.mxu0 0.0
    %2391 = vmatpush.msra.mxu0 0.0
    %2392 = vmatpush.msra.mxu0 0.0
    %2393 = vmatpush.msra.mxu0 0.0
    %2394 = vmatpush.msra.mxu0 %v2370
    %2395 = vmatpush.msra.mxu0 %v2369
    %2396 = vmatpush.msra.mxu0 %v2368
    %2397 = vmatpush.msra.mxu0 %v2367
    %2398 = vmatmul.f32.gmra.mxu0 %v2377
    %v2399 = vpop.f32.mrf.mxu0
    %v2400 = vadd.f32 %v2374, %v2399
    %2401 = vmatmul.f32.gmra.mxu0 %v2380
    %v2402 = vpop.f32.mrf.mxu0
    %v2403 = vadd.f32 %v2374, %v2402
    %2404 = vdwg.mxu0
    %v2405 = vmax.f32 %v2400, 0.0
    %v2406 = vmax.f32 %v2403, 0.0
    %s2407 = scalar_lea.vmem %s6, 480
    %v2408 = vld [vmem:[%s2407] sm:$0xff]
    %v2409 = vld [vmem:[%s2407 + $0x8] sm:$0xff]
    %v2410 = vld [vmem:[%s2407 + $0x10] sm:$0xff]
    %v2411 = vld [vmem:[%s2407 + $0x18] sm:$0xff]
    %s2412 = scalar_lea.vmem %s7, 15
    %v2413 = vld [vmem:[%s2412] sm:$0x1]
    %v2415 = vperm.slane %v2413, 0
    %v2418 = vsel %vm104, %v2405, 0
    %v2421 = vsel %vm104, %v2406, 0
    %2423 = vmatpush.msra.mxu0 0.0
    %2424 = vmatpush.msra.mxu0 0.0
    %2425 = vmatpush.msra.mxu0 0.0
    %2426 = vmatpush.msra.mxu0 0.0
    %2427 = vmatpush.msra.mxu0 0.0
    %2428 = vmatpush.msra.mxu0 0.0
    %2429 = vmatpush.msra.mxu0 0.0
    %2430 = vmatpush.msra.mxu0 0.0
    %2431 = vmatpush.msra.mxu0 0.0
    %2432 = vmatpush.msra.mxu0 0.0
    %2433 = vmatpush.msra.mxu0 0.0
    %2434 = vmatpush.msra.mxu0 0.0
    %2435 = vmatpush.msra.mxu0 %v2411
    %2436 = vmatpush.msra.mxu0 %v2410
    %2437 = vmatpush.msra.mxu0 %v2409
    %2438 = vmatpush.msra.mxu0 %v2408
    %2439 = vmatmul.f32.gmra.mxu0 %v2418
    %v2440 = vpop.f32.mrf.mxu0
    %v2441 = vadd.f32 %v2415, %v2440
    %2442 = vmatmul.f32.gmra.mxu0 %v2421
    %v2443 = vpop.f32.mrf.mxu0
    %v2444 = vadd.f32 %v2415, %v2443
    %2445 = vdwg.mxu0
    %v2446 = vmax.f32 %v2441, 0.0
    %v2447 = vmax.f32 %v2444, 0.0
    %v2448 = vsel %vm104, %v2446, 0.0
    %v2449 = vsel %vm104, %v2447, 0.0
    %v2450 = vadd.f32 %v2448, %v2449
    %v2451 = vrot.slane %v2450, 4
    %v2452 = vadd.f32 %v2450, %v2451
    %v2453 = vrot.slane %v2452, 2
    %v2454 = vadd.f32 %v2452, %v2453
    %v2455 = vrot.slane %v2454, 1
    %v2456 = vadd.f32 %v2454, %v2455
    %v2457 = vmul.f32 %v2456, %v244
    %v2458 = vsub.f32 %v2446, %v2457
    %v2459 = vsub.f32 %v2447, %v2457
    %v2460 = vmul.f32 %v2458, %v2458
    %v2461 = vmul.f32 %v2459, %v2459
    %v2462 = vsel %vm104, %v2460, 0.0
    %v2463 = vsel %vm104, %v2461, 0.0
    %v2464 = vadd.f32 %v2462, %v2463
    %v2465 = vrot.slane %v2464, 4
    %v2466 = vadd.f32 %v2464, %v2465
    %v2467 = vrot.slane %v2466, 2
    %v2468 = vadd.f32 %v2466, %v2467
    %v2469 = vrot.slane %v2468, 1
    %v2470 = vadd.f32 %v2468, %v2469
    %v2471 = vmul.f32 %v2470, %v244
    %v2472 = vadd.f32 %v2471, 1e-05
    %v2473 = vrsqrt.pop %v2472
    %v2474 = vmul.f32 %v2473, %v2472
    %v2475 = vmul.f32 %v2474, %v2473
    %v2476 = vmul.f32 0.5, %v2475
    %v2477 = vsub.f32 1.5, %v2476
    %v2478 = vmul.f32 %v2473, %v2477
    %vm2479 = vweird.f32 %v2472
    %vm2480 = vweird.f32 %v2473
    %vm2481 = vmor %vm2479, %vm2480
    %v2482 = vsel %vm2481, %v2473, %v2478
    %v2483 = vmul.f32 %v2458, %v2482
    %v2484 = vmul.f32 %v2459, %v2482
    %s2485 = scalar_lea.vmem %s8, 7
    %v2486 = vld [vmem:[%s2485] sm:$0x1]
    %v2488 = vperm.slane %v2486, 0
    %v2490 = vmul.f32 %v2483, %v2488
    %v2491 = vmul.f32 %v2484, %v2488
    %s2492 = scalar_lea.vmem %s9, 7
    %v2493 = vld [vmem:[%s2492] sm:$0x1]
    %v2495 = vperm.slane %v2493, 0
    %v2497 = vadd.f32 %v2490, %v2495
    %v2498 = vadd.f32 %v2491, %v2495
    %v2500 = vsel %vm104, %v2497, 0
    %v2503 = vsel %vm104, %v2498, 0
    %2505 = vmatpush.msra.mxu0 0.0
    %2506 = vmatpush.msra.mxu0 0.0
    %2507 = vmatpush.msra.mxu0 0.0
    %2508 = vmatpush.msra.mxu0 0.0
    %2509 = vmatpush.msra.mxu0 0.0
    %2510 = vmatpush.msra.mxu0 0.0
    %2511 = vmatpush.msra.mxu0 0.0
    %2512 = vmatpush.msra.mxu0 0.0
    %2513 = vmatpush.msra.mxu0 0.0
    %2514 = vmatpush.msra.mxu0 0.0
    %2515 = vmatpush.msra.mxu0 0.0
    %2516 = vmatpush.msra.mxu0 0.0
    %2517 = vmatpush.msra.mxu0 %v64
    %2518 = vmatpush.msra.mxu0 %v63
    %2519 = vmatpush.msra.mxu0 %v62
    %2520 = vmatpush.msra.mxu0 %v61
    %2521 = vmatmul.f32.gmra.mxu0 %v2500
    %v2522 = vpop.f32.mrf.mxu0
    %v2523 = vadd.f32 %v286, %v2522
    %2524 = vmatmul.f32.gmra.mxu0 %v2503
    %v2525 = vpop.f32.mrf.mxu0
    %v2526 = vadd.f32 %v286, %v2525
    %2527 = vdwg.mxu0
    %2529 = vset.pattern.permute.xlu0 32
    %2530 = vperm.xlu0 %2529, %v2523
    %v2531 = vpop.permute.xlu0 %2530
    %2534 = vset.pattern.permute.xlu0 32
    %2535 = vperm.xlu0 %2534, %v2526
    %v2536 = vpop.permute.xlu0 %2535
    %v2538 = vsel %vm317, %v2531, -1e+30
    %v2539 = vsel %vm318, %v2536, -1e+30
    %v2540 = vsel %vm331, %v2538, -inf
    %v2541 = vsel %vm331, %v2539, -inf
    %v2542 = vmax.f32 %v2540, %v2541
    %v2543 = vrot.slane %v2542, 4
    %v2544 = vmax.f32 %v2542, %v2543
    %v2545 = vrot.slane %v2544, 2
    %v2546 = vmax.f32 %v2544, %v2545
    %v2547 = vrot.slane %v2546, 1
    %v2548 = vmax.f32 %v2546, %v2547
    %v2549 = vsel %vm317, %v2548, 0.0
    %v2550 = vsel %vm318, %v2548, 0.0
    %v2551 = vsel %vm331, %v2549, 0.0
    %2552 = vadd.xlane.f32.xlu0 %v2551
    %v2553 = vpop.xlane.xlu0 %2552
    %v2554 = vsel %vm331, %v2550, 0.0
    %2555 = vadd.xlane.f32.xlu0 %v2554
    %v2556 = vpop.xlane.xlu0 %2555
    %v2557 = vsub.f32 %v2523, %v2553
    %v2558 = vsub.f32 %v2526, %v2556
    %v2559 = vmul.f32 %v2557, 1.442695
    %v2560 = vpow.pop %v2559
    %v2561 = vmul.f32 %v2558, 1.442695
    %v2562 = vpow.pop %v2561
    %2564 = vset.pattern.permute.xlu0 32
    %2565 = vperm.xlu0 %2564, %v2560
    %v2566 = vpop.permute.xlu0 %2565
    %2569 = vset.pattern.permute.xlu0 32
    %2570 = vperm.xlu0 %2569, %v2562
    %v2571 = vpop.permute.xlu0 %2570
    %v2573 = vmul.f32 %v2566, %v2523
    %v2574 = vmul.f32 %v2571, %v2526
    %v2575 = vsel %vm104, %v2573, %v2560
    %v2576 = vsel %vm104, %v2574, %v2562
    %2577 = vmatpush.msra.mxu0 0.0
    %2578 = vmatpush.msra.mxu0 0.0
    %2579 = vmatpush.msra.mxu0 0.0
    %2580 = vmatpush.msra.mxu0 0.0
    %2581 = vmatpush.msra.mxu0 0.0
    %2582 = vmatpush.msra.mxu0 0.0
    %2583 = vmatpush.msra.mxu0 0.0
    %2584 = vmatpush.msra.mxu0 0.0
    %2585 = vmatpush.msra.mxu0 0.0
    %2586 = vmatpush.msra.mxu0 0.0
    %2587 = vmatpush.msra.mxu0 0.0
    %2588 = vmatpush.msra.mxu0 0.0
    %2589 = vmatpush.msra.mxu0 0.0
    %2590 = vmatpush.msra.mxu0 0.0
    %2591 = vmatpush.msra.mxu0 %v2576
    %2592 = vmatpush.msra.mxu0 %v2575
    %2593 = vmatmul.f32.gmra.mxu0 %v370
    %v2594 = vpop.f32.mrf.mxu0
    %v2595 = vadd.f32 0.0, %v2594
    %2596 = vdwg.mxu0
    %v2597 = vmax.f32 %v2595, 1e-30
    %v2598 = vrcp.pop %v2597
    %2600 = vset.pattern.permute.xlu0 32
    %2601 = vperm.xlu0 %2600, %v2598
    %v2602 = vpop.permute.xlu0 %2601
    %v2604 = vmul.f32 %v2595, %v2602
    %2606 = vrot.lane.b32.xlu0 %v714, 32
    %v2607 = vpop.permute.xlu0 %2606
    %2610 = vrot.lane.b32.xlu0 %v1029, 64
    %v2611 = vpop.permute.xlu0 %2610
    %2614 = vrot.lane.b32.xlu0 %v1344, 96
    %v2615 = vpop.permute.xlu0 %2614
    %2618 = vrot.lane.b32.xlu0 %v1974, 32
    %v2619 = vpop.permute.xlu0 %2618
    %2622 = vrot.lane.b32.xlu0 %v2289, 64
    %v2623 = vpop.permute.xlu0 %2622
    %2626 = vrot.lane.b32.xlu0 %v2604, 96
    %v2627 = vpop.permute.xlu0 %2626
    %v2629 = vsel %vm104, %v399, %v2607
    %v2630 = vsel %vm119, %v2629, %v2611
    %vm2631 = vcmask 785408
    %v2632 = vsel %vm2631, %v2630, %v2615
    %v2633 = vsel %vm104, %v1659, %v2619
    %v2634 = vsel %vm119, %v2633, %v2623
    %v2635 = vsel %vm2631, %v2634, %v2627
    %v2636 = vld [vmem:[%s12] sm:$0xff]
    %v2637 = vld [vmem:[%s12 + $0x8] sm:$0xff]
    %v2638 = vld [vmem:[%s12 + $0x10] sm:$0xff]
    %v2639 = vld [vmem:[%s12 + $0x18] sm:$0xff]
    %v2640 = vld [vmem:[%s12 + $0x20] sm:$0xff]
    %v2641 = vld [vmem:[%s12 + $0x28] sm:$0xff]
    %v2642 = vld [vmem:[%s12 + $0x30] sm:$0xff]
    %v2643 = vld [vmem:[%s12 + $0x38] sm:$0xff]
    %v2644 = vld [vmem:[%s12 + $0x40] sm:$0xff]
    %v2645 = vld [vmem:[%s12 + $0x48] sm:$0xff]
    %v2646 = vld [vmem:[%s12 + $0x50] sm:$0xff]
    %v2647 = vld [vmem:[%s12 + $0x58] sm:$0xff]
    %v2648 = vld [vmem:[%s12 + $0x60] sm:$0xff]
    %v2649 = vld [vmem:[%s12 + $0x68] sm:$0xff]
    %v2650 = vld [vmem:[%s12 + $0x70] sm:$0xff]
    %v2651 = vld [vmem:[%s12 + $0x78] sm:$0xff]
    %v2652 = vld [vmem:[%s12 + $0x80] sm:$0xff]
    %v2653 = vld [vmem:[%s12 + $0x88] sm:$0xff]
    %v2654 = vld [vmem:[%s12 + $0x90] sm:$0xff]
    %v2655 = vld [vmem:[%s12 + $0x98] sm:$0xff]
    %v2656 = vld [vmem:[%s12 + $0xa0] sm:$0xff]
    %v2657 = vld [vmem:[%s12 + $0xa8] sm:$0xff]
    %v2658 = vld [vmem:[%s12 + $0xb0] sm:$0xff]
    %v2659 = vld [vmem:[%s12 + $0xb8] sm:$0xff]
    %v2660 = vld [vmem:[%s12 + $0xc0] sm:$0xff]
    %v2661 = vld [vmem:[%s12 + $0xc8] sm:$0xff]
    %v2662 = vld [vmem:[%s12 + $0xd0] sm:$0xff]
    %v2663 = vld [vmem:[%s12 + $0xd8] sm:$0xff]
    %v2664 = vld [vmem:[%s12 + $0xe0] sm:$0xff]
    %v2665 = vld [vmem:[%s12 + $0xe8] sm:$0xff]
    %v2666 = vld [vmem:[%s12 + $0xf0] sm:$0xff]
    %v2667 = vld [vmem:[%s12 + $0xf8] sm:$0xff]
    %v2668 = vld [vmem:[%s13] sm:$0x1]
    %v2670 = vperm.slane %v2668, 0
    %2672 = vmatpush.msra.mxu0 %v2651
    %2673 = vmatpush.msra.mxu0 %v2650
    %2674 = vmatpush.msra.mxu0 %v2649
    %2675 = vmatpush.msra.mxu0 %v2648
    %2676 = vmatpush.msra.mxu0 %v2647
    %2677 = vmatpush.msra.mxu0 %v2646
    %2678 = vmatpush.msra.mxu0 %v2645
    %2679 = vmatpush.msra.mxu0 %v2644
    %2680 = vmatpush.msra.mxu0 %v2643
    %2681 = vmatpush.msra.mxu0 %v2642
    %2682 = vmatpush.msra.mxu0 %v2641
    %2683 = vmatpush.msra.mxu0 %v2640
    %2684 = vmatpush.msra.mxu0 %v2639
    %2685 = vmatpush.msra.mxu0 %v2638
    %2686 = vmatpush.msra.mxu0 %v2637
    %2687 = vmatpush.msra.mxu0 %v2636
    %2688 = vmatmul.f32.gmra.mxu0 %v2632
    %v2689 = vpop.f32.mrf.mxu0
    %v2690 = vadd.f32 %v2670, %v2689
    %2691 = vdwg.mxu0
    %2692 = vmatpush.msra.mxu0 %v2667
    %2693 = vmatpush.msra.mxu0 %v2666
    %2694 = vmatpush.msra.mxu0 %v2665
    %2695 = vmatpush.msra.mxu0 %v2664
    %2696 = vmatpush.msra.mxu0 %v2663
    %2697 = vmatpush.msra.mxu0 %v2662
    %2698 = vmatpush.msra.mxu0 %v2661
    %2699 = vmatpush.msra.mxu0 %v2660
    %2700 = vmatpush.msra.mxu0 %v2659
    %2701 = vmatpush.msra.mxu0 %v2658
    %2702 = vmatpush.msra.mxu0 %v2657
    %2703 = vmatpush.msra.mxu0 %v2656
    %2704 = vmatpush.msra.mxu0 %v2655
    %2705 = vmatpush.msra.mxu0 %v2654
    %2706 = vmatpush.msra.mxu0 %v2653
    %2707 = vmatpush.msra.mxu0 %v2652
    %2708 = vmatmul.f32.gmra.mxu0 %v2635
    %v2709 = vpop.f32.mrf.mxu0
    %v2710 = vadd.f32 %v2690, %v2709
    %2711 = vdwg.mxu0
    %v2712 = vmax.f32 %v2710, 0.0
    %v2713 = vld [vmem:[%s14] sm:$0xff]
    %v2714 = vld [vmem:[%s15] sm:$0x1]
    %v2716 = vperm.slane %v2714, 0
    %vm2718 = vcmask 64512
    %v2720 = vsel %vm2718, %v2712, 0
    %2722 = vmatpush.msra.mxu0 0.0
    %2723 = vmatpush.msra.mxu0 0.0
    %2724 = vmatpush.msra.mxu0 0.0
    %2725 = vmatpush.msra.mxu0 0.0
    %2726 = vmatpush.msra.mxu0 0.0
    %2727 = vmatpush.msra.mxu0 0.0
    %2728 = vmatpush.msra.mxu0 0.0
    %2729 = vmatpush.msra.mxu0 0.0
    %2730 = vmatpush.msra.mxu0 0.0
    %2731 = vmatpush.msra.mxu0 0.0
    %2732 = vmatpush.msra.mxu0 0.0
    %2733 = vmatpush.msra.mxu0 0.0
    %2734 = vmatpush.msra.mxu0 0.0
    %2735 = vmatpush.msra.mxu0 0.0
    %2736 = vmatpush.msra.mxu0 0.0
    %2737 = vmatpush.msra.mxu0 %v2713
    %2738 = vmatmul.f32.gmra.mxu0 %v2720
    %v2739 = vpop.f32.mrf.mxu0
    %v2740 = vadd.f32 %v2716, %v2739
    %2741 = vdwg.mxu0
    %vm2742 = vcmask 58368
    %2743 = vst.msk [vmem:[#allocation2] sm:$0x3] %vm2742, %v2740
    // Predicated region
    $region66: #{tpu_custom_call.1} parent=1 // pred_check
      _
    $region67: #{tpu_custom_call.1} parent=1 // pred_check_branch
      %2745 = sbr.rel (0) target = $region69
    $region68: #{tpu_custom_call.1} parent=1 // pred_region
      %2747 = vsyncadd [#allocation3], 0
      %s2749 = sshll.u32 [#allocation2], 4
      %s2750 = int_to_ptr.vmem [resolvable:$true] %s2749
      %s2751 = sshll.u32 %s16, 4
      %s2752 = int_to_ptr.hbm [resolvable:$true] %s2751
      %2754 = dma.vmem_to_hbm [thread:$0]  %s2750, 32, %s2752, [#allocation3]
    $region69: #{tpu_custom_call.1} parent=1 // pred_fallthru
      _
    // Predicated region
    $region70: #{tpu_custom_call.1} parent=1 // pred_check
      _
    $region71: #{tpu_custom_call.1} parent=1 // pred_check_branch
      %2756 = sbr.rel (0) target = $region73
    $region72: #{tpu_custom_call.1} parent=1 // pred_region
      %2758 = dma.done [#allocation3], 32
    $region73: #{tpu_custom_call.1} parent=1 // pred_fallthru
      _
    %2759 = vsyncpa [#allocation3], 1

</llo_original>
